<compile_context>
chip_gen: v6e
topology: v6e:2x2x1
jax: 0.10.0
libtpu: 0.0.40
codegen_flags: <defaults>
</compile_context>

<pallas_src>
import functools
import math

import jax
import jax.numpy as jnp
from jax.experimental import pallas as pl
from jax.experimental.pallas import tpu as pltpu


CFG = dict(vocab=50, hidden=128, layers=2, heads=4, head_dim=32,
           intermediate=512, max_pos=64, type_vocab=2, num_tag=9)

LN_EPS = 1e-12
TAG_PAD = 128                    # classifier columns padded to one full lane-dense vreg
MATMUL_DTYPE = jnp.bfloat16      # MXU operand dtype (f32 accumulation everywhere)


def _layernorm(x, g, b, eps):
    mu = jnp.mean(x, axis=-1, keepdims=True)
    xc = x - mu
    var = jnp.mean(xc * xc, axis=-1, keepdims=True)
    return xc * jax.lax.rsqrt(var + eps) * g + b


def _mm(x, w, b):
    """bf16 MXU matmul with f32 accumulation + f32 bias."""
    return jnp.dot(x.astype(MATMUL_DTYPE), w, preferred_element_type=jnp.float32) + b


# --------------------------- single fused forward kernel ---------------------------

def _fused_forward_kernel(*refs, batch, seq, num_heads, head_dim,
                          num_layers, num_tag, eps, with_loss):
    if with_loss:
        (x_ref, bias_ref, labels_ref, emb_g_ref, emb_b_ref,
         qkv_w_ref, qkv_b_ref, ao_w_ref, ao_b_ref, ln1_g_ref, ln1_b_ref,
         i_w_ref, i_b_ref, o_w_ref, o_b_ref, ln2_g_ref, ln2_b_ref,
         cls_w_ref, cls_b_ref, out_ref, ctx_ref) = refs
    else:
        (x_ref, bias_ref, emb_g_ref, emb_b_ref,
         qkv_w_ref, qkv_b_ref, ao_w_ref, ao_b_ref, ln1_g_ref, ln1_b_ref,
         i_w_ref, i_b_ref, o_w_ref, o_b_ref, ln2_g_ref, ln2_b_ref,
         cls_w_ref, cls_b_ref, out_ref, ctx_ref) = refs
        labels_ref = None

    B, S = batch, seq
    H = num_heads * head_dim

    # Embedding LayerNorm (fused; no separate kernel / HBM round-trip).
    x = _layernorm(x_ref[...], emb_g_ref[...], emb_b_ref[...], eps)          # (B*S, H) f32

    # Hoist the attention-mask broadcast ONCE: identical for every layer and head
    # (JAX does not CSE broadcast_in_dim).
    bias_sq = [jnp.broadcast_to(bias_ref[b], (S, S)) for b in range(B)]

    for l in range(num_layers):
        # Fused QKV projection for the whole batch: one (B*S, H) @ (H, 3H) MXU pass.
        # 1/sqrt(head_dim) is already folded into the Q columns of qkv_w / qkv_b.
        qkv = _mm(x, qkv_w_ref[l], qkv_b_ref[l])                             # (B*S, 3H) f32
        q = qkv[:, 0 * H:1 * H].astype(MATMUL_DTYPE)
        k = qkv[:, 1 * H:2 * H].astype(MATMUL_DTYPE)
        v = qkv[:, 2 * H:3 * H].astype(MATMUL_DTYPE)

        # Per-(batch, head) attention; context heads are written straight into a
        # lane-dense (B*S, H) VMEM scratch (no jnp.concatenate lane shuffles).
        for b in range(B):
            rows = slice(b * S, (b + 1) * S)
            for h in range(num_heads):
                cols = slice(h * head_dim, (h + 1) * head_dim)
                qh = q[rows, cols]
                kh = k[rows, cols]
                vh = v[rows, cols]
                s = jax.lax.dot_general(qh, kh, (((1,), (1,)), ((), ())),
                                        preferred_element_type=jnp.float32)  # (S, S)
                s = s + bias_sq[b]
                s = s - jnp.max(s, axis=-1, keepdims=True)
                p = jnp.exp(s)
                p = p * pl.reciprocal(jnp.sum(p, axis=-1, keepdims=True), approx=True)
                ctx_ref[rows, cols] = jnp.dot(p.astype(MATMUL_DTYPE), vh,
                                              preferred_element_type=jnp.float32)

        # Attention output projection + residual + LayerNorm.
        attn = _mm(ctx_ref[...], ao_w_ref[l], ao_b_ref[l])
        h1 = _layernorm(attn + x, ln1_g_ref[l], ln1_b_ref[l], eps)

        # FFN + residual + LayerNorm.
        inter = _mm(h1, i_w_ref[l], i_b_ref[l])
        # TODO(synk): HF BERT / nn.GELU default is the exact erf form; tanh approximation
        # kept for guaranteed Mosaic lowering (tiny numeric difference).
        inter = jax.nn.gelu(inter, approximate=True)
        ffn = _mm(inter, o_w_ref[l], o_b_ref[l])
        x = _layernorm(ffn + h1, ln2_g_ref[l], ln2_b_ref[l], eps)

    # Classifier — lane-dense MXU pass (num_tag padded to 128 columns at init).
    # TODO(synk): nn.Dropout(0.3) is identity in eval mode; training dropout omitted.
    logits = _mm(x, cls_w_ref[...], cls_b_ref[...])                          # (B*S, 128) f32

    if not with_loss:
        out_ref[...] = logits                                                # sliced to 9 in wrapper
        return

    # Fused  F.softmax -> CrossEntropyLoss(ignore_index=0)  (the module feeds already
    # softmaxed probabilities into CE's internal log_softmax — quirk preserved).
    labels = labels_ref[...]                                                 # (B*S, 1) int32
    col_ids = jax.lax.broadcasted_iota(jnp.int32, logits.shape, 1)
    valid = col_ids < num_tag                                                # mask lane padding
    neg = jnp.float32(-1e30)

    lg = jnp.where(valid, logits, neg)
    z = lg - jnp.max(lg, axis=1, keepdims=True)
    e = jnp.exp(z)                                                           # padded lanes -> 0
    probs = e * pl.reciprocal(jnp.sum(e, axis=1, keepdims=True), approx=True)

    qv = jnp.where(valid, probs, neg)
    qz = qv - jnp.max(qv, axis=1, keepdims=True)
    lse = jnp.log(jnp.sum(jnp.exp(qz), axis=1, keepdims=True))
    logsm = qz - lse

    onehot = (col_ids == labels).astype(jnp.float32)
    nll = -jnp.sum(logsm * onehot, axis=1, keepdims=True)                    # (B*S, 1)
    active = (labels != 0).astype(jnp.float32)                               # ignore_index=0
    # NOTE: all-ignored batch gives 0/0 = NaN, same as PyTorch.
    out_ref[0, 0] = jnp.sum(nll * active) / jnp.sum(active)


def _full_spec(arr):
    zeros = (0,) * arr.ndim
    return pl.BlockSpec(arr.shape, lambda i, z=zeros: z)


def fused_forward_pallas(params, x_emb, mask_bias, labels=None):
    cfg = CFG
    H = cfg["hidden"]
    B, _, S = mask_bias.shape
    M = B * S
    with_loss = labels is not None

    inputs = [x_emb, mask_bias]
    if with_loss:
        inputs.append(labels)
    inputs += [params["emb_ln_g"], params["emb_ln_b"],
               params["qkv_w"], params["qkv_b"], params["ao_w"], params["ao_b"],
               params["ln1_g"], params["ln1_b"], params["i_w"], params["i_b"],
               params["o_w"], params["o_b"], params["ln2_g"], params["ln2_b"],
               params["cls_w"], params["cls_b"]]

    if with_loss:
        out_shape = jax.ShapeDtypeStruct((1, 1), jnp.float32)
        out_spec = pl.BlockSpec((1, 1), lambda i: (0, 0))
    else:
        out_shape = jax.ShapeDtypeStruct((M, TAG_PAD), jnp.float32)
        out_spec = pl.BlockSpec((M, TAG_PAD), lambda i: (0, 0))

    kern = functools.partial(
        _fused_forward_kernel, batch=B, seq=S, num_heads=cfg["heads"],
        head_dim=cfg["head_dim"], num_layers=cfg["layers"], num_tag=cfg["num_tag"],
        eps=LN_EPS, with_loss=with_loss)

    # One fused pallas_call: single launch, whole-batch matmuls, everything in VMEM.
    # TODO(synk): at B=2, S=16 the second v7x TensorCore idles; a CORE_PARALLEL batch
    # split would only parallelize the per-head attention portion at this size.
    return pl.pallas_call(
        kern,
        grid=(1,),
        in_specs=[_full_spec(a) for a in inputs],
        out_specs=out_spec,
        out_shape=out_shape,
        scratch_shapes=[pltpu.VMEM((M, H), jnp.float32)],
        compiler_params=pltpu.CompilerParams(dimension_semantics=("arbitrary",)),
    )(*inputs)


# -------------------------------------- params --------------------------------------

def init_params(key, cfg):
    H, I, T, L = cfg["hidden"], cfg["intermediate"], cfg["num_tag"], cfg["layers"]
    keys = iter(jax.random.split(key, 32))

    def w(shape):
        return 0.02 * jax.random.normal(next(keys), shape, jnp.float32)

    # Fold the attention 1/sqrt(head_dim) scale into the Q projection at init.
    scale = 1.0 / math.sqrt(cfg["head_dim"])
    qkv_w = w((L, H, 3 * H)).at[:, :, :H].multiply(scale)
    qkv_b = jnp.zeros((L, 1, 3 * H), jnp.float32).at[:, :, :H].multiply(scale)

    # Lane-dense classifier: zero-pad (H, num_tag) -> (H, 128).
    cls_w = jnp.zeros((H, TAG_PAD), jnp.float32).at[:, :T].set(w((H, T)))
    cls_b = jnp.zeros((1, TAG_PAD), jnp.float32)

    ones_h = jnp.ones((L, 1, H), jnp.float32)
    zeros_h = jnp.zeros((L, 1, H), jnp.float32)

    return {
        "word_emb": w((cfg["vocab"], H)),
        "pos_emb": w((cfg["max_pos"], H)),
        "type_emb": w((cfg["type_vocab"], H)),
        "emb_ln_g": jnp.ones((1, H), jnp.float32),
        "emb_ln_b": jnp.zeros((1, H), jnp.float32),
        # MXU weight matrices stored in bf16 (halves DMA/VMEM; f32 accumulation in-kernel);
        # biases and LayerNorm params stay f32 (all LN/softmax math runs in f32).
        "qkv_w": qkv_w.astype(MATMUL_DTYPE), "qkv_b": qkv_b,
        "ao_w": w((L, H, H)).astype(MATMUL_DTYPE), "ao_b": zeros_h,
        "ln1_g": ones_h, "ln1_b": zeros_h,
        "i_w": w((L, H, I)).astype(MATMUL_DTYPE), "i_b": jnp.zeros((L, 1, I), jnp.float32),
        "o_w": w((L, I, H)).astype(MATMUL_DTYPE), "o_b": zeros_h,
        "ln2_g": ones_h, "ln2_b": zeros_h,
        "cls_w": cls_w.astype(MATMUL_DTYPE), "cls_b": cls_b,
    }


# ---------------------------------- forward (glue) ----------------------------------

def _embed(params, input_ids, token_type_ids):
    B, S = input_ids.shape
    x = (params["word_emb"][input_ids]
         + params["pos_emb"][:S][None, :, :]
         + params["type_emb"][token_type_ids])
    return x.reshape(B * S, CFG["hidden"])


def _mask_bias(attention_mask):
    B, S = attention_mask.shape
    return ((1.0 - attention_mask.astype(jnp.float32)) * -10000.0).reshape(B, 1, S)


@jax.jit
def forward_logits(params, input_ids, token_type_ids, attention_mask):
    B, S = input_ids.shape
    x = _embed(params, input_ids, token_type_ids)
    logits_pad = fused_forward_pallas(params, x, _mask_bias(attention_mask))
    return logits_pad[:, :CFG["num_tag"]].reshape(B, S, CFG["num_tag"])


@jax.jit
def forward_loss(params, input_ids, token_type_ids, attention_mask, labels):
    x = _embed(params, input_ids, token_type_ids)
    loss = fused_forward_pallas(params, x, _mask_bias(attention_mask),
                                labels=labels.reshape(-1, 1).astype(jnp.int32))
    return loss[0, 0]


# -------------------------------------- main --------------------------------------

if __name__ == "__main__":
    params = init_params(jax.random.PRNGKey(0), CFG)

    k1, k2 = jax.random.split(jax.random.PRNGKey(0), 2)
    B, S = 2, 16
    input_ids = jax.random.randint(k1, (B, S), 0, CFG["vocab"], dtype=jnp.int32)
    token_type_ids = jnp.zeros((B, S), jnp.int32)
    attention_mask = jnp.ones((B, S), jnp.int32)
    labels = jax.random.randint(k2, (B, S), 0, CFG["num_tag"], dtype=jnp.int32)

    logits = forward_logits(params, input_ids, token_type_ids, attention_mask)
    loss = forward_loss(params, input_ids, token_type_ids, attention_mask, labels)
    jax.block_until_ready((logits, loss))

    assert logits.shape == (B, S, CFG["num_tag"])
    assert loss.shape == ()
    assert bool(jnp.isfinite(loss))
    print("KERNEL_OK")
</pallas_src>

<mosaic_0001>
module attributes {stable_mosaic.version = 11 : i64} {
  func.func @_fused_forward_kernel(%arg0: i32, %arg1: memref<32x128xf32, #tpu.memory_space<vmem>>, %arg2: memref<2x1x16xf32, #tpu.memory_space<vmem>>, %arg3: memref<1x128xf32, #tpu.memory_space<vmem>>, %arg4: memref<1x128xf32, #tpu.memory_space<vmem>>, %arg5: memref<2x128x384xbf16, #tpu.memory_space<vmem>>, %arg6: memref<2x1x384xf32, #tpu.memory_space<vmem>>, %arg7: memref<2x128x128xbf16, #tpu.memory_space<vmem>>, %arg8: memref<2x1x128xf32, #tpu.memory_space<vmem>>, %arg9: memref<2x1x128xf32, #tpu.memory_space<vmem>>, %arg10: memref<2x1x128xf32, #tpu.memory_space<vmem>>, %arg11: memref<2x128x512xbf16, #tpu.memory_space<vmem>>, %arg12: memref<2x1x512xf32, #tpu.memory_space<vmem>>, %arg13: memref<2x512x128xbf16, #tpu.memory_space<vmem>>, %arg14: memref<2x1x128xf32, #tpu.memory_space<vmem>>, %arg15: memref<2x1x128xf32, #tpu.memory_space<vmem>>, %arg16: memref<2x1x128xf32, #tpu.memory_space<vmem>>, %arg17: memref<128x128xbf16, #tpu.memory_space<vmem>>, %arg18: memref<1x128xf32, #tpu.memory_space<vmem>>, %arg19: memref<32x128xf32, #tpu.memory_space<vmem>>, %arg20: memref<32x128xf32, #tpu.memory_space<vmem>>) attributes {dimension_semantics = [#tpu.dimension_semantics<arbitrary>], iteration_bounds = array<i64: 1>, scalar_prefetch = 0 : i64, scratch_operands = 1 : i64, tpu.core_type = #tpu.core_type<tc>, window_params = [{pipeline_mode = #tpu.pipeline_mode<synchronous>, transform_indices = @transform_0, window_bounds = array<i64: 32, 128>}, {pipeline_mode = #tpu.pipeline_mode<synchronous>, transform_indices = @transform_1, window_bounds = array<i64: 2, 1, 16>}, {pipeline_mode = #tpu.pipeline_mode<synchronous>, transform_indices = @transform_2, window_bounds = array<i64: 1, 128>}, {pipeline_mode = #tpu.pipeline_mode<synchronous>, transform_indices = @transform_3, window_bounds = array<i64: 1, 128>}, {pipeline_mode = #tpu.pipeline_mode<synchronous>, transform_indices = @transform_4, window_bounds = array<i64: 2, 128, 384>}, {pipeline_mode = #tpu.pipeline_mode<synchronous>, transform_indices = @transform_5, window_bounds = array<i64: 2, 1, 384>}, {pipeline_mode = #tpu.pipeline_mode<synchronous>, transform_indices = @transform_6, window_bounds = array<i64: 2, 128, 128>}, {pipeline_mode = #tpu.pipeline_mode<synchronous>, transform_indices = @transform_7, window_bounds = array<i64: 2, 1, 128>}, {pipeline_mode = #tpu.pipeline_mode<synchronous>, transform_indices = @transform_8, window_bounds = array<i64: 2, 1, 128>}, {pipeline_mode = #tpu.pipeline_mode<synchronous>, transform_indices = @transform_9, window_bounds = array<i64: 2, 1, 128>}, {pipeline_mode = #tpu.pipeline_mode<synchronous>, transform_indices = @transform_10, window_bounds = array<i64: 2, 128, 512>}, {pipeline_mode = #tpu.pipeline_mode<synchronous>, transform_indices = @transform_11, window_bounds = array<i64: 2, 1, 512>}, {pipeline_mode = #tpu.pipeline_mode<synchronous>, transform_indices = @transform_12, window_bounds = array<i64: 2, 512, 128>}, {pipeline_mode = #tpu.pipeline_mode<synchronous>, transform_indices = @transform_13, window_bounds = array<i64: 2, 1, 128>}, {pipeline_mode = #tpu.pipeline_mode<synchronous>, transform_indices = @transform_14, window_bounds = array<i64: 2, 1, 128>}, {pipeline_mode = #tpu.pipeline_mode<synchronous>, transform_indices = @transform_15, window_bounds = array<i64: 2, 1, 128>}, {pipeline_mode = #tpu.pipeline_mode<synchronous>, transform_indices = @transform_16, window_bounds = array<i64: 128, 128>}, {pipeline_mode = #tpu.pipeline_mode<synchronous>, transform_indices = @transform_17, window_bounds = array<i64: 1, 128>}, {pipeline_mode = #tpu.pipeline_mode<synchronous>, transform_indices = @transform_18, window_bounds = array<i64: 32, 128>}]} {
    %c0 = arith.constant 0 : index
    %c0_0 = arith.constant 0 : index
    %0 = vector.load %arg1[%c0, %c0_0] : memref<32x128xf32, #tpu.memory_space<vmem>>, vector<32x128xf32>
    %c0_1 = arith.constant 0 : index
    %c0_2 = arith.constant 0 : index
    %1 = vector.load %arg3[%c0_1, %c0_2] : memref<1x128xf32, #tpu.memory_space<vmem>>, vector<1x128xf32>
    %c0_3 = arith.constant 0 : index
    %c0_4 = arith.constant 0 : index
    %2 = vector.load %arg4[%c0_3, %c0_4] : memref<1x128xf32, #tpu.memory_space<vmem>>, vector<1x128xf32>
    %cst = arith.constant dense<0.000000e+00> : vector<32xf32>
    %3 = vector.multi_reduction <add>, %0, %cst [1] : vector<32x128xf32> to vector<32xf32>
    %4 = vector.shape_cast %3 : vector<32xf32> to vector<32x1xf32>
    %cst_5 = arith.constant 1.280000e+02 : f32
    %5 = vector.broadcast %cst_5 : f32 to vector<32x1xf32>
    %6 = arith.divf %4, %5 : vector<32x1xf32>
    %7 = vector.broadcast %6 : vector<32x1xf32> to vector<32x128xf32>
    %8 = arith.subf %0, %7 : vector<32x128xf32>
    %9 = arith.mulf %8, %8 : vector<32x128xf32>
    %cst_6 = arith.constant dense<0.000000e+00> : vector<32xf32>
    %10 = vector.multi_reduction <add>, %9, %cst_6 [1] : vector<32x128xf32> to vector<32xf32>
    %11 = vector.shape_cast %10 : vector<32xf32> to vector<32x1xf32>
    %cst_7 = arith.constant 1.280000e+02 : f32
    %12 = vector.broadcast %cst_7 : f32 to vector<32x1xf32>
    %13 = arith.divf %11, %12 : vector<32x1xf32>
    %cst_8 = arith.constant 9.99999996E-13 : f32
    %14 = vector.broadcast %cst_8 : f32 to vector<32x1xf32>
    %15 = arith.addf %13, %14 : vector<32x1xf32>
    %16 = math.rsqrt %15 : vector<32x1xf32>
    %17 = vector.broadcast %16 : vector<32x1xf32> to vector<32x128xf32>
    %18 = arith.mulf %8, %17 : vector<32x128xf32>
    %19 = vector.broadcast %1 : vector<1x128xf32> to vector<32x128xf32>
    %20 = arith.mulf %18, %19 : vector<32x128xf32>
    %21 = vector.broadcast %2 : vector<1x128xf32> to vector<32x128xf32>
    %22 = arith.addf %20, %21 : vector<32x128xf32>
    %c0_9 = arith.constant 0 : index
    %c0_10 = arith.constant 0 : index
    %c0_11 = arith.constant 0 : index
    %23 = vector.load %arg2[%c0_9, %c0_10, %c0_11] : memref<2x1x16xf32, #tpu.memory_space<vmem>>, vector<1x1x16xf32>
    %24 = vector.shape_cast %23 : vector<1x1x16xf32> to vector<1x16xf32>
    %25 = vector.shape_cast %24 : vector<1x16xf32> to vector<1x16xf32>
    %26 = vector.broadcast %25 : vector<1x16xf32> to vector<16x16xf32>
    %c1 = arith.constant 1 : index
    %c0_12 = arith.constant 0 : index
    %c0_13 = arith.constant 0 : index
    %27 = vector.load %arg2[%c1, %c0_12, %c0_13] : memref<2x1x16xf32, #tpu.memory_space<vmem>>, vector<1x1x16xf32>
    %28 = vector.shape_cast %27 : vector<1x1x16xf32> to vector<1x16xf32>
    %29 = vector.shape_cast %28 : vector<1x16xf32> to vector<1x16xf32>
    %30 = vector.broadcast %29 : vector<1x16xf32> to vector<16x16xf32>
    %c0_14 = arith.constant 0 : index
    %c0_15 = arith.constant 0 : index
    %c0_16 = arith.constant 0 : index
    %31 = vector.load %arg5[%c0_14, %c0_15, %c0_16] : memref<2x128x384xbf16, #tpu.memory_space<vmem>>, vector<1x128x384xbf16>
    %32 = vector.shape_cast %31 : vector<1x128x384xbf16> to vector<128x384xbf16>
    %c0_17 = arith.constant 0 : index
    %c0_18 = arith.constant 0 : index
    %c0_19 = arith.constant 0 : index
    %33 = vector.load %arg6[%c0_17, %c0_18, %c0_19] : memref<2x1x384xf32, #tpu.memory_space<vmem>>, vector<1x1x384xf32>
    %34 = vector.shape_cast %33 : vector<1x1x384xf32> to vector<1x384xf32>
    %35 = arith.truncf %22 : vector<32x128xf32> to vector<32x128xbf16>
    %cst_20 = arith.constant dense<0.000000e+00> : vector<32x384xf32>
    %36 = tpu.matmul %35, %32, %cst_20 {dimension_numbers = #tpu.dot_dimension_numbers<[1], [0], [0], [1], [0, 0, 1, 1], [], []>} : vector<32x128xbf16>, vector<128x384xbf16>, vector<32x384xf32> -> vector<32x384xf32>
    %37 = vector.broadcast %34 : vector<1x384xf32> to vector<32x384xf32>
    %38 = arith.addf %36, %37 : vector<32x384xf32>
    %39 = vector.extract_strided_slice %38 {offsets = [0, 0], sizes = [32, 128], strides = [1, 1]} : vector<32x384xf32> to vector<32x128xf32>
    %40 = arith.truncf %39 : vector<32x128xf32> to vector<32x128xbf16>
    %41 = vector.extract_strided_slice %38 {offsets = [0, 128], sizes = [32, 128], strides = [1, 1]} : vector<32x384xf32> to vector<32x128xf32>
    %42 = arith.truncf %41 : vector<32x128xf32> to vector<32x128xbf16>
    %43 = vector.extract_strided_slice %38 {offsets = [0, 256], sizes = [32, 128], strides = [1, 1]} : vector<32x384xf32> to vector<32x128xf32>
    %44 = arith.truncf %43 : vector<32x128xf32> to vector<32x128xbf16>
    %45 = vector.extract_strided_slice %40 {offsets = [0, 0], sizes = [16, 32], strides = [1, 1]} : vector<32x128xbf16> to vector<16x32xbf16>
    %46 = vector.extract_strided_slice %42 {offsets = [0, 0], sizes = [16, 32], strides = [1, 1]} : vector<32x128xbf16> to vector<16x32xbf16>
    %47 = vector.extract_strided_slice %44 {offsets = [0, 0], sizes = [16, 32], strides = [1, 1]} : vector<32x128xbf16> to vector<16x32xbf16>
    %cst_21 = arith.constant dense<0.000000e+00> : vector<16x16xf32>
    %48 = tpu.matmul %45, %46, %cst_21 {dimension_numbers = #tpu.dot_dimension_numbers<[1], [1], [0], [0], [0, 0, 1, 0], [], []>} : vector<16x32xbf16>, vector<16x32xbf16>, vector<16x16xf32> -> vector<16x16xf32>
    %49 = arith.addf %48, %26 : vector<16x16xf32>
    %cst_22 = arith.constant dense<0xFF800000> : vector<16xf32>
    %50 = vector.multi_reduction <maximumf>, %49, %cst_22 [1] : vector<16x16xf32> to vector<16xf32>
    %51 = vector.shape_cast %50 : vector<16xf32> to vector<16x1xf32>
    %52 = vector.broadcast %51 : vector<16x1xf32> to vector<16x16xf32>
    %53 = arith.subf %49, %52 : vector<16x16xf32>
    %54 = math.exp %53 : vector<16x16xf32>
    %cst_23 = arith.constant dense<0.000000e+00> : vector<16xf32>
    %55 = vector.multi_reduction <add>, %54, %cst_23 [1] : vector<16x16xf32> to vector<16xf32>
    %56 = vector.shape_cast %55 : vector<16xf32> to vector<16x1xf32>
    %57 = tpu.reciprocal %56 {approx = true} : vector<16x1xf32> -> vector<16x1xf32>
    %58 = vector.broadcast %57 : vector<16x1xf32> to vector<16x16xf32>
    %59 = arith.mulf %54, %58 : vector<16x16xf32>
    %60 = arith.truncf %59 : vector<16x16xf32> to vector<16x16xbf16>
    %cst_24 = arith.constant dense<0.000000e+00> : vector<16x32xf32>
    %61 = tpu.matmul %60, %47, %cst_24 {dimension_numbers = #tpu.dot_dimension_numbers<[1], [0], [0], [1], [0, 0, 1, 1], [], []>} : vector<16x16xbf16>, vector<16x32xbf16>, vector<16x32xf32> -> vector<16x32xf32>
    %c0_25 = arith.constant 0 : index
    %c0_26 = arith.constant 0 : index
    %62 = vector.load %arg20[%c0_25, %c0_26] : memref<32x128xf32, #tpu.memory_space<vmem>>, vector<16x32xf32>
    tpu.vector_store %arg20[%c0_25, %c0_26], %61 {strides = array<i32>} : memref<32x128xf32, #tpu.memory_space<vmem>>, vector<16x32xf32>,
    %63 = vector.extract_strided_slice %40 {offsets = [0, 32], sizes = [16, 32], strides = [1, 1]} : vector<32x128xbf16> to vector<16x32xbf16>
    %64 = vector.extract_strided_slice %42 {offsets = [0, 32], sizes = [16, 32], strides = [1, 1]} : vector<32x128xbf16> to vector<16x32xbf16>
    %65 = vector.extract_strided_slice %44 {offsets = [0, 32], sizes = [16, 32], strides = [1, 1]} : vector<32x128xbf16> to vector<16x32xbf16>
    %cst_27 = arith.constant dense<0.000000e+00> : vector<16x16xf32>
    %66 = tpu.matmul %63, %64, %cst_27 {dimension_numbers = #tpu.dot_dimension_numbers<[1], [1], [0], [0], [0, 0, 1, 0], [], []>} : vector<16x32xbf16>, vector<16x32xbf16>, vector<16x16xf32> -> vector<16x16xf32>
    %67 = arith.addf %66, %26 : vector<16x16xf32>
    %cst_28 = arith.constant dense<0xFF800000> : vector<16xf32>
    %68 = vector.multi_reduction <maximumf>, %67, %cst_28 [1] : vector<16x16xf32> to vector<16xf32>
    %69 = vector.shape_cast %68 : vector<16xf32> to vector<16x1xf32>
    %70 = vector.broadcast %69 : vector<16x1xf32> to vector<16x16xf32>
    %71 = arith.subf %67, %70 : vector<16x16xf32>
    %72 = math.exp %71 : vector<16x16xf32>
    %cst_29 = arith.constant dense<0.000000e+00> : vector<16xf32>
    %73 = vector.multi_reduction <add>, %72, %cst_29 [1] : vector<16x16xf32> to vector<16xf32>
    %74 = vector.shape_cast %73 : vector<16xf32> to vector<16x1xf32>
    %75 = tpu.reciprocal %74 {approx = true} : vector<16x1xf32> -> vector<16x1xf32>
    %76 = vector.broadcast %75 : vector<16x1xf32> to vector<16x16xf32>
    %77 = arith.mulf %72, %76 : vector<16x16xf32>
    %78 = arith.truncf %77 : vector<16x16xf32> to vector<16x16xbf16>
    %cst_30 = arith.constant dense<0.000000e+00> : vector<16x32xf32>
    %79 = tpu.matmul %78, %65, %cst_30 {dimension_numbers = #tpu.dot_dimension_numbers<[1], [0], [0], [1], [0, 0, 1, 1], [], []>} : vector<16x16xbf16>, vector<16x32xbf16>, vector<16x32xf32> -> vector<16x32xf32>
    %c0_31 = arith.constant 0 : index
    %c32 = arith.constant 32 : index
    %80 = vector.load %arg20[%c0_31, %c32] : memref<32x128xf32, #tpu.memory_space<vmem>>, vector<16x32xf32>
    tpu.vector_store %arg20[%c0_31, %c32], %79 {strides = array<i32>} : memref<32x128xf32, #tpu.memory_space<vmem>>, vector<16x32xf32>,
    %81 = vector.extract_strided_slice %40 {offsets = [0, 64], sizes = [16, 32], strides = [1, 1]} : vector<32x128xbf16> to vector<16x32xbf16>
    %82 = vector.extract_strided_slice %42 {offsets = [0, 64], sizes = [16, 32], strides = [1, 1]} : vector<32x128xbf16> to vector<16x32xbf16>
    %83 = vector.extract_strided_slice %44 {offsets = [0, 64], sizes = [16, 32], strides = [1, 1]} : vector<32x128xbf16> to vector<16x32xbf16>
    %cst_32 = arith.constant dense<0.000000e+00> : vector<16x16xf32>
    %84 = tpu.matmul %81, %82, %cst_32 {dimension_numbers = #tpu.dot_dimension_numbers<[1], [1], [0], [0], [0, 0, 1, 0], [], []>} : vector<16x32xbf16>, vector<16x32xbf16>, vector<16x16xf32> -> vector<16x16xf32>
    %85 = arith.addf %84, %26 : vector<16x16xf32>
    %cst_33 = arith.constant dense<0xFF800000> : vector<16xf32>
    %86 = vector.multi_reduction <maximumf>, %85, %cst_33 [1] : vector<16x16xf32> to vector<16xf32>
    %87 = vector.shape_cast %86 : vector<16xf32> to vector<16x1xf32>
    %88 = vector.broadcast %87 : vector<16x1xf32> to vector<16x16xf32>
    %89 = arith.subf %85, %88 : vector<16x16xf32>
    %90 = math.exp %89 : vector<16x16xf32>
    %cst_34 = arith.constant dense<0.000000e+00> : vector<16xf32>
    %91 = vector.multi_reduction <add>, %90, %cst_34 [1] : vector<16x16xf32> to vector<16xf32>
    %92 = vector.shape_cast %91 : vector<16xf32> to vector<16x1xf32>
    %93 = tpu.reciprocal %92 {approx = true} : vector<16x1xf32> -> vector<16x1xf32>
    %94 = vector.broadcast %93 : vector<16x1xf32> to vector<16x16xf32>
    %95 = arith.mulf %90, %94 : vector<16x16xf32>
    %96 = arith.truncf %95 : vector<16x16xf32> to vector<16x16xbf16>
    %cst_35 = arith.constant dense<0.000000e+00> : vector<16x32xf32>
    %97 = tpu.matmul %96, %83, %cst_35 {dimension_numbers = #tpu.dot_dimension_numbers<[1], [0], [0], [1], [0, 0, 1, 1], [], []>} : vector<16x16xbf16>, vector<16x32xbf16>, vector<16x32xf32> -> vector<16x32xf32>
    %c0_36 = arith.constant 0 : index
    %c64 = arith.constant 64 : index
    %98 = vector.load %arg20[%c0_36, %c64] : memref<32x128xf32, #tpu.memory_space<vmem>>, vector<16x32xf32>
    tpu.vector_store %arg20[%c0_36, %c64], %97 {strides = array<i32>} : memref<32x128xf32, #tpu.memory_space<vmem>>, vector<16x32xf32>,
    %99 = vector.extract_strided_slice %40 {offsets = [0, 96], sizes = [16, 32], strides = [1, 1]} : vector<32x128xbf16> to vector<16x32xbf16>
    %100 = vector.extract_strided_slice %42 {offsets = [0, 96], sizes = [16, 32], strides = [1, 1]} : vector<32x128xbf16> to vector<16x32xbf16>
    %101 = vector.extract_strided_slice %44 {offsets = [0, 96], sizes = [16, 32], strides = [1, 1]} : vector<32x128xbf16> to vector<16x32xbf16>
    %cst_37 = arith.constant dense<0.000000e+00> : vector<16x16xf32>
    %102 = tpu.matmul %99, %100, %cst_37 {dimension_numbers = #tpu.dot_dimension_numbers<[1], [1], [0], [0], [0, 0, 1, 0], [], []>} : vector<16x32xbf16>, vector<16x32xbf16>, vector<16x16xf32> -> vector<16x16xf32>
    %103 = arith.addf %102, %26 : vector<16x16xf32>
    %cst_38 = arith.constant dense<0xFF800000> : vector<16xf32>
    %104 = vector.multi_reduction <maximumf>, %103, %cst_38 [1] : vector<16x16xf32> to vector<16xf32>
    %105 = vector.shape_cast %104 : vector<16xf32> to vector<16x1xf32>
    %106 = vector.broadcast %105 : vector<16x1xf32> to vector<16x16xf32>
    %107 = arith.subf %103, %106 : vector<16x16xf32>
    %108 = math.exp %107 : vector<16x16xf32>
    %cst_39 = arith.constant dense<0.000000e+00> : vector<16xf32>
    %109 = vector.multi_reduction <add>, %108, %cst_39 [1] : vector<16x16xf32> to vector<16xf32>
    %110 = vector.shape_cast %109 : vector<16xf32> to vector<16x1xf32>
    %111 = tpu.reciprocal %110 {approx = true} : vector<16x1xf32> -> vector<16x1xf32>
    %112 = vector.broadcast %111 : vector<16x1xf32> to vector<16x16xf32>
    %113 = arith.mulf %108, %112 : vector<16x16xf32>
    %114 = arith.truncf %113 : vector<16x16xf32> to vector<16x16xbf16>
    %cst_40 = arith.constant dense<0.000000e+00> : vector<16x32xf32>
    %115 = tpu.matmul %114, %101, %cst_40 {dimension_numbers = #tpu.dot_dimension_numbers<[1], [0], [0], [1], [0, 0, 1, 1], [], []>} : vector<16x16xbf16>, vector<16x32xbf16>, vector<16x32xf32> -> vector<16x32xf32>
    %c0_41 = arith.constant 0 : index
    %c96 = arith.constant 96 : index
    %116 = vector.load %arg20[%c0_41, %c96] : memref<32x128xf32, #tpu.memory_space<vmem>>, vector<16x32xf32>
    tpu.vector_store %arg20[%c0_41, %c96], %115 {strides = array<i32>} : memref<32x128xf32, #tpu.memory_space<vmem>>, vector<16x32xf32>,
    %117 = vector.extract_strided_slice %40 {offsets = [16, 0], sizes = [16, 32], strides = [1, 1]} : vector<32x128xbf16> to vector<16x32xbf16>
    %118 = vector.extract_strided_slice %42 {offsets = [16, 0], sizes = [16, 32], strides = [1, 1]} : vector<32x128xbf16> to vector<16x32xbf16>
    %119 = vector.extract_strided_slice %44 {offsets = [16, 0], sizes = [16, 32], strides = [1, 1]} : vector<32x128xbf16> to vector<16x32xbf16>
    %cst_42 = arith.constant dense<0.000000e+00> : vector<16x16xf32>
    %120 = tpu.matmul %117, %118, %cst_42 {dimension_numbers = #tpu.dot_dimension_numbers<[1], [1], [0], [0], [0, 0, 1, 0], [], []>} : vector<16x32xbf16>, vector<16x32xbf16>, vector<16x16xf32> -> vector<16x16xf32>
    %121 = arith.addf %120, %30 : vector<16x16xf32>
    %cst_43 = arith.constant dense<0xFF800000> : vector<16xf32>
    %122 = vector.multi_reduction <maximumf>, %121, %cst_43 [1] : vector<16x16xf32> to vector<16xf32>
    %123 = vector.shape_cast %122 : vector<16xf32> to vector<16x1xf32>
    %124 = vector.broadcast %123 : vector<16x1xf32> to vector<16x16xf32>
    %125 = arith.subf %121, %124 : vector<16x16xf32>
    %126 = math.exp %125 : vector<16x16xf32>
    %cst_44 = arith.constant dense<0.000000e+00> : vector<16xf32>
    %127 = vector.multi_reduction <add>, %126, %cst_44 [1] : vector<16x16xf32> to vector<16xf32>
    %128 = vector.shape_cast %127 : vector<16xf32> to vector<16x1xf32>
    %129 = tpu.reciprocal %128 {approx = true} : vector<16x1xf32> -> vector<16x1xf32>
    %130 = vector.broadcast %129 : vector<16x1xf32> to vector<16x16xf32>
    %131 = arith.mulf %126, %130 : vector<16x16xf32>
    %132 = arith.truncf %131 : vector<16x16xf32> to vector<16x16xbf16>
    %cst_45 = arith.constant dense<0.000000e+00> : vector<16x32xf32>
    %133 = tpu.matmul %132, %119, %cst_45 {dimension_numbers = #tpu.dot_dimension_numbers<[1], [0], [0], [1], [0, 0, 1, 1], [], []>} : vector<16x16xbf16>, vector<16x32xbf16>, vector<16x32xf32> -> vector<16x32xf32>
    %c16 = arith.constant 16 : index
    %c0_46 = arith.constant 0 : index
    %134 = vector.load %arg20[%c16, %c0_46] : memref<32x128xf32, #tpu.memory_space<vmem>>, vector<16x32xf32>
    tpu.vector_store %arg20[%c16, %c0_46], %133 {strides = array<i32>} : memref<32x128xf32, #tpu.memory_space<vmem>>, vector<16x32xf32>,
    %135 = vector.extract_strided_slice %40 {offsets = [16, 32], sizes = [16, 32], strides = [1, 1]} : vector<32x128xbf16> to vector<16x32xbf16>
    %136 = vector.extract_strided_slice %42 {offsets = [16, 32], sizes = [16, 32], strides = [1, 1]} : vector<32x128xbf16> to vector<16x32xbf16>
    %137 = vector.extract_strided_slice %44 {offsets = [16, 32], sizes = [16, 32], strides = [1, 1]} : vector<32x128xbf16> to vector<16x32xbf16>
    %cst_47 = arith.constant dense<0.000000e+00> : vector<16x16xf32>
    %138 = tpu.matmul %135, %136, %cst_47 {dimension_numbers = #tpu.dot_dimension_numbers<[1], [1], [0], [0], [0, 0, 1, 0], [], []>} : vector<16x32xbf16>, vector<16x32xbf16>, vector<16x16xf32> -> vector<16x16xf32>
    %139 = arith.addf %138, %30 : vector<16x16xf32>
    %cst_48 = arith.constant dense<0xFF800000> : vector<16xf32>
    %140 = vector.multi_reduction <maximumf>, %139, %cst_48 [1] : vector<16x16xf32> to vector<16xf32>
    %141 = vector.shape_cast %140 : vector<16xf32> to vector<16x1xf32>
    %142 = vector.broadcast %141 : vector<16x1xf32> to vector<16x16xf32>
    %143 = arith.subf %139, %142 : vector<16x16xf32>
    %144 = math.exp %143 : vector<16x16xf32>
    %cst_49 = arith.constant dense<0.000000e+00> : vector<16xf32>
    %145 = vector.multi_reduction <add>, %144, %cst_49 [1] : vector<16x16xf32> to vector<16xf32>
    %146 = vector.shape_cast %145 : vector<16xf32> to vector<16x1xf32>
    %147 = tpu.reciprocal %146 {approx = true} : vector<16x1xf32> -> vector<16x1xf32>
    %148 = vector.broadcast %147 : vector<16x1xf32> to vector<16x16xf32>
    %149 = arith.mulf %144, %148 : vector<16x16xf32>
    %150 = arith.truncf %149 : vector<16x16xf32> to vector<16x16xbf16>
    %cst_50 = arith.constant dense<0.000000e+00> : vector<16x32xf32>
    %151 = tpu.matmul %150, %137, %cst_50 {dimension_numbers = #tpu.dot_dimension_numbers<[1], [0], [0], [1], [0, 0, 1, 1], [], []>} : vector<16x16xbf16>, vector<16x32xbf16>, vector<16x32xf32> -> vector<16x32xf32>
    %c16_51 = arith.constant 16 : index
    %c32_52 = arith.constant 32 : index
    %152 = vector.load %arg20[%c16_51, %c32_52] : memref<32x128xf32, #tpu.memory_space<vmem>>, vector<16x32xf32>
    tpu.vector_store %arg20[%c16_51, %c32_52], %151 {strides = array<i32>} : memref<32x128xf32, #tpu.memory_space<vmem>>, vector<16x32xf32>,
    %153 = vector.extract_strided_slice %40 {offsets = [16, 64], sizes = [16, 32], strides = [1, 1]} : vector<32x128xbf16> to vector<16x32xbf16>
    %154 = vector.extract_strided_slice %42 {offsets = [16, 64], sizes = [16, 32], strides = [1, 1]} : vector<32x128xbf16> to vector<16x32xbf16>
    %155 = vector.extract_strided_slice %44 {offsets = [16, 64], sizes = [16, 32], strides = [1, 1]} : vector<32x128xbf16> to vector<16x32xbf16>
    %cst_53 = arith.constant dense<0.000000e+00> : vector<16x16xf32>
    %156 = tpu.matmul %153, %154, %cst_53 {dimension_numbers = #tpu.dot_dimension_numbers<[1], [1], [0], [0], [0, 0, 1, 0], [], []>} : vector<16x32xbf16>, vector<16x32xbf16>, vector<16x16xf32> -> vector<16x16xf32>
    %157 = arith.addf %156, %30 : vector<16x16xf32>
    %cst_54 = arith.constant dense<0xFF800000> : vector<16xf32>
    %158 = vector.multi_reduction <maximumf>, %157, %cst_54 [1] : vector<16x16xf32> to vector<16xf32>
    %159 = vector.shape_cast %158 : vector<16xf32> to vector<16x1xf32>
    %160 = vector.broadcast %159 : vector<16x1xf32> to vector<16x16xf32>
    %161 = arith.subf %157, %160 : vector<16x16xf32>
    %162 = math.exp %161 : vector<16x16xf32>
    %cst_55 = arith.constant dense<0.000000e+00> : vector<16xf32>
    %163 = vector.multi_reduction <add>, %162, %cst_55 [1] : vector<16x16xf32> to vector<16xf32>
    %164 = vector.shape_cast %163 : vector<16xf32> to vector<16x1xf32>
    %165 = tpu.reciprocal %164 {approx = true} : vector<16x1xf32> -> vector<16x1xf32>
    %166 = vector.broadcast %165 : vector<16x1xf32> to vector<16x16xf32>
    %167 = arith.mulf %162, %166 : vector<16x16xf32>
    %168 = arith.truncf %167 : vector<16x16xf32> to vector<16x16xbf16>
    %cst_56 = arith.constant dense<0.000000e+00> : vector<16x32xf32>
    %169 = tpu.matmul %168, %155, %cst_56 {dimension_numbers = #tpu.dot_dimension_numbers<[1], [0], [0], [1], [0, 0, 1, 1], [], []>} : vector<16x16xbf16>, vector<16x32xbf16>, vector<16x32xf32> -> vector<16x32xf32>
    %c16_57 = arith.constant 16 : index
    %c64_58 = arith.constant 64 : index
    %170 = vector.load %arg20[%c16_57, %c64_58] : memref<32x128xf32, #tpu.memory_space<vmem>>, vector<16x32xf32>
    tpu.vector_store %arg20[%c16_57, %c64_58], %169 {strides = array<i32>} : memref<32x128xf32, #tpu.memory_space<vmem>>, vector<16x32xf32>,
    %171 = vector.extract_strided_slice %40 {offsets = [16, 96], sizes = [16, 32], strides = [1, 1]} : vector<32x128xbf16> to vector<16x32xbf16>
    %172 = vector.extract_strided_slice %42 {offsets = [16, 96], sizes = [16, 32], strides = [1, 1]} : vector<32x128xbf16> to vector<16x32xbf16>
    %173 = vector.extract_strided_slice %44 {offsets = [16, 96], sizes = [16, 32], strides = [1, 1]} : vector<32x128xbf16> to vector<16x32xbf16>
    %cst_59 = arith.constant dense<0.000000e+00> : vector<16x16xf32>
    %174 = tpu.matmul %171, %172, %cst_59 {dimension_numbers = #tpu.dot_dimension_numbers<[1], [1], [0], [0], [0, 0, 1, 0], [], []>} : vector<16x32xbf16>, vector<16x32xbf16>, vector<16x16xf32> -> vector<16x16xf32>
    %175 = arith.addf %174, %30 : vector<16x16xf32>
    %cst_60 = arith.constant dense<0xFF800000> : vector<16xf32>
    %176 = vector.multi_reduction <maximumf>, %175, %cst_60 [1] : vector<16x16xf32> to vector<16xf32>
    %177 = vector.shape_cast %176 : vector<16xf32> to vector<16x1xf32>
    %178 = vector.broadcast %177 : vector<16x1xf32> to vector<16x16xf32>
    %179 = arith.subf %175, %178 : vector<16x16xf32>
    %180 = math.exp %179 : vector<16x16xf32>
    %cst_61 = arith.constant dense<0.000000e+00> : vector<16xf32>
    %181 = vector.multi_reduction <add>, %180, %cst_61 [1] : vector<16x16xf32> to vector<16xf32>
    %182 = vector.shape_cast %181 : vector<16xf32> to vector<16x1xf32>
    %183 = tpu.reciprocal %182 {approx = true} : vector<16x1xf32> -> vector<16x1xf32>
    %184 = vector.broadcast %183 : vector<16x1xf32> to vector<16x16xf32>
    %185 = arith.mulf %180, %184 : vector<16x16xf32>
    %186 = arith.truncf %185 : vector<16x16xf32> to vector<16x16xbf16>
    %cst_62 = arith.constant dense<0.000000e+00> : vector<16x32xf32>
    %187 = tpu.matmul %186, %173, %cst_62 {dimension_numbers = #tpu.dot_dimension_numbers<[1], [0], [0], [1], [0, 0, 1, 1], [], []>} : vector<16x16xbf16>, vector<16x32xbf16>, vector<16x32xf32> -> vector<16x32xf32>
    %c16_63 = arith.constant 16 : index
    %c96_64 = arith.constant 96 : index
    %188 = vector.load %arg20[%c16_63, %c96_64] : memref<32x128xf32, #tpu.memory_space<vmem>>, vector<16x32xf32>
    tpu.vector_store %arg20[%c16_63, %c96_64], %187 {strides = array<i32>} : memref<32x128xf32, #tpu.memory_space<vmem>>, vector<16x32xf32>,
    %c0_65 = arith.constant 0 : index
    %c0_66 = arith.constant 0 : index
    %189 = vector.load %arg20[%c0_65, %c0_66] : memref<32x128xf32, #tpu.memory_space<vmem>>, vector<32x128xf32>
    %c0_67 = arith.constant 0 : index
    %c0_68 = arith.constant 0 : index
    %c0_69 = arith.constant 0 : index
    %190 = vector.load %arg7[%c0_67, %c0_68, %c0_69] : memref<2x128x128xbf16, #tpu.memory_space<vmem>>, vector<1x128x128xbf16>
    %191 = vector.shape_cast %190 : vector<1x128x128xbf16> to vector<128x128xbf16>
    %c0_70 = arith.constant 0 : index
    %c0_71 = arith.constant 0 : index
    %c0_72 = arith.constant 0 : index
    %192 = vector.load %arg8[%c0_70, %c0_71, %c0_72] : memref<2x1x128xf32, #tpu.memory_space<vmem>>, vector<1x1x128xf32>
    %193 = vector.shape_cast %192 : vector<1x1x128xf32> to vector<1x128xf32>
    %194 = arith.truncf %189 : vector<32x128xf32> to vector<32x128xbf16>
    %cst_73 = arith.constant dense<0.000000e+00> : vector<32x128xf32>
    %195 = tpu.matmul %194, %191, %cst_73 {dimension_numbers = #tpu.dot_dimension_numbers<[1], [0], [0], [1], [0, 0, 1, 1], [], []>} : vector<32x128xbf16>, vector<128x128xbf16>, vector<32x128xf32> -> vector<32x128xf32>
    %196 = vector.broadcast %193 : vector<1x128xf32> to vector<32x128xf32>
    %197 = arith.addf %195, %196 : vector<32x128xf32>
    %198 = arith.addf %197, %22 : vector<32x128xf32>
    %c0_74 = arith.constant 0 : index
    %c0_75 = arith.constant 0 : index
    %c0_76 = arith.constant 0 : index
    %199 = vector.load %arg9[%c0_74, %c0_75, %c0_76] : memref<2x1x128xf32, #tpu.memory_space<vmem>>, vector<1x1x128xf32>
    %200 = vector.shape_cast %199 : vector<1x1x128xf32> to vector<1x128xf32>
    %c0_77 = arith.constant 0 : index
    %c0_78 = arith.constant 0 : index
    %c0_79 = arith.constant 0 : index
    %201 = vector.load %arg10[%c0_77, %c0_78, %c0_79] : memref<2x1x128xf32, #tpu.memory_space<vmem>>, vector<1x1x128xf32>
    %202 = vector.shape_cast %201 : vector<1x1x128xf32> to vector<1x128xf32>
    %cst_80 = arith.constant dense<0.000000e+00> : vector<32xf32>
    %203 = vector.multi_reduction <add>, %198, %cst_80 [1] : vector<32x128xf32> to vector<32xf32>
    %204 = vector.shape_cast %203 : vector<32xf32> to vector<32x1xf32>
    %cst_81 = arith.constant 1.280000e+02 : f32
    %205 = vector.broadcast %cst_81 : f32 to vector<32x1xf32>
    %206 = arith.divf %204, %205 : vector<32x1xf32>
    %207 = vector.broadcast %206 : vector<32x1xf32> to vector<32x128xf32>
    %208 = arith.subf %198, %207 : vector<32x128xf32>
    %209 = arith.mulf %208, %208 : vector<32x128xf32>
    %cst_82 = arith.constant dense<0.000000e+00> : vector<32xf32>
    %210 = vector.multi_reduction <add>, %209, %cst_82 [1] : vector<32x128xf32> to vector<32xf32>
    %211 = vector.shape_cast %210 : vector<32xf32> to vector<32x1xf32>
    %cst_83 = arith.constant 1.280000e+02 : f32
    %212 = vector.broadcast %cst_83 : f32 to vector<32x1xf32>
    %213 = arith.divf %211, %212 : vector<32x1xf32>
    %cst_84 = arith.constant 9.99999996E-13 : f32
    %214 = vector.broadcast %cst_84 : f32 to vector<32x1xf32>
    %215 = arith.addf %213, %214 : vector<32x1xf32>
    %216 = math.rsqrt %215 : vector<32x1xf32>
    %217 = vector.broadcast %216 : vector<32x1xf32> to vector<32x128xf32>
    %218 = arith.mulf %208, %217 : vector<32x128xf32>
    %219 = vector.broadcast %200 : vector<1x128xf32> to vector<32x128xf32>
    %220 = arith.mulf %218, %219 : vector<32x128xf32>
    %221 = vector.broadcast %202 : vector<1x128xf32> to vector<32x128xf32>
    %222 = arith.addf %220, %221 : vector<32x128xf32>
    %c0_85 = arith.constant 0 : index
    %c0_86 = arith.constant 0 : index
    %c0_87 = arith.constant 0 : index
    %223 = vector.load %arg11[%c0_85, %c0_86, %c0_87] : memref<2x128x512xbf16, #tpu.memory_space<vmem>>, vector<1x128x512xbf16>
    %224 = vector.shape_cast %223 : vector<1x128x512xbf16> to vector<128x512xbf16>
    %c0_88 = arith.constant 0 : index
    %c0_89 = arith.constant 0 : index
    %c0_90 = arith.constant 0 : index
    %225 = vector.load %arg12[%c0_88, %c0_89, %c0_90] : memref<2x1x512xf32, #tpu.memory_space<vmem>>, vector<1x1x512xf32>
    %226 = vector.shape_cast %225 : vector<1x1x512xf32> to vector<1x512xf32>
    %227 = arith.truncf %222 : vector<32x128xf32> to vector<32x128xbf16>
    %cst_91 = arith.constant dense<0.000000e+00> : vector<32x512xf32>
    %228 = tpu.matmul %227, %224, %cst_91 {dimension_numbers = #tpu.dot_dimension_numbers<[1], [0], [0], [1], [0, 0, 1, 1], [], []>} : vector<32x128xbf16>, vector<128x512xbf16>, vector<32x512xf32> -> vector<32x512xf32>
    %229 = vector.broadcast %226 : vector<1x512xf32> to vector<32x512xf32>
    %230 = arith.addf %228, %229 : vector<32x512xf32>
    %231 = arith.mulf %230, %230 : vector<32x512xf32>
    %232 = arith.mulf %230, %231 : vector<32x512xf32>
    %cst_92 = arith.constant 4.471500e-02 : f32
    %233 = vector.broadcast %cst_92 : f32 to vector<32x512xf32>
    %234 = arith.mulf %233, %232 : vector<32x512xf32>
    %235 = arith.addf %230, %234 : vector<32x512xf32>
    %cst_93 = arith.constant 0.797884583 : f32
    %236 = vector.broadcast %cst_93 : f32 to vector<32x512xf32>
    %237 = arith.mulf %236, %235 : vector<32x512xf32>
    %238 = math.tanh %237 : vector<32x512xf32>
    %cst_94 = arith.constant 1.000000e+00 : f32
    %239 = vector.broadcast %cst_94 : f32 to vector<32x512xf32>
    %240 = arith.addf %239, %238 : vector<32x512xf32>
    %cst_95 = arith.constant 5.000000e-01 : f32
    %241 = vector.broadcast %cst_95 : f32 to vector<32x512xf32>
    %242 = arith.mulf %241, %240 : vector<32x512xf32>
    %243 = arith.mulf %230, %242 : vector<32x512xf32>
    %c0_96 = arith.constant 0 : index
    %c0_97 = arith.constant 0 : index
    %c0_98 = arith.constant 0 : index
    %244 = vector.load %arg13[%c0_96, %c0_97, %c0_98] : memref<2x512x128xbf16, #tpu.memory_space<vmem>>, vector<1x512x128xbf16>
    %245 = vector.shape_cast %244 : vector<1x512x128xbf16> to vector<512x128xbf16>
    %c0_99 = arith.constant 0 : index
    %c0_100 = arith.constant 0 : index
    %c0_101 = arith.constant 0 : index
    %246 = vector.load %arg14[%c0_99, %c0_100, %c0_101] : memref<2x1x128xf32, #tpu.memory_space<vmem>>, vector<1x1x128xf32>
    %247 = vector.shape_cast %246 : vector<1x1x128xf32> to vector<1x128xf32>
    %248 = arith.truncf %243 : vector<32x512xf32> to vector<32x512xbf16>
    %cst_102 = arith.constant dense<0.000000e+00> : vector<32x128xf32>
    %249 = tpu.matmul %248, %245, %cst_102 {dimension_numbers = #tpu.dot_dimension_numbers<[1], [0], [0], [1], [0, 0, 1, 1], [], []>} : vector<32x512xbf16>, vector<512x128xbf16>, vector<32x128xf32> -> vector<32x128xf32>
    %250 = vector.broadcast %247 : vector<1x128xf32> to vector<32x128xf32>
    %251 = arith.addf %249, %250 : vector<32x128xf32>
    %252 = arith.addf %251, %222 : vector<32x128xf32>
    %c0_103 = arith.constant 0 : index
    %c0_104 = arith.constant 0 : index
    %c0_105 = arith.constant 0 : index
    %253 = vector.load %arg15[%c0_103, %c0_104, %c0_105] : memref<2x1x128xf32, #tpu.memory_space<vmem>>, vector<1x1x128xf32>
    %254 = vector.shape_cast %253 : vector<1x1x128xf32> to vector<1x128xf32>
    %c0_106 = arith.constant 0 : index
    %c0_107 = arith.constant 0 : index
    %c0_108 = arith.constant 0 : index
    %255 = vector.load %arg16[%c0_106, %c0_107, %c0_108] : memref<2x1x128xf32, #tpu.memory_space<vmem>>, vector<1x1x128xf32>
    %256 = vector.shape_cast %255 : vector<1x1x128xf32> to vector<1x128xf32>
    %cst_109 = arith.constant dense<0.000000e+00> : vector<32xf32>
    %257 = vector.multi_reduction <add>, %252, %cst_109 [1] : vector<32x128xf32> to vector<32xf32>
    %258 = vector.shape_cast %257 : vector<32xf32> to vector<32x1xf32>
    %cst_110 = arith.constant 1.280000e+02 : f32
    %259 = vector.broadcast %cst_110 : f32 to vector<32x1xf32>
    %260 = arith.divf %258, %259 : vector<32x1xf32>
    %261 = vector.broadcast %260 : vector<32x1xf32> to vector<32x128xf32>
    %262 = arith.subf %252, %261 : vector<32x128xf32>
    %263 = arith.mulf %262, %262 : vector<32x128xf32>
    %cst_111 = arith.constant dense<0.000000e+00> : vector<32xf32>
    %264 = vector.multi_reduction <add>, %263, %cst_111 [1] : vector<32x128xf32> to vector<32xf32>
    %265 = vector.shape_cast %264 : vector<32xf32> to vector<32x1xf32>
    %cst_112 = arith.constant 1.280000e+02 : f32
    %266 = vector.broadcast %cst_112 : f32 to vector<32x1xf32>
    %267 = arith.divf %265, %266 : vector<32x1xf32>
    %cst_113 = arith.constant 9.99999996E-13 : f32
    %268 = vector.broadcast %cst_113 : f32 to vector<32x1xf32>
    %269 = arith.addf %267, %268 : vector<32x1xf32>
    %270 = math.rsqrt %269 : vector<32x1xf32>
    %271 = vector.broadcast %270 : vector<32x1xf32> to vector<32x128xf32>
    %272 = arith.mulf %262, %271 : vector<32x128xf32>
    %273 = vector.broadcast %254 : vector<1x128xf32> to vector<32x128xf32>
    %274 = arith.mulf %272, %273 : vector<32x128xf32>
    %275 = vector.broadcast %256 : vector<1x128xf32> to vector<32x128xf32>
    %276 = arith.addf %274, %275 : vector<32x128xf32>
    %c1_114 = arith.constant 1 : index
    %c0_115 = arith.constant 0 : index
    %c0_116 = arith.constant 0 : index
    %277 = vector.load %arg5[%c1_114, %c0_115, %c0_116] : memref<2x128x384xbf16, #tpu.memory_space<vmem>>, vector<1x128x384xbf16>
    %278 = vector.shape_cast %277 : vector<1x128x384xbf16> to vector<128x384xbf16>
    %c1_117 = arith.constant 1 : index
    %c0_118 = arith.constant 0 : index
    %c0_119 = arith.constant 0 : index
    %279 = vector.load %arg6[%c1_117, %c0_118, %c0_119] : memref<2x1x384xf32, #tpu.memory_space<vmem>>, vector<1x1x384xf32>
    %280 = vector.shape_cast %279 : vector<1x1x384xf32> to vector<1x384xf32>
    %281 = arith.truncf %276 : vector<32x128xf32> to vector<32x128xbf16>
    %cst_120 = arith.constant dense<0.000000e+00> : vector<32x384xf32>
    %282 = tpu.matmul %281, %278, %cst_120 {dimension_numbers = #tpu.dot_dimension_numbers<[1], [0], [0], [1], [0, 0, 1, 1], [], []>} : vector<32x128xbf16>, vector<128x384xbf16>, vector<32x384xf32> -> vector<32x384xf32>
    %283 = vector.broadcast %280 : vector<1x384xf32> to vector<32x384xf32>
    %284 = arith.addf %282, %283 : vector<32x384xf32>
    %285 = vector.extract_strided_slice %284 {offsets = [0, 0], sizes = [32, 128], strides = [1, 1]} : vector<32x384xf32> to vector<32x128xf32>
    %286 = arith.truncf %285 : vector<32x128xf32> to vector<32x128xbf16>
    %287 = vector.extract_strided_slice %284 {offsets = [0, 128], sizes = [32, 128], strides = [1, 1]} : vector<32x384xf32> to vector<32x128xf32>
    %288 = arith.truncf %287 : vector<32x128xf32> to vector<32x128xbf16>
    %289 = vector.extract_strided_slice %284 {offsets = [0, 256], sizes = [32, 128], strides = [1, 1]} : vector<32x384xf32> to vector<32x128xf32>
    %290 = arith.truncf %289 : vector<32x128xf32> to vector<32x128xbf16>
    %291 = vector.extract_strided_slice %286 {offsets = [0, 0], sizes = [16, 32], strides = [1, 1]} : vector<32x128xbf16> to vector<16x32xbf16>
    %292 = vector.extract_strided_slice %288 {offsets = [0, 0], sizes = [16, 32], strides = [1, 1]} : vector<32x128xbf16> to vector<16x32xbf16>
    %293 = vector.extract_strided_slice %290 {offsets = [0, 0], sizes = [16, 32], strides = [1, 1]} : vector<32x128xbf16> to vector<16x32xbf16>
    %cst_121 = arith.constant dense<0.000000e+00> : vector<16x16xf32>
    %294 = tpu.matmul %291, %292, %cst_121 {dimension_numbers = #tpu.dot_dimension_numbers<[1], [1], [0], [0], [0, 0, 1, 0], [], []>} : vector<16x32xbf16>, vector<16x32xbf16>, vector<16x16xf32> -> vector<16x16xf32>
    %295 = arith.addf %294, %26 : vector<16x16xf32>
    %cst_122 = arith.constant dense<0xFF800000> : vector<16xf32>
    %296 = vector.multi_reduction <maximumf>, %295, %cst_122 [1] : vector<16x16xf32> to vector<16xf32>
    %297 = vector.shape_cast %296 : vector<16xf32> to vector<16x1xf32>
    %298 = vector.broadcast %297 : vector<16x1xf32> to vector<16x16xf32>
    %299 = arith.subf %295, %298 : vector<16x16xf32>
    %300 = math.exp %299 : vector<16x16xf32>
    %cst_123 = arith.constant dense<0.000000e+00> : vector<16xf32>
    %301 = vector.multi_reduction <add>, %300, %cst_123 [1] : vector<16x16xf32> to vector<16xf32>
    %302 = vector.shape_cast %301 : vector<16xf32> to vector<16x1xf32>
    %303 = tpu.reciprocal %302 {approx = true} : vector<16x1xf32> -> vector<16x1xf32>
    %304 = vector.broadcast %303 : vector<16x1xf32> to vector<16x16xf32>
    %305 = arith.mulf %300, %304 : vector<16x16xf32>
    %306 = arith.truncf %305 : vector<16x16xf32> to vector<16x16xbf16>
    %cst_124 = arith.constant dense<0.000000e+00> : vector<16x32xf32>
    %307 = tpu.matmul %306, %293, %cst_124 {dimension_numbers = #tpu.dot_dimension_numbers<[1], [0], [0], [1], [0, 0, 1, 1], [], []>} : vector<16x16xbf16>, vector<16x32xbf16>, vector<16x32xf32> -> vector<16x32xf32>
    %c0_125 = arith.constant 0 : index
    %c0_126 = arith.constant 0 : index
    %308 = vector.load %arg20[%c0_125, %c0_126] : memref<32x128xf32, #tpu.memory_space<vmem>>, vector<16x32xf32>
    tpu.vector_store %arg20[%c0_125, %c0_126], %307 {strides = array<i32>} : memref<32x128xf32, #tpu.memory_space<vmem>>, vector<16x32xf32>,
    %309 = vector.extract_strided_slice %286 {offsets = [0, 32], sizes = [16, 32], strides = [1, 1]} : vector<32x128xbf16> to vector<16x32xbf16>
    %310 = vector.extract_strided_slice %288 {offsets = [0, 32], sizes = [16, 32], strides = [1, 1]} : vector<32x128xbf16> to vector<16x32xbf16>
    %311 = vector.extract_strided_slice %290 {offsets = [0, 32], sizes = [16, 32], strides = [1, 1]} : vector<32x128xbf16> to vector<16x32xbf16>
    %cst_127 = arith.constant dense<0.000000e+00> : vector<16x16xf32>
    %312 = tpu.matmul %309, %310, %cst_127 {dimension_numbers = #tpu.dot_dimension_numbers<[1], [1], [0], [0], [0, 0, 1, 0], [], []>} : vector<16x32xbf16>, vector<16x32xbf16>, vector<16x16xf32> -> vector<16x16xf32>
    %313 = arith.addf %312, %26 : vector<16x16xf32>
    %cst_128 = arith.constant dense<0xFF800000> : vector<16xf32>
    %314 = vector.multi_reduction <maximumf>, %313, %cst_128 [1] : vector<16x16xf32> to vector<16xf32>
    %315 = vector.shape_cast %314 : vector<16xf32> to vector<16x1xf32>
    %316 = vector.broadcast %315 : vector<16x1xf32> to vector<16x16xf32>
    %317 = arith.subf %313, %316 : vector<16x16xf32>
    %318 = math.exp %317 : vector<16x16xf32>
    %cst_129 = arith.constant dense<0.000000e+00> : vector<16xf32>
    %319 = vector.multi_reduction <add>, %318, %cst_129 [1] : vector<16x16xf32> to vector<16xf32>
    %320 = vector.shape_cast %319 : vector<16xf32> to vector<16x1xf32>
    %321 = tpu.reciprocal %320 {approx = true} : vector<16x1xf32> -> vector<16x1xf32>
    %322 = vector.broadcast %321 : vector<16x1xf32> to vector<16x16xf32>
    %323 = arith.mulf %318, %322 : vector<16x16xf32>
    %324 = arith.truncf %323 : vector<16x16xf32> to vector<16x16xbf16>
    %cst_130 = arith.constant dense<0.000000e+00> : vector<16x32xf32>
    %325 = tpu.matmul %324, %311, %cst_130 {dimension_numbers = #tpu.dot_dimension_numbers<[1], [0], [0], [1], [0, 0, 1, 1], [], []>} : vector<16x16xbf16>, vector<16x32xbf16>, vector<16x32xf32> -> vector<16x32xf32>
    %c0_131 = arith.constant 0 : index
    %c32_132 = arith.constant 32 : index
    %326 = vector.load %arg20[%c0_131, %c32_132] : memref<32x128xf32, #tpu.memory_space<vmem>>, vector<16x32xf32>
    tpu.vector_store %arg20[%c0_131, %c32_132], %325 {strides = array<i32>} : memref<32x128xf32, #tpu.memory_space<vmem>>, vector<16x32xf32>,
    %327 = vector.extract_strided_slice %286 {offsets = [0, 64], sizes = [16, 32], strides = [1, 1]} : vector<32x128xbf16> to vector<16x32xbf16>
    %328 = vector.extract_strided_slice %288 {offsets = [0, 64], sizes = [16, 32], strides = [1, 1]} : vector<32x128xbf16> to vector<16x32xbf16>
    %329 = vector.extract_strided_slice %290 {offsets = [0, 64], sizes = [16, 32], strides = [1, 1]} : vector<32x128xbf16> to vector<16x32xbf16>
    %cst_133 = arith.constant dense<0.000000e+00> : vector<16x16xf32>
    %330 = tpu.matmul %327, %328, %cst_133 {dimension_numbers = #tpu.dot_dimension_numbers<[1], [1], [0], [0], [0, 0, 1, 0], [], []>} : vector<16x32xbf16>, vector<16x32xbf16>, vector<16x16xf32> -> vector<16x16xf32>
    %331 = arith.addf %330, %26 : vector<16x16xf32>
    %cst_134 = arith.constant dense<0xFF800000> : vector<16xf32>
    %332 = vector.multi_reduction <maximumf>, %331, %cst_134 [1] : vector<16x16xf32> to vector<16xf32>
    %333 = vector.shape_cast %332 : vector<16xf32> to vector<16x1xf32>
    %334 = vector.broadcast %333 : vector<16x1xf32> to vector<16x16xf32>
    %335 = arith.subf %331, %334 : vector<16x16xf32>
    %336 = math.exp %335 : vector<16x16xf32>
    %cst_135 = arith.constant dense<0.000000e+00> : vector<16xf32>
    %337 = vector.multi_reduction <add>, %336, %cst_135 [1] : vector<16x16xf32> to vector<16xf32>
    %338 = vector.shape_cast %337 : vector<16xf32> to vector<16x1xf32>
    %339 = tpu.reciprocal %338 {approx = true} : vector<16x1xf32> -> vector<16x1xf32>
    %340 = vector.broadcast %339 : vector<16x1xf32> to vector<16x16xf32>
    %341 = arith.mulf %336, %340 : vector<16x16xf32>
    %342 = arith.truncf %341 : vector<16x16xf32> to vector<16x16xbf16>
    %cst_136 = arith.constant dense<0.000000e+00> : vector<16x32xf32>
    %343 = tpu.matmul %342, %329, %cst_136 {dimension_numbers = #tpu.dot_dimension_numbers<[1], [0], [0], [1], [0, 0, 1, 1], [], []>} : vector<16x16xbf16>, vector<16x32xbf16>, vector<16x32xf32> -> vector<16x32xf32>
    %c0_137 = arith.constant 0 : index
    %c64_138 = arith.constant 64 : index
    %344 = vector.load %arg20[%c0_137, %c64_138] : memref<32x128xf32, #tpu.memory_space<vmem>>, vector<16x32xf32>
    tpu.vector_store %arg20[%c0_137, %c64_138], %343 {strides = array<i32>} : memref<32x128xf32, #tpu.memory_space<vmem>>, vector<16x32xf32>,
    %345 = vector.extract_strided_slice %286 {offsets = [0, 96], sizes = [16, 32], strides = [1, 1]} : vector<32x128xbf16> to vector<16x32xbf16>
    %346 = vector.extract_strided_slice %288 {offsets = [0, 96], sizes = [16, 32], strides = [1, 1]} : vector<32x128xbf16> to vector<16x32xbf16>
    %347 = vector.extract_strided_slice %290 {offsets = [0, 96], sizes = [16, 32], strides = [1, 1]} : vector<32x128xbf16> to vector<16x32xbf16>
    %cst_139 = arith.constant dense<0.000000e+00> : vector<16x16xf32>
    %348 = tpu.matmul %345, %346, %cst_139 {dimension_numbers = #tpu.dot_dimension_numbers<[1], [1], [0], [0], [0, 0, 1, 0], [], []>} : vector<16x32xbf16>, vector<16x32xbf16>, vector<16x16xf32> -> vector<16x16xf32>
    %349 = arith.addf %348, %26 : vector<16x16xf32>
    %cst_140 = arith.constant dense<0xFF800000> : vector<16xf32>
    %350 = vector.multi_reduction <maximumf>, %349, %cst_140 [1] : vector<16x16xf32> to vector<16xf32>
    %351 = vector.shape_cast %350 : vector<16xf32> to vector<16x1xf32>
    %352 = vector.broadcast %351 : vector<16x1xf32> to vector<16x16xf32>
    %353 = arith.subf %349, %352 : vector<16x16xf32>
    %354 = math.exp %353 : vector<16x16xf32>
    %cst_141 = arith.constant dense<0.000000e+00> : vector<16xf32>
    %355 = vector.multi_reduction <add>, %354, %cst_141 [1] : vector<16x16xf32> to vector<16xf32>
    %356 = vector.shape_cast %355 : vector<16xf32> to vector<16x1xf32>
    %357 = tpu.reciprocal %356 {approx = true} : vector<16x1xf32> -> vector<16x1xf32>
    %358 = vector.broadcast %357 : vector<16x1xf32> to vector<16x16xf32>
    %359 = arith.mulf %354, %358 : vector<16x16xf32>
    %360 = arith.truncf %359 : vector<16x16xf32> to vector<16x16xbf16>
    %cst_142 = arith.constant dense<0.000000e+00> : vector<16x32xf32>
    %361 = tpu.matmul %360, %347, %cst_142 {dimension_numbers = #tpu.dot_dimension_numbers<[1], [0], [0], [1], [0, 0, 1, 1], [], []>} : vector<16x16xbf16>, vector<16x32xbf16>, vector<16x32xf32> -> vector<16x32xf32>
    %c0_143 = arith.constant 0 : index
    %c96_144 = arith.constant 96 : index
    %362 = vector.load %arg20[%c0_143, %c96_144] : memref<32x128xf32, #tpu.memory_space<vmem>>, vector<16x32xf32>
    tpu.vector_store %arg20[%c0_143, %c96_144], %361 {strides = array<i32>} : memref<32x128xf32, #tpu.memory_space<vmem>>, vector<16x32xf32>,
    %363 = vector.extract_strided_slice %286 {offsets = [16, 0], sizes = [16, 32], strides = [1, 1]} : vector<32x128xbf16> to vector<16x32xbf16>
    %364 = vector.extract_strided_slice %288 {offsets = [16, 0], sizes = [16, 32], strides = [1, 1]} : vector<32x128xbf16> to vector<16x32xbf16>
    %365 = vector.extract_strided_slice %290 {offsets = [16, 0], sizes = [16, 32], strides = [1, 1]} : vector<32x128xbf16> to vector<16x32xbf16>
    %cst_145 = arith.constant dense<0.000000e+00> : vector<16x16xf32>
    %366 = tpu.matmul %363, %364, %cst_145 {dimension_numbers = #tpu.dot_dimension_numbers<[1], [1], [0], [0], [0, 0, 1, 0], [], []>} : vector<16x32xbf16>, vector<16x32xbf16>, vector<16x16xf32> -> vector<16x16xf32>
    %367 = arith.addf %366, %30 : vector<16x16xf32>
    %cst_146 = arith.constant dense<0xFF800000> : vector<16xf32>
    %368 = vector.multi_reduction <maximumf>, %367, %cst_146 [1] : vector<16x16xf32> to vector<16xf32>
    %369 = vector.shape_cast %368 : vector<16xf32> to vector<16x1xf32>
    %370 = vector.broadcast %369 : vector<16x1xf32> to vector<16x16xf32>
    %371 = arith.subf %367, %370 : vector<16x16xf32>
    %372 = math.exp %371 : vector<16x16xf32>
    %cst_147 = arith.constant dense<0.000000e+00> : vector<16xf32>
    %373 = vector.multi_reduction <add>, %372, %cst_147 [1] : vector<16x16xf32> to vector<16xf32>
    %374 = vector.shape_cast %373 : vector<16xf32> to vector<16x1xf32>
    %375 = tpu.reciprocal %374 {approx = true} : vector<16x1xf32> -> vector<16x1xf32>
    %376 = vector.broadcast %375 : vector<16x1xf32> to vector<16x16xf32>
    %377 = arith.mulf %372, %376 : vector<16x16xf32>
    %378 = arith.truncf %377 : vector<16x16xf32> to vector<16x16xbf16>
    %cst_148 = arith.constant dense<0.000000e+00> : vector<16x32xf32>
    %379 = tpu.matmul %378, %365, %cst_148 {dimension_numbers = #tpu.dot_dimension_numbers<[1], [0], [0], [1], [0, 0, 1, 1], [], []>} : vector<16x16xbf16>, vector<16x32xbf16>, vector<16x32xf32> -> vector<16x32xf32>
    %c16_149 = arith.constant 16 : index
    %c0_150 = arith.constant 0 : index
    %380 = vector.load %arg20[%c16_149, %c0_150] : memref<32x128xf32, #tpu.memory_space<vmem>>, vector<16x32xf32>
    tpu.vector_store %arg20[%c16_149, %c0_150], %379 {strides = array<i32>} : memref<32x128xf32, #tpu.memory_space<vmem>>, vector<16x32xf32>,
    %381 = vector.extract_strided_slice %286 {offsets = [16, 32], sizes = [16, 32], strides = [1, 1]} : vector<32x128xbf16> to vector<16x32xbf16>
    %382 = vector.extract_strided_slice %288 {offsets = [16, 32], sizes = [16, 32], strides = [1, 1]} : vector<32x128xbf16> to vector<16x32xbf16>
    %383 = vector.extract_strided_slice %290 {offsets = [16, 32], sizes = [16, 32], strides = [1, 1]} : vector<32x128xbf16> to vector<16x32xbf16>
    %cst_151 = arith.constant dense<0.000000e+00> : vector<16x16xf32>
    %384 = tpu.matmul %381, %382, %cst_151 {dimension_numbers = #tpu.dot_dimension_numbers<[1], [1], [0], [0], [0, 0, 1, 0], [], []>} : vector<16x32xbf16>, vector<16x32xbf16>, vector<16x16xf32> -> vector<16x16xf32>
    %385 = arith.addf %384, %30 : vector<16x16xf32>
    %cst_152 = arith.constant dense<0xFF800000> : vector<16xf32>
    %386 = vector.multi_reduction <maximumf>, %385, %cst_152 [1] : vector<16x16xf32> to vector<16xf32>
    %387 = vector.shape_cast %386 : vector<16xf32> to vector<16x1xf32>
    %388 = vector.broadcast %387 : vector<16x1xf32> to vector<16x16xf32>
    %389 = arith.subf %385, %388 : vector<16x16xf32>
    %390 = math.exp %389 : vector<16x16xf32>
    %cst_153 = arith.constant dense<0.000000e+00> : vector<16xf32>
    %391 = vector.multi_reduction <add>, %390, %cst_153 [1] : vector<16x16xf32> to vector<16xf32>
    %392 = vector.shape_cast %391 : vector<16xf32> to vector<16x1xf32>
    %393 = tpu.reciprocal %392 {approx = true} : vector<16x1xf32> -> vector<16x1xf32>
    %394 = vector.broadcast %393 : vector<16x1xf32> to vector<16x16xf32>
    %395 = arith.mulf %390, %394 : vector<16x16xf32>
    %396 = arith.truncf %395 : vector<16x16xf32> to vector<16x16xbf16>
    %cst_154 = arith.constant dense<0.000000e+00> : vector<16x32xf32>
    %397 = tpu.matmul %396, %383, %cst_154 {dimension_numbers = #tpu.dot_dimension_numbers<[1], [0], [0], [1], [0, 0, 1, 1], [], []>} : vector<16x16xbf16>, vector<16x32xbf16>, vector<16x32xf32> -> vector<16x32xf32>
    %c16_155 = arith.constant 16 : index
    %c32_156 = arith.constant 32 : index
    %398 = vector.load %arg20[%c16_155, %c32_156] : memref<32x128xf32, #tpu.memory_space<vmem>>, vector<16x32xf32>
    tpu.vector_store %arg20[%c16_155, %c32_156], %397 {strides = array<i32>} : memref<32x128xf32, #tpu.memory_space<vmem>>, vector<16x32xf32>,
    %399 = vector.extract_strided_slice %286 {offsets = [16, 64], sizes = [16, 32], strides = [1, 1]} : vector<32x128xbf16> to vector<16x32xbf16>
    %400 = vector.extract_strided_slice %288 {offsets = [16, 64], sizes = [16, 32], strides = [1, 1]} : vector<32x128xbf16> to vector<16x32xbf16>
    %401 = vector.extract_strided_slice %290 {offsets = [16, 64], sizes = [16, 32], strides = [1, 1]} : vector<32x128xbf16> to vector<16x32xbf16>
    %cst_157 = arith.constant dense<0.000000e+00> : vector<16x16xf32>
    %402 = tpu.matmul %399, %400, %cst_157 {dimension_numbers = #tpu.dot_dimension_numbers<[1], [1], [0], [0], [0, 0, 1, 0], [], []>} : vector<16x32xbf16>, vector<16x32xbf16>, vector<16x16xf32> -> vector<16x16xf32>
    %403 = arith.addf %402, %30 : vector<16x16xf32>
    %cst_158 = arith.constant dense<0xFF800000> : vector<16xf32>
    %404 = vector.multi_reduction <maximumf>, %403, %cst_158 [1] : vector<16x16xf32> to vector<16xf32>
    %405 = vector.shape_cast %404 : vector<16xf32> to vector<16x1xf32>
    %406 = vector.broadcast %405 : vector<16x1xf32> to vector<16x16xf32>
    %407 = arith.subf %403, %406 : vector<16x16xf32>
    %408 = math.exp %407 : vector<16x16xf32>
    %cst_159 = arith.constant dense<0.000000e+00> : vector<16xf32>
    %409 = vector.multi_reduction <add>, %408, %cst_159 [1] : vector<16x16xf32> to vector<16xf32>
    %410 = vector.shape_cast %409 : vector<16xf32> to vector<16x1xf32>
    %411 = tpu.reciprocal %410 {approx = true} : vector<16x1xf32> -> vector<16x1xf32>
    %412 = vector.broadcast %411 : vector<16x1xf32> to vector<16x16xf32>
    %413 = arith.mulf %408, %412 : vector<16x16xf32>
    %414 = arith.truncf %413 : vector<16x16xf32> to vector<16x16xbf16>
    %cst_160 = arith.constant dense<0.000000e+00> : vector<16x32xf32>
    %415 = tpu.matmul %414, %401, %cst_160 {dimension_numbers = #tpu.dot_dimension_numbers<[1], [0], [0], [1], [0, 0, 1, 1], [], []>} : vector<16x16xbf16>, vector<16x32xbf16>, vector<16x32xf32> -> vector<16x32xf32>
    %c16_161 = arith.constant 16 : index
    %c64_162 = arith.constant 64 : index
    %416 = vector.load %arg20[%c16_161, %c64_162] : memref<32x128xf32, #tpu.memory_space<vmem>>, vector<16x32xf32>
    tpu.vector_store %arg20[%c16_161, %c64_162], %415 {strides = array<i32>} : memref<32x128xf32, #tpu.memory_space<vmem>>, vector<16x32xf32>,
    %417 = vector.extract_strided_slice %286 {offsets = [16, 96], sizes = [16, 32], strides = [1, 1]} : vector<32x128xbf16> to vector<16x32xbf16>
    %418 = vector.extract_strided_slice %288 {offsets = [16, 96], sizes = [16, 32], strides = [1, 1]} : vector<32x128xbf16> to vector<16x32xbf16>
    %419 = vector.extract_strided_slice %290 {offsets = [16, 96], sizes = [16, 32], strides = [1, 1]} : vector<32x128xbf16> to vector<16x32xbf16>
    %cst_163 = arith.constant dense<0.000000e+00> : vector<16x16xf32>
    %420 = tpu.matmul %417, %418, %cst_163 {dimension_numbers = #tpu.dot_dimension_numbers<[1], [1], [0], [0], [0, 0, 1, 0], [], []>} : vector<16x32xbf16>, vector<16x32xbf16>, vector<16x16xf32> -> vector<16x16xf32>
    %421 = arith.addf %420, %30 : vector<16x16xf32>
    %cst_164 = arith.constant dense<0xFF800000> : vector<16xf32>
    %422 = vector.multi_reduction <maximumf>, %421, %cst_164 [1] : vector<16x16xf32> to vector<16xf32>
    %423 = vector.shape_cast %422 : vector<16xf32> to vector<16x1xf32>
    %424 = vector.broadcast %423 : vector<16x1xf32> to vector<16x16xf32>
    %425 = arith.subf %421, %424 : vector<16x16xf32>
    %426 = math.exp %425 : vector<16x16xf32>
    %cst_165 = arith.constant dense<0.000000e+00> : vector<16xf32>
    %427 = vector.multi_reduction <add>, %426, %cst_165 [1] : vector<16x16xf32> to vector<16xf32>
    %428 = vector.shape_cast %427 : vector<16xf32> to vector<16x1xf32>
    %429 = tpu.reciprocal %428 {approx = true} : vector<16x1xf32> -> vector<16x1xf32>
    %430 = vector.broadcast %429 : vector<16x1xf32> to vector<16x16xf32>
    %431 = arith.mulf %426, %430 : vector<16x16xf32>
    %432 = arith.truncf %431 : vector<16x16xf32> to vector<16x16xbf16>
    %cst_166 = arith.constant dense<0.000000e+00> : vector<16x32xf32>
    %433 = tpu.matmul %432, %419, %cst_166 {dimension_numbers = #tpu.dot_dimension_numbers<[1], [0], [0], [1], [0, 0, 1, 1], [], []>} : vector<16x16xbf16>, vector<16x32xbf16>, vector<16x32xf32> -> vector<16x32xf32>
    %c16_167 = arith.constant 16 : index
    %c96_168 = arith.constant 96 : index
    %434 = vector.load %arg20[%c16_167, %c96_168] : memref<32x128xf32, #tpu.memory_space<vmem>>, vector<16x32xf32>
    tpu.vector_store %arg20[%c16_167, %c96_168], %433 {strides = array<i32>} : memref<32x128xf32, #tpu.memory_space<vmem>>, vector<16x32xf32>,
    %c0_169 = arith.constant 0 : index
    %c0_170 = arith.constant 0 : index
    %435 = vector.load %arg20[%c0_169, %c0_170] : memref<32x128xf32, #tpu.memory_space<vmem>>, vector<32x128xf32>
    %c1_171 = arith.constant 1 : index
    %c0_172 = arith.constant 0 : index
    %c0_173 = arith.constant 0 : index
    %436 = vector.load %arg7[%c1_171, %c0_172, %c0_173] : memref<2x128x128xbf16, #tpu.memory_space<vmem>>, vector<1x128x128xbf16>
    %437 = vector.shape_cast %436 : vector<1x128x128xbf16> to vector<128x128xbf16>
    %c1_174 = arith.constant 1 : index
    %c0_175 = arith.constant 0 : index
    %c0_176 = arith.constant 0 : index
    %438 = vector.load %arg8[%c1_174, %c0_175, %c0_176] : memref<2x1x128xf32, #tpu.memory_space<vmem>>, vector<1x1x128xf32>
    %439 = vector.shape_cast %438 : vector<1x1x128xf32> to vector<1x128xf32>
    %440 = arith.truncf %435 : vector<32x128xf32> to vector<32x128xbf16>
    %cst_177 = arith.constant dense<0.000000e+00> : vector<32x128xf32>
    %441 = tpu.matmul %440, %437, %cst_177 {dimension_numbers = #tpu.dot_dimension_numbers<[1], [0], [0], [1], [0, 0, 1, 1], [], []>} : vector<32x128xbf16>, vector<128x128xbf16>, vector<32x128xf32> -> vector<32x128xf32>
    %442 = vector.broadcast %439 : vector<1x128xf32> to vector<32x128xf32>
    %443 = arith.addf %441, %442 : vector<32x128xf32>
    %444 = arith.addf %443, %276 : vector<32x128xf32>
    %c1_178 = arith.constant 1 : index
    %c0_179 = arith.constant 0 : index
    %c0_180 = arith.constant 0 : index
    %445 = vector.load %arg9[%c1_178, %c0_179, %c0_180] : memref<2x1x128xf32, #tpu.memory_space<vmem>>, vector<1x1x128xf32>
    %446 = vector.shape_cast %445 : vector<1x1x128xf32> to vector<1x128xf32>
    %c1_181 = arith.constant 1 : index
    %c0_182 = arith.constant 0 : index
    %c0_183 = arith.constant 0 : index
    %447 = vector.load %arg10[%c1_181, %c0_182, %c0_183] : memref<2x1x128xf32, #tpu.memory_space<vmem>>, vector<1x1x128xf32>
    %448 = vector.shape_cast %447 : vector<1x1x128xf32> to vector<1x128xf32>
    %cst_184 = arith.constant dense<0.000000e+00> : vector<32xf32>
    %449 = vector.multi_reduction <add>, %444, %cst_184 [1] : vector<32x128xf32> to vector<32xf32>
    %450 = vector.shape_cast %449 : vector<32xf32> to vector<32x1xf32>
    %cst_185 = arith.constant 1.280000e+02 : f32
    %451 = vector.broadcast %cst_185 : f32 to vector<32x1xf32>
    %452 = arith.divf %450, %451 : vector<32x1xf32>
    %453 = vector.broadcast %452 : vector<32x1xf32> to vector<32x128xf32>
    %454 = arith.subf %444, %453 : vector<32x128xf32>
    %455 = arith.mulf %454, %454 : vector<32x128xf32>
    %cst_186 = arith.constant dense<0.000000e+00> : vector<32xf32>
    %456 = vector.multi_reduction <add>, %455, %cst_186 [1] : vector<32x128xf32> to vector<32xf32>
    %457 = vector.shape_cast %456 : vector<32xf32> to vector<32x1xf32>
    %cst_187 = arith.constant 1.280000e+02 : f32
    %458 = vector.broadcast %cst_187 : f32 to vector<32x1xf32>
    %459 = arith.divf %457, %458 : vector<32x1xf32>
    %cst_188 = arith.constant 9.99999996E-13 : f32
    %460 = vector.broadcast %cst_188 : f32 to vector<32x1xf32>
    %461 = arith.addf %459, %460 : vector<32x1xf32>
    %462 = math.rsqrt %461 : vector<32x1xf32>
    %463 = vector.broadcast %462 : vector<32x1xf32> to vector<32x128xf32>
    %464 = arith.mulf %454, %463 : vector<32x128xf32>
    %465 = vector.broadcast %446 : vector<1x128xf32> to vector<32x128xf32>
    %466 = arith.mulf %464, %465 : vector<32x128xf32>
    %467 = vector.broadcast %448 : vector<1x128xf32> to vector<32x128xf32>
    %468 = arith.addf %466, %467 : vector<32x128xf32>
    %c1_189 = arith.constant 1 : index
    %c0_190 = arith.constant 0 : index
    %c0_191 = arith.constant 0 : index
    %469 = vector.load %arg11[%c1_189, %c0_190, %c0_191] : memref<2x128x512xbf16, #tpu.memory_space<vmem>>, vector<1x128x512xbf16>
    %470 = vector.shape_cast %469 : vector<1x128x512xbf16> to vector<128x512xbf16>
    %c1_192 = arith.constant 1 : index
    %c0_193 = arith.constant 0 : index
    %c0_194 = arith.constant 0 : index
    %471 = vector.load %arg12[%c1_192, %c0_193, %c0_194] : memref<2x1x512xf32, #tpu.memory_space<vmem>>, vector<1x1x512xf32>
    %472 = vector.shape_cast %471 : vector<1x1x512xf32> to vector<1x512xf32>
    %473 = arith.truncf %468 : vector<32x128xf32> to vector<32x128xbf16>
    %cst_195 = arith.constant dense<0.000000e+00> : vector<32x512xf32>
    %474 = tpu.matmul %473, %470, %cst_195 {dimension_numbers = #tpu.dot_dimension_numbers<[1], [0], [0], [1], [0, 0, 1, 1], [], []>} : vector<32x128xbf16>, vector<128x512xbf16>, vector<32x512xf32> -> vector<32x512xf32>
    %475 = vector.broadcast %472 : vector<1x512xf32> to vector<32x512xf32>
    %476 = arith.addf %474, %475 : vector<32x512xf32>
    %477 = arith.mulf %476, %476 : vector<32x512xf32>
    %478 = arith.mulf %476, %477 : vector<32x512xf32>
    %cst_196 = arith.constant 4.471500e-02 : f32
    %479 = vector.broadcast %cst_196 : f32 to vector<32x512xf32>
    %480 = arith.mulf %479, %478 : vector<32x512xf32>
    %481 = arith.addf %476, %480 : vector<32x512xf32>
    %cst_197 = arith.constant 0.797884583 : f32
    %482 = vector.broadcast %cst_197 : f32 to vector<32x512xf32>
    %483 = arith.mulf %482, %481 : vector<32x512xf32>
    %484 = math.tanh %483 : vector<32x512xf32>
    %cst_198 = arith.constant 1.000000e+00 : f32
    %485 = vector.broadcast %cst_198 : f32 to vector<32x512xf32>
    %486 = arith.addf %485, %484 : vector<32x512xf32>
    %cst_199 = arith.constant 5.000000e-01 : f32
    %487 = vector.broadcast %cst_199 : f32 to vector<32x512xf32>
    %488 = arith.mulf %487, %486 : vector<32x512xf32>
    %489 = arith.mulf %476, %488 : vector<32x512xf32>
    %c1_200 = arith.constant 1 : index
    %c0_201 = arith.constant 0 : index
    %c0_202 = arith.constant 0 : index
    %490 = vector.load %arg13[%c1_200, %c0_201, %c0_202] : memref<2x512x128xbf16, #tpu.memory_space<vmem>>, vector<1x512x128xbf16>
    %491 = vector.shape_cast %490 : vector<1x512x128xbf16> to vector<512x128xbf16>
    %c1_203 = arith.constant 1 : index
    %c0_204 = arith.constant 0 : index
    %c0_205 = arith.constant 0 : index
    %492 = vector.load %arg14[%c1_203, %c0_204, %c0_205] : memref<2x1x128xf32, #tpu.memory_space<vmem>>, vector<1x1x128xf32>
    %493 = vector.shape_cast %492 : vector<1x1x128xf32> to vector<1x128xf32>
    %494 = arith.truncf %489 : vector<32x512xf32> to vector<32x512xbf16>
    %cst_206 = arith.constant dense<0.000000e+00> : vector<32x128xf32>
    %495 = tpu.matmul %494, %491, %cst_206 {dimension_numbers = #tpu.dot_dimension_numbers<[1], [0], [0], [1], [0, 0, 1, 1], [], []>} : vector<32x512xbf16>, vector<512x128xbf16>, vector<32x128xf32> -> vector<32x128xf32>
    %496 = vector.broadcast %493 : vector<1x128xf32> to vector<32x128xf32>
    %497 = arith.addf %495, %496 : vector<32x128xf32>
    %498 = arith.addf %497, %468 : vector<32x128xf32>
    %c1_207 = arith.constant 1 : index
    %c0_208 = arith.constant 0 : index
    %c0_209 = arith.constant 0 : index
    %499 = vector.load %arg15[%c1_207, %c0_208, %c0_209] : memref<2x1x128xf32, #tpu.memory_space<vmem>>, vector<1x1x128xf32>
    %500 = vector.shape_cast %499 : vector<1x1x128xf32> to vector<1x128xf32>
    %c1_210 = arith.constant 1 : index
    %c0_211 = arith.constant 0 : index
    %c0_212 = arith.constant 0 : index
    %501 = vector.load %arg16[%c1_210, %c0_211, %c0_212] : memref<2x1x128xf32, #tpu.memory_space<vmem>>, vector<1x1x128xf32>
    %502 = vector.shape_cast %501 : vector<1x1x128xf32> to vector<1x128xf32>
    %cst_213 = arith.constant dense<0.000000e+00> : vector<32xf32>
    %503 = vector.multi_reduction <add>, %498, %cst_213 [1] : vector<32x128xf32> to vector<32xf32>
    %504 = vector.shape_cast %503 : vector<32xf32> to vector<32x1xf32>
    %cst_214 = arith.constant 1.280000e+02 : f32
    %505 = vector.broadcast %cst_214 : f32 to vector<32x1xf32>
    %506 = arith.divf %504, %505 : vector<32x1xf32>
    %507 = vector.broadcast %506 : vector<32x1xf32> to vector<32x128xf32>
    %508 = arith.subf %498, %507 : vector<32x128xf32>
    %509 = arith.mulf %508, %508 : vector<32x128xf32>
    %cst_215 = arith.constant dense<0.000000e+00> : vector<32xf32>
    %510 = vector.multi_reduction <add>, %509, %cst_215 [1] : vector<32x128xf32> to vector<32xf32>
    %511 = vector.shape_cast %510 : vector<32xf32> to vector<32x1xf32>
    %cst_216 = arith.constant 1.280000e+02 : f32
    %512 = vector.broadcast %cst_216 : f32 to vector<32x1xf32>
    %513 = arith.divf %511, %512 : vector<32x1xf32>
    %cst_217 = arith.constant 9.99999996E-13 : f32
    %514 = vector.broadcast %cst_217 : f32 to vector<32x1xf32>
    %515 = arith.addf %513, %514 : vector<32x1xf32>
    %516 = math.rsqrt %515 : vector<32x1xf32>
    %517 = vector.broadcast %516 : vector<32x1xf32> to vector<32x128xf32>
    %518 = arith.mulf %508, %517 : vector<32x128xf32>
    %519 = vector.broadcast %500 : vector<1x128xf32> to vector<32x128xf32>
    %520 = arith.mulf %518, %519 : vector<32x128xf32>
    %521 = vector.broadcast %502 : vector<1x128xf32> to vector<32x128xf32>
    %522 = arith.addf %520, %521 : vector<32x128xf32>
    %c0_218 = arith.constant 0 : index
    %c0_219 = arith.constant 0 : index
    %523 = vector.load %arg17[%c0_218, %c0_219] : memref<128x128xbf16, #tpu.memory_space<vmem>>, vector<128x128xbf16>
    %c0_220 = arith.constant 0 : index
    %c0_221 = arith.constant 0 : index
    %524 = vector.load %arg18[%c0_220, %c0_221] : memref<1x128xf32, #tpu.memory_space<vmem>>, vector<1x128xf32>
    %525 = arith.truncf %522 : vector<32x128xf32> to vector<32x128xbf16>
    %cst_222 = arith.constant dense<0.000000e+00> : vector<32x128xf32>
    %526 = tpu.matmul %525, %523, %cst_222 {dimension_numbers = #tpu.dot_dimension_numbers<[1], [0], [0], [1], [0, 0, 1, 1], [], []>} : vector<32x128xbf16>, vector<128x128xbf16>, vector<32x128xf32> -> vector<32x128xf32>
    %527 = vector.broadcast %524 : vector<1x128xf32> to vector<32x128xf32>
    %528 = arith.addf %526, %527 : vector<32x128xf32>
    %c0_223 = arith.constant 0 : index
    %c0_224 = arith.constant 0 : index
    %529 = vector.load %arg19[%c0_223, %c0_224] : memref<32x128xf32, #tpu.memory_space<vmem>>, vector<32x128xf32>
    tpu.vector_store %arg19[%c0_223, %c0_224], %528 {strides = array<i32>} : memref<32x128xf32, #tpu.memory_space<vmem>>, vector<32x128xf32>,
    return
  }
  func.func @transform_0(%arg0: i32) -> (i32, i32) {
    %c0_i32 = arith.constant 0 : i32
    %c0_i32_0 = arith.constant 0 : i32
    %c0_i32_1 = arith.constant 0 : i32
    return %c0_i32, %c0_i32_0 : i32, i32
  }
  func.func @transform_1(%arg0: i32) -> (i32, i32, i32) {
    %c0_i32 = arith.constant 0 : i32
    %c0_i32_0 = arith.constant 0 : i32
    %c0_i32_1 = arith.constant 0 : i32
    %c0_i32_2 = arith.constant 0 : i32
    return %c0_i32, %c0_i32_0, %c0_i32_1 : i32, i32, i32
  }
  func.func @transform_2(%arg0: i32) -> (i32, i32) {
    %c0_i32 = arith.constant 0 : i32
    %c0_i32_0 = arith.constant 0 : i32
    %c0_i32_1 = arith.constant 0 : i32
    return %c0_i32, %c0_i32_0 : i32, i32
  }
  func.func @transform_3(%arg0: i32) -> (i32, i32) {
    %c0_i32 = arith.constant 0 : i32
    %c0_i32_0 = arith.constant 0 : i32
    %c0_i32_1 = arith.constant 0 : i32
    return %c0_i32, %c0_i32_0 : i32, i32
  }
  func.func @transform_4(%arg0: i32) -> (i32, i32, i32) {
    %c0_i32 = arith.constant 0 : i32
    %c0_i32_0 = arith.constant 0 : i32
    %c0_i32_1 = arith.constant 0 : i32
    %c0_i32_2 = arith.constant 0 : i32
    return %c0_i32, %c0_i32_0, %c0_i32_1 : i32, i32, i32
  }
  func.func @transform_5(%arg0: i32) -> (i32, i32, i32) {
    %c0_i32 = arith.constant 0 : i32
    %c0_i32_0 = arith.constant 0 : i32
    %c0_i32_1 = arith.constant 0 : i32
    %c0_i32_2 = arith.constant 0 : i32
    return %c0_i32, %c0_i32_0, %c0_i32_1 : i32, i32, i32
  }
  func.func @transform_6(%arg0: i32) -> (i32, i32, i32) {
    %c0_i32 = arith.constant 0 : i32
    %c0_i32_0 = arith.constant 0 : i32
    %c0_i32_1 = arith.constant 0 : i32
    %c0_i32_2 = arith.constant 0 : i32
    return %c0_i32, %c0_i32_0, %c0_i32_1 : i32, i32, i32
  }
  func.func @transform_7(%arg0: i32) -> (i32, i32, i32) {
    %c0_i32 = arith.constant 0 : i32
    %c0_i32_0 = arith.constant 0 : i32
    %c0_i32_1 = arith.constant 0 : i32
    %c0_i32_2 = arith.constant 0 : i32
    return %c0_i32, %c0_i32_0, %c0_i32_1 : i32, i32, i32
  }
  func.func @transform_8(%arg0: i32) -> (i32, i32, i32) {
    %c0_i32 = arith.constant 0 : i32
    %c0_i32_0 = arith.constant 0 : i32
    %c0_i32_1 = arith.constant 0 : i32
    %c0_i32_2 = arith.constant 0 : i32
    return %c0_i32, %c0_i32_0, %c0_i32_1 : i32, i32, i32
  }
  func.func @transform_9(%arg0: i32) -> (i32, i32, i32) {
    %c0_i32 = arith.constant 0 : i32
    %c0_i32_0 = arith.constant 0 : i32
    %c0_i32_1 = arith.constant 0 : i32
    %c0_i32_2 = arith.constant 0 : i32
    return %c0_i32, %c0_i32_0, %c0_i32_1 : i32, i32, i32
  }
  func.func @transform_10(%arg0: i32) -> (i32, i32, i32) {
    %c0_i32 = arith.constant 0 : i32
    %c0_i32_0 = arith.constant 0 : i32
    %c0_i32_1 = arith.constant 0 : i32
    %c0_i32_2 = arith.constant 0 : i32
    return %c0_i32, %c0_i32_0, %c0_i32_1 : i32, i32, i32
  }
  func.func @transform_11(%arg0: i32) -> (i32, i32, i32) {
    %c0_i32 = arith.constant 0 : i32
    %c0_i32_0 = arith.constant 0 : i32
    %c0_i32_1 = arith.constant 0 : i32
    %c0_i32_2 = arith.constant 0 : i32
    return %c0_i32, %c0_i32_0, %c0_i32_1 : i32, i32, i32
  }
  func.func @transform_12(%arg0: i32) -> (i32, i32, i32) {
    %c0_i32 = arith.constant 0 : i32
    %c0_i32_0 = arith.constant 0 : i32
    %c0_i32_1 = arith.constant 0 : i32
    %c0_i32_2 = arith.constant 0 : i32
    return %c0_i32, %c0_i32_0, %c0_i32_1 : i32, i32, i32
  }
  func.func @transform_13(%arg0: i32) -> (i32, i32, i32) {
    %c0_i32 = arith.constant 0 : i32
    %c0_i32_0 = arith.constant 0 : i32
    %c0_i32_1 = arith.constant 0 : i32
    %c0_i32_2 = arith.constant 0 : i32
    return %c0_i32, %c0_i32_0, %c0_i32_1 : i32, i32, i32
  }
  func.func @transform_14(%arg0: i32) -> (i32, i32, i32) {
    %c0_i32 = arith.constant 0 : i32
    %c0_i32_0 = arith.constant 0 : i32
    %c0_i32_1 = arith.constant 0 : i32
    %c0_i32_2 = arith.constant 0 : i32
    return %c0_i32, %c0_i32_0, %c0_i32_1 : i32, i32, i32
  }
  func.func @transform_15(%arg0: i32) -> (i32, i32, i32) {
    %c0_i32 = arith.constant 0 : i32
    %c0_i32_0 = arith.constant 0 : i32
    %c0_i32_1 = arith.constant 0 : i32
    %c0_i32_2 = arith.constant 0 : i32
    return %c0_i32, %c0_i32_0, %c0_i32_1 : i32, i32, i32
  }
  func.func @transform_16(%arg0: i32) -> (i32, i32) {
    %c0_i32 = arith.constant 0 : i32
    %c0_i32_0 = arith.constant 0 : i32
    %c0_i32_1 = arith.constant 0 : i32
    return %c0_i32, %c0_i32_0 : i32, i32
  }
  func.func @transform_17(%arg0: i32) -> (i32, i32) {
    %c0_i32 = arith.constant 0 : i32
    %c0_i32_0 = arith.constant 0 : i32
    %c0_i32_1 = arith.constant 0 : i32
    return %c0_i32, %c0_i32_0 : i32, i32
  }
  func.func @transform_18(%arg0: i32) -> (i32, i32) {
    %c0_i32 = arith.constant 0 : i32
    %c0_i32_0 = arith.constant 0 : i32
    %c0_i32_1 = arith.constant 0 : i32
    return %c0_i32, %c0_i32_0 : i32, i32
  }
}

</mosaic_0001>

<llo_original>
// kernel: forward_logits.1
$region0: #{forward_logits.1}
  #allocation0 [shape = 'u32[]', space=smem, size = 0x4, offset = 0x4, fixed_abs, tag = 'smem constant byte address 0x4 - core index']
  #allocation1 [shape = 'u32[144,128]{1,0:T(1,128)}', space=vmem, size = 0x12000, scoped, tag = 'internal scratch']
  #allocation2 [shape = 'f32[32,128]{1,0:T(8,128)}', space=vmem, size = 0x4000, scoped, tag = 'scratch operand']
  %s0 = inlined_call_operand.vmem [shape: f32[32,128], index: 0, kind: input, shape index: {}]
  %s1 = inlined_call_operand.vmem [shape: f32[2,1,16], index: 1, kind: input, shape index: {}]
  %s2 = inlined_call_operand.vmem [shape: f32[1,128], index: 2, kind: input, shape index: {}]
  %s3 = inlined_call_operand.vmem [shape: f32[1,128], index: 3, kind: input, shape index: {}]
  %s4 = inlined_call_operand.vmem [shape: bf16[2,128,384], index: 4, kind: input, shape index: {}]
  %s5 = inlined_call_operand.vmem [shape: f32[2,1,384], index: 5, kind: input, shape index: {}]
  %s6 = inlined_call_operand.vmem [shape: bf16[2,128,128], index: 6, kind: input, shape index: {}]
  %s7 = inlined_call_operand.vmem [shape: f32[2,1,128], index: 7, kind: input, shape index: {}]
  %s8 = inlined_call_operand.vmem [shape: f32[2,1,128], index: 8, kind: input, shape index: {}]
  %s9 = inlined_call_operand.vmem [shape: f32[2,1,128], index: 9, kind: input, shape index: {}]
  %s10 = inlined_call_operand.hbm [shape: bf16[2,128,512], index: 10, kind: input, shape index: {}]
  %s11 = inlined_call_operand.vmem [shape: f32[2,1,512], index: 11, kind: input, shape index: {}]
  %s12 = inlined_call_operand.hbm [shape: bf16[2,512,128], index: 12, kind: input, shape index: {}]
  %s13 = inlined_call_operand.vmem [shape: f32[2,1,128], index: 13, kind: input, shape index: {}]
  %s14 = inlined_call_operand.vmem [shape: f32[2,1,128], index: 14, kind: input, shape index: {}]
  %s15 = inlined_call_operand.vmem [shape: f32[2,1,128], index: 15, kind: input, shape index: {}]
  %s16 = inlined_call_operand.vmem [shape: bf16[128,128], index: 16, kind: input, shape index: {}]
  %s17 = inlined_call_operand.vmem [shape: f32[1,128], index: 17, kind: input, shape index: {}]
  %s18 = inlined_call_operand.vmem [shape: f32[32,128], index: 18, kind: output, shape index: {}]
  %s19 = sld [smem:[#allocation0]]
  $region90: #{forward_logits.1} parent=0
    _
  %s21 = ssub.s32 1, %s19
  %s22 = scalar_select 0, %s21, %s19
  $region1: #{forward_logits.1} parent=0
    #allocation3 [shape = 'u8[262144]{0}', space=vmem, size = 0x40000, scoped, tag = 'input window, operand 10, single buffered']
    #allocation4 [shape = 's32[1]{0}', space=sflag, size = 0x4, scoped, tag = 'scoped memory for forward_logits.1']
    #allocation5 [shape = 'u8[262144]{0}', space=vmem, size = 0x40000, scoped, tag = 'input window, operand 12, single buffered']
    #allocation6 [shape = 's32[1]{0}', space=sflag, size = 0x4, scoped, tag = 'scoped memory for forward_logits.1']
    %23 = vsyncpa [#allocation4], 0
    %24 = vsyncpa [#allocation6], 0
    // Predicated region
    $region2: #{forward_logits.1} parent=1 // pred_check
      _
    $region3: #{forward_logits.1} parent=1 // pred_check_branch
      %26 = sbr.rel (0) target = $region5
    $region4: #{forward_logits.1} parent=1 // pred_region
      _
    $region5: #{forward_logits.1} parent=1 // pred_fallthru
      _
    // Predicated region
    $region6: #{forward_logits.1} parent=1 // pred_check
      _
    $region7: #{forward_logits.1} parent=1 // pred_check_branch
      %28 = sbr.rel (0) target = $region9
    $region8: #{forward_logits.1} parent=1 // pred_region
      _
    $region9: #{forward_logits.1} parent=1 // pred_fallthru
      _
    // Predicated region
    $region10: #{forward_logits.1} parent=1 // pred_check
      _
    $region11: #{forward_logits.1} parent=1 // pred_check_branch
      %30 = sbr.rel (0) target = $region13
    $region12: #{forward_logits.1} parent=1 // pred_region
      _
    $region13: #{forward_logits.1} parent=1 // pred_fallthru
      _
    // Predicated region
    $region14: #{forward_logits.1} parent=1 // pred_check
      _
    $region15: #{forward_logits.1} parent=1 // pred_check_branch
      %32 = sbr.rel (0) target = $region17
    $region16: #{forward_logits.1} parent=1 // pred_region
      _
    $region17: #{forward_logits.1} parent=1 // pred_fallthru
      _
    // Predicated region
    $region18: #{forward_logits.1} parent=1 // pred_check
      _
    $region19: #{forward_logits.1} parent=1 // pred_check_branch
      %34 = sbr.rel (0) target = $region21
    $region20: #{forward_logits.1} parent=1 // pred_region
      _
    $region21: #{forward_logits.1} parent=1 // pred_fallthru
      _
    // Predicated region
    $region22: #{forward_logits.1} parent=1 // pred_check
      _
    $region23: #{forward_logits.1} parent=1 // pred_check_branch
      %36 = sbr.rel (0) target = $region25
    $region24: #{forward_logits.1} parent=1 // pred_region
      _
    $region25: #{forward_logits.1} parent=1 // pred_fallthru
      _
    // Predicated region
    $region26: #{forward_logits.1} parent=1 // pred_check
      _
    $region27: #{forward_logits.1} parent=1 // pred_check_branch
      %38 = sbr.rel (0) target = $region29
    $region28: #{forward_logits.1} parent=1 // pred_region
      _
    $region29: #{forward_logits.1} parent=1 // pred_fallthru
      _
    // Predicated region
    $region30: #{forward_logits.1} parent=1 // pred_check
      _
    $region31: #{forward_logits.1} parent=1 // pred_check_branch
      %40 = sbr.rel (0) target = $region33
    $region32: #{forward_logits.1} parent=1 // pred_region
      _
    $region33: #{forward_logits.1} parent=1 // pred_fallthru
      _
    // Predicated region
    $region34: #{forward_logits.1} parent=1 // pred_check
      _
    $region35: #{forward_logits.1} parent=1 // pred_check_branch
      %42 = sbr.rel (0) target = $region37
    $region36: #{forward_logits.1} parent=1 // pred_region
      _
    $region37: #{forward_logits.1} parent=1 // pred_fallthru
      _
    // Predicated region
    $region38: #{forward_logits.1} parent=1 // pred_check
      _
    $region39: #{forward_logits.1} parent=1 // pred_check_branch
      %44 = sbr.rel (0) target = $region41
    $region40: #{forward_logits.1} parent=1 // pred_region
      _
    $region41: #{forward_logits.1} parent=1 // pred_fallthru
      _
    // Predicated region
    $region42: #{forward_logits.1} parent=1 // pred_check
      _
    $region43: #{forward_logits.1} parent=1 // pred_check_branch
      %46 = sbr.rel (0) target = $region45
    $region44: #{forward_logits.1} parent=1 // pred_region
      %s48 = ssub.s32 8192, 8192
      %49 = vsyncadd [#allocation4], %s48
      %s50 = sshll.u32 [#allocation3], 4
      %s51 = int_to_ptr.vmem [resolvable:$true] %s50
      %56 = dma.hbm_to_vmem [thread:$0]  %s10, 8192, %s51, [#allocation4], 256, 256, 16
    $region45: #{forward_logits.1} parent=1 // pred_fallthru
      _
    // Predicated region
    $region46: #{forward_logits.1} parent=1 // pred_check
      _
    $region47: #{forward_logits.1} parent=1 // pred_check_branch
      %58 = sbr.rel (0) target = $region49
    $region48: #{forward_logits.1} parent=1 // pred_region
      _
    $region49: #{forward_logits.1} parent=1 // pred_fallthru
      _
    // Predicated region
    $region50: #{forward_logits.1} parent=1 // pred_check
      _
    $region51: #{forward_logits.1} parent=1 // pred_check_branch
      %60 = sbr.rel (0) target = $region53
    $region52: #{forward_logits.1} parent=1 // pred_region
      %s62 = ssub.s32 8192, 8192
      %63 = vsyncadd [#allocation6], %s62
      %s64 = sshll.u32 [#allocation5], 4
      %s65 = int_to_ptr.vmem [resolvable:$true] %s64
      %70 = dma.hbm_to_vmem [thread:$0]  %s12, 8192, %s65, [#allocation6], 64, 64, 4
    $region53: #{forward_logits.1} parent=1 // pred_fallthru
      _
    // Predicated region
    $region54: #{forward_logits.1} parent=1 // pred_check
      _
    $region55: #{forward_logits.1} parent=1 // pred_check_branch
      %72 = sbr.rel (0) target = $region57
    $region56: #{forward_logits.1} parent=1 // pred_region
      _
    $region57: #{forward_logits.1} parent=1 // pred_fallthru
      _
    // Predicated region
    $region58: #{forward_logits.1} parent=1 // pred_check
      _
    $region59: #{forward_logits.1} parent=1 // pred_check_branch
      %74 = sbr.rel (0) target = $region61
    $region60: #{forward_logits.1} parent=1 // pred_region
      _
    $region61: #{forward_logits.1} parent=1 // pred_fallthru
      _
    // Predicated region
    $region62: #{forward_logits.1} parent=1 // pred_check
      _
    $region63: #{forward_logits.1} parent=1 // pred_check_branch
      %76 = sbr.rel (0) target = $region65
    $region64: #{forward_logits.1} parent=1 // pred_region
      _
    $region65: #{forward_logits.1} parent=1 // pred_fallthru
      _
    // Predicated region
    $region66: #{forward_logits.1} parent=1 // pred_check
      _
    $region67: #{forward_logits.1} parent=1 // pred_check_branch
      %78 = sbr.rel (0) target = $region69
    $region68: #{forward_logits.1} parent=1 // pred_region
      _
    $region69: #{forward_logits.1} parent=1 // pred_fallthru
      _
    // Predicated region
    $region70: #{forward_logits.1} parent=1 // pred_check
      _
    $region71: #{forward_logits.1} parent=1 // pred_check_branch
      %80 = sbr.rel (0) target = $region73
    $region72: #{forward_logits.1} parent=1 // pred_region
      _
    $region73: #{forward_logits.1} parent=1 // pred_fallthru
      _
    // Predicated region
    $region74: #{forward_logits.1} parent=1 // pred_check
      _
    $region75: #{forward_logits.1} parent=1 // pred_check_branch
      %82 = sbr.rel (0) target = $region77
    $region76: #{forward_logits.1} parent=1 // pred_region
      %83 = dma.done [#allocation4], 8192
    $region77: #{forward_logits.1} parent=1 // pred_fallthru
      _
    // Predicated region
    $region78: #{forward_logits.1} parent=1 // pred_check
      _
    $region79: #{forward_logits.1} parent=1 // pred_check_branch
      %85 = sbr.rel (0) target = $region81
    $region80: #{forward_logits.1} parent=1 // pred_region
      %86 = dma.done [#allocation6], 8192
    $region81: #{forward_logits.1} parent=1 // pred_fallthru
      _
    %v88 = vld [vmem:[%s0] sm:$0xff]
    %v89 = vld [vmem:[%s0 + $0x8] sm:$0xff]
    %v90 = vld [vmem:[%s0 + $0x10] sm:$0xff]
    %v91 = vld [vmem:[%s0 + $0x18] sm:$0xff]
    %v92 = vld [vmem:[%s2] sm:$0x1]
    %v93 = vld [vmem:[%s3] sm:$0x1]
    %94 = vadd.xlane.f32.xlu0 %v88
    %v95 = vpop.xlane.xlu0 %94
    %96 = vadd.xlane.f32.xlu0 %v89
    %v97 = vpop.xlane.xlu0 %96
    %98 = vadd.xlane.f32.xlu0 %v90
    %v99 = vpop.xlane.xlu0 %98
    %100 = vadd.xlane.f32.xlu0 %v91
    %v101 = vpop.xlane.xlu0 %100
    %v102 = vrcp.pop 128.0
    %v103 = vmul.f32 %v95, %v102
    %v104 = vmul.f32 %v97, %v102
    %v105 = vmul.f32 %v99, %v102
    %v106 = vmul.f32 %v101, %v102
    %v107 = vsub.f32 %v88, %v103
    %v108 = vsub.f32 %v89, %v104
    %v109 = vsub.f32 %v90, %v105
    %v110 = vsub.f32 %v91, %v106
    %v111 = vmul.f32 %v107, %v107
    %v112 = vmul.f32 %v108, %v108
    %v113 = vmul.f32 %v109, %v109
    %v114 = vmul.f32 %v110, %v110
    %115 = vadd.xlane.f32.xlu0 %v111
    %v116 = vpop.xlane.xlu0 %115
    %117 = vadd.xlane.f32.xlu0 %v112
    %v118 = vpop.xlane.xlu0 %117
    %119 = vadd.xlane.f32.xlu0 %v113
    %v120 = vpop.xlane.xlu0 %119
    %121 = vadd.xlane.f32.xlu0 %v114
    %v122 = vpop.xlane.xlu0 %121
    %v123 = vmul.f32 %v116, %v102
    %v124 = vmul.f32 %v118, %v102
    %v125 = vmul.f32 %v120, %v102
    %v126 = vmul.f32 %v122, %v102
    %v127 = vadd.f32 %v123, 1e-12
    %v128 = vadd.f32 %v124, 1e-12
    %v129 = vadd.f32 %v125, 1e-12
    %v130 = vadd.f32 %v126, 1e-12
    %v131 = vrsqrt.pop %v127
    %v132 = vrsqrt.pop %v128
    %v133 = vrsqrt.pop %v129
    %v134 = vrsqrt.pop %v130
    %v135 = vmul.f32 %v107, %v131
    %v136 = vmul.f32 %v108, %v132
    %v137 = vmul.f32 %v109, %v133
    %v138 = vmul.f32 %v110, %v134
    %v140 = vlaneseq
    %v141 = vshrl.u32 %v140, 7
    %v142 = vsub.s32 0, %v141
    %v143 = vrot.slane %v92, %v142
    %v145 = vmul.f32 %v135, %v143
    %v146 = vmul.f32 %v136, %v143
    %v147 = vmul.f32 %v137, %v143
    %v148 = vmul.f32 %v138, %v143
    %v150 = vlaneseq
    %v151 = vshrl.u32 %v150, 7
    %v152 = vsub.s32 0, %v151
    %v153 = vrot.slane %v93, %v152
    %v155 = vadd.f32 %v145, %v153
    %v156 = vadd.f32 %v146, %v153
    %v157 = vadd.f32 %v147, %v153
    %v158 = vadd.f32 %v148, %v153
    %v159 = vld [vmem:[%s1] sm:$0x1]
    %v161 = vlaneseq
    %v162 = vshrl.u32 %v161, 7
    %v163 = vsub.s32 0, %v162
    %v164 = vrot.slane %v159, %v163
    %s166 = scalar_lea.vmem %s1, 1
    %v167 = vld [vmem:[%s166] sm:$0x1]
    %v169 = vlaneseq
    %v170 = vshrl.u32 %v169, 7
    %v171 = vsub.s32 0, %v170
    %v172 = vrot.slane %v167, %v171
    %v174 = vld [vmem:[%s4] sm:$0xff]
    %v175 = vld [vmem:[%s4 + $0x8] sm:$0xf]
    %v176 = vld [vmem:[%s4 + $0xc] sm:$0xff]
    %v177 = vld [vmem:[%s4 + $0x14] sm:$0xf]
    %v178 = vld [vmem:[%s4 + $0x18] sm:$0xff]
    %v179 = vld [vmem:[%s4 + $0x20] sm:$0xf]
    %v180 = vld [vmem:[%s4 + $0x24] sm:$0xff]
    %v181 = vld [vmem:[%s4 + $0x2c] sm:$0xf]
    %v182 = vld [vmem:[%s4 + $0x30] sm:$0xff]
    %v183 = vld [vmem:[%s4 + $0x38] sm:$0xf]
    %v184 = vld [vmem:[%s4 + $0x3c] sm:$0xff]
    %v185 = vld [vmem:[%s4 + $0x44] sm:$0xf]
    %v186 = vld [vmem:[%s4 + $0x48] sm:$0xff]
    %v187 = vld [vmem:[%s4 + $0x50] sm:$0xf]
    %v188 = vld [vmem:[%s4 + $0x54] sm:$0xff]
    %v189 = vld [vmem:[%s4 + $0x5c] sm:$0xf]
    %v190 = vld [vmem:[%s4 + $0x60] sm:$0xff]
    %v191 = vld [vmem:[%s4 + $0x68] sm:$0xf]
    %v192 = vld [vmem:[%s4 + $0x6c] sm:$0xff]
    %v193 = vld [vmem:[%s4 + $0x74] sm:$0xf]
    %v194 = vld [vmem:[%s4 + $0x78] sm:$0xff]
    %v195 = vld [vmem:[%s4 + $0x80] sm:$0xf]
    %v196 = vld [vmem:[%s4 + $0x84] sm:$0xff]
    %v197 = vld [vmem:[%s4 + $0x8c] sm:$0xf]
    %v198 = vld [vmem:[%s4 + $0x90] sm:$0xff]
    %v199 = vld [vmem:[%s4 + $0x98] sm:$0xf]
    %v200 = vld [vmem:[%s4 + $0x9c] sm:$0xff]
    %v201 = vld [vmem:[%s4 + $0xa4] sm:$0xf]
    %v202 = vld [vmem:[%s4 + $0xa8] sm:$0xff]
    %v203 = vld [vmem:[%s4 + $0xb0] sm:$0xf]
    %v204 = vld [vmem:[%s4 + $0xb4] sm:$0xff]
    %v205 = vld [vmem:[%s4 + $0xbc] sm:$0xf]
    %v206 = vld [vmem:[%s5] sm:$0x7]
    %v207 = vpack.c.bf16 %v156, %v155
    %v208 = vpack.c.bf16 %v158, %v157
    %v210 = vlaneseq
    %v211 = vshrl.u32 %v210, 7
    %v212 = vsub.s32 0, %v211
    %v213 = vrot.slane %v206, %v212
    %v214 = vlaneseq
    %v215 = vshrl.u32 %v214, 7
    %v216 = vsub.s32 1, %v215
    %v217 = vrot.slane %v206, %v216
    %v218 = vlaneseq
    %v219 = vshrl.u32 %v218, 7
    %v220 = vsub.s32 2, %v219
    %v221 = vrot.slane %v206, %v220
    %v257 = vunpack.c.l.b16 %v174
    %v258 = vunpack.c.h.b16 %v174
    %v259 = vunpack.c.l.b16 %v175
    %v260 = vunpack.c.l.b16 %v176
    %v261 = vunpack.c.h.b16 %v176
    %v262 = vunpack.c.l.b16 %v177
    %v263 = vunpack.c.l.b16 %v178
    %v264 = vunpack.c.h.b16 %v178
    %v265 = vunpack.c.l.b16 %v179
    %v266 = vunpack.c.l.b16 %v180
    %v267 = vunpack.c.h.b16 %v180
    %v268 = vunpack.c.l.b16 %v181
    %v269 = vunpack.c.l.b16 %v182
    %v270 = vunpack.c.h.b16 %v182
    %v271 = vunpack.c.l.b16 %v183
    %v272 = vunpack.c.l.b16 %v184
    %v273 = vunpack.c.h.b16 %v184
    %v274 = vunpack.c.l.b16 %v185
    %v275 = vunpack.c.l.b16 %v186
    %v276 = vunpack.c.h.b16 %v186
    %v277 = vunpack.c.l.b16 %v187
    %v278 = vunpack.c.l.b16 %v188
    %v279 = vunpack.c.h.b16 %v188
    %v280 = vunpack.c.l.b16 %v189
    %v281 = vunpack.c.l.b16 %v190
    %v282 = vunpack.c.h.b16 %v190
    %v283 = vunpack.c.l.b16 %v191
    %v284 = vunpack.c.l.b16 %v192
    %v285 = vunpack.c.h.b16 %v192
    %v286 = vunpack.c.l.b16 %v193
    %v287 = vunpack.c.l.b16 %v194
    %v288 = vunpack.c.h.b16 %v194
    %v289 = vunpack.c.l.b16 %v195
    %v290 = vunpack.c.l.b16 %v196
    %v291 = vunpack.c.h.b16 %v196
    %v292 = vunpack.c.l.b16 %v197
    %v293 = vunpack.c.l.b16 %v198
    %v294 = vunpack.c.h.b16 %v198
    %v295 = vunpack.c.l.b16 %v199
    %v296 = vunpack.c.l.b16 %v200
    %v297 = vunpack.c.h.b16 %v200
    %v298 = vunpack.c.l.b16 %v201
    %v299 = vunpack.c.l.b16 %v202
    %v300 = vunpack.c.h.b16 %v202
    %v301 = vunpack.c.l.b16 %v203
    %v302 = vunpack.c.l.b16 %v204
    %v303 = vunpack.c.h.b16 %v204
    %v304 = vunpack.c.l.b16 %v205
    %v305 = vpack.c.b16 %v260, %v257
    %v306 = vpack.c.b16 %v261, %v258
    %v307 = vpack.c.b16 %v262, %v259
    %v308 = vpack.c.b16 %v266, %v263
    %v309 = vpack.c.b16 %v267, %v264
    %v310 = vpack.c.b16 %v268, %v265
    %v311 = vpack.c.b16 %v272, %v269
    %v312 = vpack.c.b16 %v273, %v270
    %v313 = vpack.c.b16 %v274, %v271
    %v314 = vpack.c.b16 %v278, %v275
    %v315 = vpack.c.b16 %v279, %v276
    %v316 = vpack.c.b16 %v280, %v277
    %v317 = vpack.c.b16 %v284, %v281
    %v318 = vpack.c.b16 %v285, %v282
    %v319 = vpack.c.b16 %v286, %v283
    %v320 = vpack.c.b16 %v290, %v287
    %v321 = vpack.c.b16 %v291, %v288
    %v322 = vpack.c.b16 %v292, %v289
    %v323 = vpack.c.b16 %v296, %v293
    %v324 = vpack.c.b16 %v297, %v294
    %v325 = vpack.c.b16 %v298, %v295
    %v326 = vpack.c.b16 %v302, %v299
    %v327 = vpack.c.b16 %v303, %v300
    %v328 = vpack.c.b16 %v304, %v301
    %353 = vmatprep.subr.bf16.mxu0 %v327
    %354 = vmatpush1.bf16.msra.mxu0 %v326
    %355 = vmatprep.subr.bf16.mxu0 %v324
    %356 = vmatpush1.bf16.msra.mxu0 %v323
    %357 = vmatprep.subr.bf16.mxu0 %v321
    %358 = vmatpush1.bf16.msra.mxu0 %v320
    %359 = vmatprep.subr.bf16.mxu0 %v318
    %360 = vmatpush1.bf16.msra.mxu0 %v317
    %361 = vmatprep.subr.bf16.mxu0 %v315
    %362 = vmatpush1.bf16.msra.mxu0 %v314
    %363 = vmatprep.subr.bf16.mxu0 %v312
    %364 = vmatpush1.bf16.msra.mxu0 %v311
    %365 = vmatprep.subr.bf16.mxu0 %v309
    %366 = vmatpush1.bf16.msra.mxu0 %v308
    %367 = vmatprep.subr.bf16.mxu0 %v306
    %368 = vmatpush1.bf16.msra.mxu0 %v305
    %369 = vmatprep.subr.bf16.mxu0 0
    %370 = vmatpush2.bf16.msra.mxu0 0
    %371 = vmatprep.subr.bf16.mxu0 0
    %372 = vmatpush2.bf16.msra.mxu0 0
    %373 = vmatprep.subr.bf16.mxu0 0
    %374 = vmatpush2.bf16.msra.mxu0 0
    %375 = vmatprep.subr.bf16.mxu0 0
    %376 = vmatpush2.bf16.msra.mxu0 0
    %377 = vmatprep.subr.bf16.mxu0 0
    %378 = vmatpush2.bf16.msra.mxu0 0
    %379 = vmatprep.subr.bf16.mxu0 0
    %380 = vmatpush2.bf16.msra.mxu0 0
    %381 = vmatprep.subr.bf16.mxu0 0
    %382 = vmatpush2.bf16.msra.mxu0 0
    %383 = vmatprep.subr.bf16.mxu0 0
    %384 = vmatpush2.bf16.msra.mxu0 0
    %385 = vmatprep.mubr.bf16.mxu0 0
    %386 = vmatmul.mubr.bf16.gmra.mxu0 %v207
    %v387 = vpop.f32.mrf.mxu0
    %v388 = vadd.f32 %v213, %v387
    %v389 = vpop.f32.mrf.mxu0
    %v390 = vadd.f32 %v217, %v389
    %v391 = vpop.f32.mrf.mxu0
    %v392 = vadd.f32 %v213, %v391
    %v393 = vpop.f32.mrf.mxu0
    %v394 = vadd.f32 %v217, %v393
    %395 = vmatprep.mubr.bf16.mxu0 0
    %396 = vmatmul.mubr.bf16.gmra.mxu0 %v208
    %v397 = vpop.f32.mrf.mxu0
    %v398 = vadd.f32 %v213, %v397
    %v399 = vpop.f32.mrf.mxu0
    %v400 = vadd.f32 %v217, %v399
    %v401 = vpop.f32.mrf.mxu0
    %v402 = vadd.f32 %v213, %v401
    %v403 = vpop.f32.mrf.mxu0
    %v404 = vadd.f32 %v217, %v403
    %405 = vdwg.mxu0
    %406 = vmatprep.subr.bf16.mxu0 0
    %407 = vmatpush1.bf16.msra.mxu0 %v328
    %408 = vmatprep.subr.bf16.mxu0 0
    %409 = vmatpush1.bf16.msra.mxu0 %v325
    %410 = vmatprep.subr.bf16.mxu0 0
    %411 = vmatpush1.bf16.msra.mxu0 %v322
    %412 = vmatprep.subr.bf16.mxu0 0
    %413 = vmatpush1.bf16.msra.mxu0 %v319
    %414 = vmatprep.subr.bf16.mxu0 0
    %415 = vmatpush1.bf16.msra.mxu0 %v316
    %416 = vmatprep.subr.bf16.mxu0 0
    %417 = vmatpush1.bf16.msra.mxu0 %v313
    %418 = vmatprep.subr.bf16.mxu0 0
    %419 = vmatpush1.bf16.msra.mxu0 %v310
    %420 = vmatprep.subr.bf16.mxu0 0
    %421 = vmatpush1.bf16.msra.mxu0 %v307
    %422 = vmatprep.subr.bf16.mxu0 0
    %423 = vmatpush2.bf16.msra.mxu0 0
    %424 = vmatprep.subr.bf16.mxu0 0
    %425 = vmatpush2.bf16.msra.mxu0 0
    %426 = vmatprep.subr.bf16.mxu0 0
    %427 = vmatpush2.bf16.msra.mxu0 0
    %428 = vmatprep.subr.bf16.mxu0 0
    %429 = vmatpush2.bf16.msra.mxu0 0
    %430 = vmatprep.subr.bf16.mxu0 0
    %431 = vmatpush2.bf16.msra.mxu0 0
    %432 = vmatprep.subr.bf16.mxu0 0
    %433 = vmatpush2.bf16.msra.mxu0 0
    %434 = vmatprep.subr.bf16.mxu0 0
    %435 = vmatpush2.bf16.msra.mxu0 0
    %436 = vmatprep.subr.bf16.mxu0 0
    %437 = vmatpush2.bf16.msra.mxu0 0
    %438 = vmatprep.mubr.bf16.mxu0 0
    %439 = vmatmul.mubr.bf16.gmra.mxu0 %v207
    %v440 = vpop.f32.mrf.mxu0
    %v441 = vadd.f32 %v221, %v440
    %v442 = vpop.f32.mrf.mxu0
    %v443 = vpop.f32.mrf.mxu0
    %v444 = vadd.f32 %v221, %v443
    %v445 = vpop.f32.mrf.mxu0
    %446 = vmatprep.mubr.bf16.mxu0 0
    %447 = vmatmul.mubr.bf16.gmra.mxu0 %v208
    %v448 = vpop.f32.mrf.mxu0
    %v449 = vadd.f32 %v221, %v448
    %v450 = vpop.f32.mrf.mxu0
    %v451 = vpop.f32.mrf.mxu0
    %v452 = vadd.f32 %v221, %v451
    %v453 = vpop.f32.mrf.mxu0
    %454 = vdwg.mxu0
    %v455 = vpack.c.bf16 %v392, %v388
    %v456 = vpack.c.bf16 %v402, %v398
    %v457 = vpack.c.bf16 %v394, %v390
    %v458 = vpack.c.bf16 %v404, %v400
    %v459 = vpack.c.bf16 %v444, %v441
    %v460 = vpack.c.bf16 %v452, %v449
    %vm461 = vcmask 261120
    %v463 = vsel %vm461, %v455, 0
    %v466 = vsel %vm461, %v457, 0
    %468 = vmatprep.subr.bf16.mxu0 0
    %469 = vmatpush1.bf16.xpose.msra.mxu0 0
    %470 = vmatprep.subr.bf16.mxu0 0
    %471 = vmatpush1.bf16.xpose.msra.mxu0 0
    %472 = vmatprep.subr.bf16.mxu0 0
    %473 = vmatpush1.bf16.xpose.msra.mxu0 0
    %474 = vmatprep.subr.bf16.mxu0 0
    %475 = vmatpush1.bf16.xpose.msra.mxu0 0
    %476 = vmatprep.subr.bf16.mxu0 0
    %477 = vmatpush1.bf16.xpose.msra.mxu0 0
    %478 = vmatprep.subr.bf16.mxu0 0
    %479 = vmatpush1.bf16.xpose.msra.mxu0 0
    %480 = vmatprep.subr.bf16.mxu0 0
    %481 = vmatpush1.bf16.xpose.msra.mxu0 0
    %482 = vmatprep.subr.bf16.mxu0 0
    %483 = vmatpush1.bf16.xpose.msra.mxu0 %v466
    %484 = vmatprep.subr.bf16.mxu0 0
    %485 = vmatpush2.bf16.xpose.msra.mxu0 0
    %486 = vmatprep.subr.bf16.mxu0 0
    %487 = vmatpush2.bf16.xpose.msra.mxu0 0
    %488 = vmatprep.subr.bf16.mxu0 0
    %489 = vmatpush2.bf16.xpose.msra.mxu0 0
    %490 = vmatprep.subr.bf16.mxu0 0
    %491 = vmatpush2.bf16.xpose.msra.mxu0 0
    %492 = vmatprep.subr.bf16.mxu0 0
    %493 = vmatpush2.bf16.xpose.msra.mxu0 0
    %494 = vmatprep.subr.bf16.mxu0 0
    %495 = vmatpush2.bf16.xpose.msra.mxu0 0
    %496 = vmatprep.subr.bf16.mxu0 0
    %497 = vmatpush2.bf16.xpose.msra.mxu0 0
    %498 = vmatprep.subr.bf16.mxu0 0
    %499 = vmatpush2.bf16.xpose.msra.mxu0 0
    %500 = vmatprep.mubr.bf16.mxu0 0
    %501 = vmatmul.mubr.bf16.gmra.mxu0 %v463
    %v502 = vpop.f32.mrf.mxu0
    %v503 = vadd.f32 %v164, %v502
    %v504 = vpop.f32.mrf.mxu0
    %v505 = vpop.f32.mrf.mxu0
    %v506 = vadd.f32 %v164, %v505
    %v507 = vpop.f32.mrf.mxu0
    %508 = vdwg.mxu0
    %vm509 = vcmask 130048
    %v510 = vsel %vm509, %v503, -inf
    %511 = vmax.xlane.f32.xlu0 %v510
    %v512 = vpop.xlane.xlu0 %511
    %v513 = vsel %vm509, %v506, -inf
    %514 = vmax.xlane.f32.xlu0 %v513
    %v515 = vpop.xlane.xlu0 %514
    %v516 = vsub.f32 %v503, %v512
    %v517 = vsub.f32 %v506, %v515
    %v518 = vmul.f32 %v516, 1.442695
    %v519 = vpow.pop %v518
    %v520 = vmul.f32 %v517, 1.442695
    %v521 = vpow.pop %v520
    %v522 = vsel %vm509, %v519, 0.0
    %523 = vadd.xlane.f32.xlu0 %v522
    %v524 = vpop.xlane.xlu0 %523
    %v525 = vsel %vm509, %v521, 0.0
    %526 = vadd.xlane.f32.xlu0 %v525
    %v527 = vpop.xlane.xlu0 %526
    %v528 = vrcp.pop %v524
    %v529 = vrcp.pop %v527
    %v530 = vmul.f32 %v519, %v528
    %v531 = vmul.f32 %v521, %v529
    %v532 = vpack.c.bf16 %v531, %v530
    %v534 = vsel %vm509, %v532, 0
    %536 = vmatprep.subr.bf16.mxu0 0
    %537 = vmatpush1.bf16.msra.mxu0 0
    %538 = vmatprep.subr.bf16.mxu0 0
    %539 = vmatpush1.bf16.msra.mxu0 0
    %540 = vmatprep.subr.bf16.mxu0 0
    %541 = vmatpush1.bf16.msra.mxu0 0
    %542 = vmatprep.subr.bf16.mxu0 0
    %543 = vmatpush1.bf16.msra.mxu0 0
    %544 = vmatprep.subr.bf16.mxu0 0
    %545 = vmatpush1.bf16.msra.mxu0 0
    %546 = vmatprep.subr.bf16.mxu0 0
    %547 = vmatpush1.bf16.msra.mxu0 0
    %548 = vmatprep.subr.bf16.mxu0 0
    %549 = vmatpush1.bf16.msra.mxu0 0
    %550 = vmatprep.subr.bf16.mxu0 0
    %551 = vmatpush1.bf16.msra.mxu0 %v459
    %552 = vmatprep.subr.bf16.mxu0 0
    %553 = vmatpush2.bf16.msra.mxu0 0
    %554 = vmatprep.subr.bf16.mxu0 0
    %555 = vmatpush2.bf16.msra.mxu0 0
    %556 = vmatprep.subr.bf16.mxu0 0
    %557 = vmatpush2.bf16.msra.mxu0 0
    %558 = vmatprep.subr.bf16.mxu0 0
    %559 = vmatpush2.bf16.msra.mxu0 0
    %560 = vmatprep.subr.bf16.mxu0 0
    %561 = vmatpush2.bf16.msra.mxu0 0
    %562 = vmatprep.subr.bf16.mxu0 0
    %563 = vmatpush2.bf16.msra.mxu0 0
    %564 = vmatprep.subr.bf16.mxu0 0
    %565 = vmatpush2.bf16.msra.mxu0 0
    %566 = vmatprep.subr.bf16.mxu0 0
    %567 = vmatpush2.bf16.msra.mxu0 0
    %568 = vmatprep.mubr.bf16.mxu0 0
    %569 = vmatmul.mubr.bf16.gmra.mxu0 %v534
    %v570 = vpop.f32.mrf.mxu0
    %v571 = vadd.f32 0.0, %v570
    %v572 = vpop.f32.mrf.mxu0
    %v573 = vpop.f32.mrf.mxu0
    %v574 = vadd.f32 0.0, %v573
    %v575 = vpop.f32.mrf.mxu0
    %576 = vdwg.mxu0
    %577 = vst.msk [vmem:[#allocation2] sm:$0xff] %vm461, %v571
    %578 = vst.msk [vmem:[#allocation2 + $0x8] sm:$0xff] %vm461, %v574
    %580 = vrot.lane.b32.xlu0 %v455, 96
    %v581 = vpop.permute.xlu0 %580
    %583 = vrot.lane.b32.xlu0 %v457, 96
    %v584 = vpop.permute.xlu0 %583
    %v586 = vsel %vm461, %v581, 0
    %v589 = vsel %vm461, %v584, 0
    %591 = vmatprep.subr.bf16.mxu0 0
    %592 = vmatpush1.bf16.xpose.msra.mxu0 0
    %593 = vmatprep.subr.bf16.mxu0 0
    %594 = vmatpush1.bf16.xpose.msra.mxu0 0
    %595 = vmatprep.subr.bf16.mxu0 0
    %596 = vmatpush1.bf16.xpose.msra.mxu0 0
    %597 = vmatprep.subr.bf16.mxu0 0
    %598 = vmatpush1.bf16.xpose.msra.mxu0 0
    %599 = vmatprep.subr.bf16.mxu0 0
    %600 = vmatpush1.bf16.xpose.msra.mxu0 0
    %601 = vmatprep.subr.bf16.mxu0 0
    %602 = vmatpush1.bf16.xpose.msra.mxu0 0
    %603 = vmatprep.subr.bf16.mxu0 0
    %604 = vmatpush1.bf16.xpose.msra.mxu0 0
    %605 = vmatprep.subr.bf16.mxu0 0
    %606 = vmatpush1.bf16.xpose.msra.mxu0 %v589
    %607 = vmatprep.subr.bf16.mxu0 0
    %608 = vmatpush2.bf16.xpose.msra.mxu0 0
    %609 = vmatprep.subr.bf16.mxu0 0
    %610 = vmatpush2.bf16.xpose.msra.mxu0 0
    %611 = vmatprep.subr.bf16.mxu0 0
    %612 = vmatpush2.bf16.xpose.msra.mxu0 0
    %613 = vmatprep.subr.bf16.mxu0 0
    %614 = vmatpush2.bf16.xpose.msra.mxu0 0
    %615 = vmatprep.subr.bf16.mxu0 0
    %616 = vmatpush2.bf16.xpose.msra.mxu0 0
    %617 = vmatprep.subr.bf16.mxu0 0
    %618 = vmatpush2.bf16.xpose.msra.mxu0 0
    %619 = vmatprep.subr.bf16.mxu0 0
    %620 = vmatpush2.bf16.xpose.msra.mxu0 0
    %621 = vmatprep.subr.bf16.mxu0 0
    %622 = vmatpush2.bf16.xpose.msra.mxu0 0
    %623 = vmatprep.mubr.bf16.mxu0 0
    %624 = vmatmul.mubr.bf16.gmra.mxu0 %v586
    %v625 = vpop.f32.mrf.mxu0
    %v626 = vadd.f32 %v164, %v625
    %v627 = vpop.f32.mrf.mxu0
    %v628 = vpop.f32.mrf.mxu0
    %v629 = vadd.f32 %v164, %v628
    %v630 = vpop.f32.mrf.mxu0
    %631 = vdwg.mxu0
    %v632 = vsel %vm509, %v626, -inf
    %633 = vmax.xlane.f32.xlu0 %v632
    %v634 = vpop.xlane.xlu0 %633
    %v635 = vsel %vm509, %v629, -inf
    %636 = vmax.xlane.f32.xlu0 %v635
    %v637 = vpop.xlane.xlu0 %636
    %v638 = vsub.f32 %v626, %v634
    %v639 = vsub.f32 %v629, %v637
    %v640 = vmul.f32 %v638, 1.442695
    %v641 = vpow.pop %v640
    %v642 = vmul.f32 %v639, 1.442695
    %v643 = vpow.pop %v642
    %v644 = vsel %vm509, %v641, 0.0
    %645 = vadd.xlane.f32.xlu0 %v644
    %v646 = vpop.xlane.xlu0 %645
    %v647 = vsel %vm509, %v643, 0.0
    %648 = vadd.xlane.f32.xlu0 %v647
    %v649 = vpop.xlane.xlu0 %648
    %v650 = vrcp.pop %v646
    %v651 = vrcp.pop %v649
    %v652 = vmul.f32 %v641, %v650
    %v653 = vmul.f32 %v643, %v651
    %v654 = vpack.c.bf16 %v653, %v652
    %656 = vrot.lane.b32.xlu0 %v459, 96
    %v657 = vpop.permute.xlu0 %656
    %v660 = vsel %vm509, %v654, 0
    %662 = vmatprep.subr.bf16.mxu0 0
    %663 = vmatpush1.bf16.msra.mxu0 0
    %664 = vmatprep.subr.bf16.mxu0 0
    %665 = vmatpush1.bf16.msra.mxu0 0
    %666 = vmatprep.subr.bf16.mxu0 0
    %667 = vmatpush1.bf16.msra.mxu0 0
    %668 = vmatprep.subr.bf16.mxu0 0
    %669 = vmatpush1.bf16.msra.mxu0 0
    %670 = vmatprep.subr.bf16.mxu0 0
    %671 = vmatpush1.bf16.msra.mxu0 0
    %672 = vmatprep.subr.bf16.mxu0 0
    %673 = vmatpush1.bf16.msra.mxu0 0
    %674 = vmatprep.subr.bf16.mxu0 0
    %675 = vmatpush1.bf16.msra.mxu0 0
    %676 = vmatprep.subr.bf16.mxu0 0
    %677 = vmatpush1.bf16.msra.mxu0 %v657
    %678 = vmatprep.subr.bf16.mxu0 0
    %679 = vmatpush2.bf16.msra.mxu0 0
    %680 = vmatprep.subr.bf16.mxu0 0
    %681 = vmatpush2.bf16.msra.mxu0 0
    %682 = vmatprep.subr.bf16.mxu0 0
    %683 = vmatpush2.bf16.msra.mxu0 0
    %684 = vmatprep.subr.bf16.mxu0 0
    %685 = vmatpush2.bf16.msra.mxu0 0
    %686 = vmatprep.subr.bf16.mxu0 0
    %687 = vmatpush2.bf16.msra.mxu0 0
    %688 = vmatprep.subr.bf16.mxu0 0
    %689 = vmatpush2.bf16.msra.mxu0 0
    %690 = vmatprep.subr.bf16.mxu0 0
    %691 = vmatpush2.bf16.msra.mxu0 0
    %692 = vmatprep.subr.bf16.mxu0 0
    %693 = vmatpush2.bf16.msra.mxu0 0
    %694 = vmatprep.mubr.bf16.mxu0 0
    %695 = vmatmul.mubr.bf16.gmra.mxu0 %v660
    %v696 = vpop.f32.mrf.mxu0
    %v697 = vadd.f32 0.0, %v696
    %v698 = vpop.f32.mrf.mxu0
    %v699 = vpop.f32.mrf.mxu0
    %v700 = vadd.f32 0.0, %v699
    %v701 = vpop.f32.mrf.mxu0
    %702 = vdwg.mxu0
    %705 = vrot.lane.b32.xlu0 %v697, 32
    %v706 = vpop.permute.xlu0 %705
    %707 = vrot.lane.b32.xlu0 %v700, 32
    %v708 = vpop.permute.xlu0 %707
    %vm711 = vcmask 523520
    %712 = vst.msk [vmem:[#allocation2] sm:$0xff] %vm711, %v706
    %713 = vst.msk [vmem:[#allocation2 + $0x8] sm:$0xff] %vm711, %v708
    %714 = vrot.lane.b32.xlu0 %v455, 64
    %v715 = vpop.permute.xlu0 %714
    %716 = vrot.lane.b32.xlu0 %v457, 64
    %v717 = vpop.permute.xlu0 %716
    %v719 = vsel %vm461, %v715, 0
    %v722 = vsel %vm461, %v717, 0
    %724 = vmatprep.subr.bf16.mxu0 0
    %725 = vmatpush1.bf16.xpose.msra.mxu0 0
    %726 = vmatprep.subr.bf16.mxu0 0
    %727 = vmatpush1.bf16.xpose.msra.mxu0 0
    %728 = vmatprep.subr.bf16.mxu0 0
    %729 = vmatpush1.bf16.xpose.msra.mxu0 0
    %730 = vmatprep.subr.bf16.mxu0 0
    %731 = vmatpush1.bf16.xpose.msra.mxu0 0
    %732 = vmatprep.subr.bf16.mxu0 0
    %733 = vmatpush1.bf16.xpose.msra.mxu0 0
    %734 = vmatprep.subr.bf16.mxu0 0
    %735 = vmatpush1.bf16.xpose.msra.mxu0 0
    %736 = vmatprep.subr.bf16.mxu0 0
    %737 = vmatpush1.bf16.xpose.msra.mxu0 0
    %738 = vmatprep.subr.bf16.mxu0 0
    %739 = vmatpush1.bf16.xpose.msra.mxu0 %v722
    %740 = vmatprep.subr.bf16.mxu0 0
    %741 = vmatpush2.bf16.xpose.msra.mxu0 0
    %742 = vmatprep.subr.bf16.mxu0 0
    %743 = vmatpush2.bf16.xpose.msra.mxu0 0
    %744 = vmatprep.subr.bf16.mxu0 0
    %745 = vmatpush2.bf16.xpose.msra.mxu0 0
    %746 = vmatprep.subr.bf16.mxu0 0
    %747 = vmatpush2.bf16.xpose.msra.mxu0 0
    %748 = vmatprep.subr.bf16.mxu0 0
    %749 = vmatpush2.bf16.xpose.msra.mxu0 0
    %750 = vmatprep.subr.bf16.mxu0 0
    %751 = vmatpush2.bf16.xpose.msra.mxu0 0
    %752 = vmatprep.subr.bf16.mxu0 0
    %753 = vmatpush2.bf16.xpose.msra.mxu0 0
    %754 = vmatprep.subr.bf16.mxu0 0
    %755 = vmatpush2.bf16.xpose.msra.mxu0 0
    %756 = vmatprep.mubr.bf16.mxu0 0
    %757 = vmatmul.mubr.bf16.gmra.mxu0 %v719
    %v758 = vpop.f32.mrf.mxu0
    %v759 = vadd.f32 %v164, %v758
    %v760 = vpop.f32.mrf.mxu0
    %v761 = vpop.f32.mrf.mxu0
    %v762 = vadd.f32 %v164, %v761
    %v763 = vpop.f32.mrf.mxu0
    %764 = vdwg.mxu0
    %v765 = vsel %vm509, %v759, -inf
    %766 = vmax.xlane.f32.xlu0 %v765
    %v767 = vpop.xlane.xlu0 %766
    %v768 = vsel %vm509, %v762, -inf
    %769 = vmax.xlane.f32.xlu0 %v768
    %v770 = vpop.xlane.xlu0 %769
    %v771 = vsub.f32 %v759, %v767
    %v772 = vsub.f32 %v762, %v770
    %v773 = vmul.f32 %v771, 1.442695
    %v774 = vpow.pop %v773
    %v775 = vmul.f32 %v772, 1.442695
    %v776 = vpow.pop %v775
    %v777 = vsel %vm509, %v774, 0.0
    %778 = vadd.xlane.f32.xlu0 %v777
    %v779 = vpop.xlane.xlu0 %778
    %v780 = vsel %vm509, %v776, 0.0
    %781 = vadd.xlane.f32.xlu0 %v780
    %v782 = vpop.xlane.xlu0 %781
    %v783 = vrcp.pop %v779
    %v784 = vrcp.pop %v782
    %v785 = vmul.f32 %v774, %v783
    %v786 = vmul.f32 %v776, %v784
    %v787 = vpack.c.bf16 %v786, %v785
    %788 = vrot.lane.b32.xlu0 %v459, 64
    %v789 = vpop.permute.xlu0 %788
    %v792 = vsel %vm509, %v787, 0
    %794 = vmatprep.subr.bf16.mxu0 0
    %795 = vmatpush1.bf16.msra.mxu0 0
    %796 = vmatprep.subr.bf16.mxu0 0
    %797 = vmatpush1.bf16.msra.mxu0 0
    %798 = vmatprep.subr.bf16.mxu0 0
    %799 = vmatpush1.bf16.msra.mxu0 0
    %800 = vmatprep.subr.bf16.mxu0 0
    %801 = vmatpush1.bf16.msra.mxu0 0
    %802 = vmatprep.subr.bf16.mxu0 0
    %803 = vmatpush1.bf16.msra.mxu0 0
    %804 = vmatprep.subr.bf16.mxu0 0
    %805 = vmatpush1.bf16.msra.mxu0 0
    %806 = vmatprep.subr.bf16.mxu0 0
    %807 = vmatpush1.bf16.msra.mxu0 0
    %808 = vmatprep.subr.bf16.mxu0 0
    %809 = vmatpush1.bf16.msra.mxu0 %v789
    %810 = vmatprep.subr.bf16.mxu0 0
    %811 = vmatpush2.bf16.msra.mxu0 0
    %812 = vmatprep.subr.bf16.mxu0 0
    %813 = vmatpush2.bf16.msra.mxu0 0
    %814 = vmatprep.subr.bf16.mxu0 0
    %815 = vmatpush2.bf16.msra.mxu0 0
    %816 = vmatprep.subr.bf16.mxu0 0
    %817 = vmatpush2.bf16.msra.mxu0 0
    %818 = vmatprep.subr.bf16.mxu0 0
    %819 = vmatpush2.bf16.msra.mxu0 0
    %820 = vmatprep.subr.bf16.mxu0 0
    %821 = vmatpush2.bf16.msra.mxu0 0
    %822 = vmatprep.subr.bf16.mxu0 0
    %823 = vmatpush2.bf16.msra.mxu0 0
    %824 = vmatprep.subr.bf16.mxu0 0
    %825 = vmatpush2.bf16.msra.mxu0 0
    %826 = vmatprep.mubr.bf16.mxu0 0
    %827 = vmatmul.mubr.bf16.gmra.mxu0 %v792
    %v828 = vpop.f32.mrf.mxu0
    %v829 = vadd.f32 0.0, %v828
    %v830 = vpop.f32.mrf.mxu0
    %v831 = vpop.f32.mrf.mxu0
    %v832 = vadd.f32 0.0, %v831
    %v833 = vpop.f32.mrf.mxu0
    %834 = vdwg.mxu0
    %837 = vrot.lane.b32.xlu0 %v829, 64
    %v838 = vpop.permute.xlu0 %837
    %839 = vrot.lane.b32.xlu0 %v832, 64
    %v840 = vpop.permute.xlu0 %839
    %vm843 = vcmask 785920
    %844 = vst.msk [vmem:[#allocation2] sm:$0xff] %vm843, %v838
    %845 = vst.msk [vmem:[#allocation2 + $0x8] sm:$0xff] %vm843, %v840
    %846 = vrot.lane.b32.xlu0 %v455, 32
    %v847 = vpop.permute.xlu0 %846
    %848 = vrot.lane.b32.xlu0 %v457, 32
    %v849 = vpop.permute.xlu0 %848
    %v851 = vsel %vm461, %v847, 0
    %v854 = vsel %vm461, %v849, 0
    %856 = vmatprep.subr.bf16.mxu0 0
    %857 = vmatpush1.bf16.xpose.msra.mxu0 0
    %858 = vmatprep.subr.bf16.mxu0 0
    %859 = vmatpush1.bf16.xpose.msra.mxu0 0
    %860 = vmatprep.subr.bf16.mxu0 0
    %861 = vmatpush1.bf16.xpose.msra.mxu0 0
    %862 = vmatprep.subr.bf16.mxu0 0
    %863 = vmatpush1.bf16.xpose.msra.mxu0 0
    %864 = vmatprep.subr.bf16.mxu0 0
    %865 = vmatpush1.bf16.xpose.msra.mxu0 0
    %866 = vmatprep.subr.bf16.mxu0 0
    %867 = vmatpush1.bf16.xpose.msra.mxu0 0
    %868 = vmatprep.subr.bf16.mxu0 0
    %869 = vmatpush1.bf16.xpose.msra.mxu0 0
    %870 = vmatprep.subr.bf16.mxu0 0
    %871 = vmatpush1.bf16.xpose.msra.mxu0 %v854
    %872 = vmatprep.subr.bf16.mxu0 0
    %873 = vmatpush2.bf16.xpose.msra.mxu0 0
    %874 = vmatprep.subr.bf16.mxu0 0
    %875 = vmatpush2.bf16.xpose.msra.mxu0 0
    %876 = vmatprep.subr.bf16.mxu0 0
    %877 = vmatpush2.bf16.xpose.msra.mxu0 0
    %878 = vmatprep.subr.bf16.mxu0 0
    %879 = vmatpush2.bf16.xpose.msra.mxu0 0
    %880 = vmatprep.subr.bf16.mxu0 0
    %881 = vmatpush2.bf16.xpose.msra.mxu0 0
    %882 = vmatprep.subr.bf16.mxu0 0
    %883 = vmatpush2.bf16.xpose.msra.mxu0 0
    %884 = vmatprep.subr.bf16.mxu0 0
    %885 = vmatpush2.bf16.xpose.msra.mxu0 0
    %886 = vmatprep.subr.bf16.mxu0 0
    %887 = vmatpush2.bf16.xpose.msra.mxu0 0
    %888 = vmatprep.mubr.bf16.mxu0 0
    %889 = vmatmul.mubr.bf16.gmra.mxu0 %v851
    %v890 = vpop.f32.mrf.mxu0
    %v891 = vadd.f32 %v164, %v890
    %v892 = vpop.f32.mrf.mxu0
    %v893 = vpop.f32.mrf.mxu0
    %v894 = vadd.f32 %v164, %v893
    %v895 = vpop.f32.mrf.mxu0
    %896 = vdwg.mxu0
    %v897 = vsel %vm509, %v891, -inf
    %898 = vmax.xlane.f32.xlu0 %v897
    %v899 = vpop.xlane.xlu0 %898
    %v900 = vsel %vm509, %v894, -inf
    %901 = vmax.xlane.f32.xlu0 %v900
    %v902 = vpop.xlane.xlu0 %901
    %v903 = vsub.f32 %v891, %v899
    %v904 = vsub.f32 %v894, %v902
    %v905 = vmul.f32 %v903, 1.442695
    %v906 = vpow.pop %v905
    %v907 = vmul.f32 %v904, 1.442695
    %v908 = vpow.pop %v907
    %v909 = vsel %vm509, %v906, 0.0
    %910 = vadd.xlane.f32.xlu0 %v909
    %v911 = vpop.xlane.xlu0 %910
    %v912 = vsel %vm509, %v908, 0.0
    %913 = vadd.xlane.f32.xlu0 %v912
    %v914 = vpop.xlane.xlu0 %913
    %v915 = vrcp.pop %v911
    %v916 = vrcp.pop %v914
    %v917 = vmul.f32 %v906, %v915
    %v918 = vmul.f32 %v908, %v916
    %v919 = vpack.c.bf16 %v918, %v917
    %920 = vrot.lane.b32.xlu0 %v459, 32
    %v921 = vpop.permute.xlu0 %920
    %v924 = vsel %vm509, %v919, 0
    %926 = vmatprep.subr.bf16.mxu0 0
    %927 = vmatpush1.bf16.msra.mxu0 0
    %928 = vmatprep.subr.bf16.mxu0 0
    %929 = vmatpush1.bf16.msra.mxu0 0
    %930 = vmatprep.subr.bf16.mxu0 0
    %931 = vmatpush1.bf16.msra.mxu0 0
    %932 = vmatprep.subr.bf16.mxu0 0
    %933 = vmatpush1.bf16.msra.mxu0 0
    %934 = vmatprep.subr.bf16.mxu0 0
    %935 = vmatpush1.bf16.msra.mxu0 0
    %936 = vmatprep.subr.bf16.mxu0 0
    %937 = vmatpush1.bf16.msra.mxu0 0
    %938 = vmatprep.subr.bf16.mxu0 0
    %939 = vmatpush1.bf16.msra.mxu0 0
    %940 = vmatprep.subr.bf16.mxu0 0
    %941 = vmatpush1.bf16.msra.mxu0 %v921
    %942 = vmatprep.subr.bf16.mxu0 0
    %943 = vmatpush2.bf16.msra.mxu0 0
    %944 = vmatprep.subr.bf16.mxu0 0
    %945 = vmatpush2.bf16.msra.mxu0 0
    %946 = vmatprep.subr.bf16.mxu0 0
    %947 = vmatpush2.bf16.msra.mxu0 0
    %948 = vmatprep.subr.bf16.mxu0 0
    %949 = vmatpush2.bf16.msra.mxu0 0
    %950 = vmatprep.subr.bf16.mxu0 0
    %951 = vmatpush2.bf16.msra.mxu0 0
    %952 = vmatprep.subr.bf16.mxu0 0
    %953 = vmatpush2.bf16.msra.mxu0 0
    %954 = vmatprep.subr.bf16.mxu0 0
    %955 = vmatpush2.bf16.msra.mxu0 0
    %956 = vmatprep.subr.bf16.mxu0 0
    %957 = vmatpush2.bf16.msra.mxu0 0
    %958 = vmatprep.mubr.bf16.mxu0 0
    %959 = vmatmul.mubr.bf16.gmra.mxu0 %v924
    %v960 = vpop.f32.mrf.mxu0
    %v961 = vadd.f32 0.0, %v960
    %v962 = vpop.f32.mrf.mxu0
    %v963 = vpop.f32.mrf.mxu0
    %v964 = vadd.f32 0.0, %v963
    %v965 = vpop.f32.mrf.mxu0
    %966 = vdwg.mxu0
    %969 = vrot.lane.b32.xlu0 %v961, 96
    %v970 = vpop.permute.xlu0 %969
    %971 = vrot.lane.b32.xlu0 %v964, 96
    %v972 = vpop.permute.xlu0 %971
    %vm975 = vcmask 1048320
    %976 = vst.msk [vmem:[#allocation2] sm:$0xff] %vm975, %v970
    %977 = vst.msk [vmem:[#allocation2 + $0x8] sm:$0xff] %vm975, %v972
    %v979 = vsel %vm461, %v456, 0
    %v982 = vsel %vm461, %v458, 0
    %984 = vmatprep.subr.bf16.mxu0 0
    %985 = vmatpush1.bf16.xpose.msra.mxu0 0
    %986 = vmatprep.subr.bf16.mxu0 0
    %987 = vmatpush1.bf16.xpose.msra.mxu0 0
    %988 = vmatprep.subr.bf16.mxu0 0
    %989 = vmatpush1.bf16.xpose.msra.mxu0 0
    %990 = vmatprep.subr.bf16.mxu0 0
    %991 = vmatpush1.bf16.xpose.msra.mxu0 0
    %992 = vmatprep.subr.bf16.mxu0 0
    %993 = vmatpush1.bf16.xpose.msra.mxu0 0
    %994 = vmatprep.subr.bf16.mxu0 0
    %995 = vmatpush1.bf16.xpose.msra.mxu0 0
    %996 = vmatprep.subr.bf16.mxu0 0
    %997 = vmatpush1.bf16.xpose.msra.mxu0 0
    %998 = vmatprep.subr.bf16.mxu0 0
    %999 = vmatpush1.bf16.xpose.msra.mxu0 %v982
    %1000 = vmatprep.subr.bf16.mxu0 0
    %1001 = vmatpush2.bf16.xpose.msra.mxu0 0
    %1002 = vmatprep.subr.bf16.mxu0 0
    %1003 = vmatpush2.bf16.xpose.msra.mxu0 0
    %1004 = vmatprep.subr.bf16.mxu0 0
    %1005 = vmatpush2.bf16.xpose.msra.mxu0 0
    %1006 = vmatprep.subr.bf16.mxu0 0
    %1007 = vmatpush2.bf16.xpose.msra.mxu0 0
    %1008 = vmatprep.subr.bf16.mxu0 0
    %1009 = vmatpush2.bf16.xpose.msra.mxu0 0
    %1010 = vmatprep.subr.bf16.mxu0 0
    %1011 = vmatpush2.bf16.xpose.msra.mxu0 0
    %1012 = vmatprep.subr.bf16.mxu0 0
    %1013 = vmatpush2.bf16.xpose.msra.mxu0 0
    %1014 = vmatprep.subr.bf16.mxu0 0
    %1015 = vmatpush2.bf16.xpose.msra.mxu0 0
    %1016 = vmatprep.mubr.bf16.mxu0 0
    %1017 = vmatmul.mubr.bf16.gmra.mxu0 %v979
    %v1018 = vpop.f32.mrf.mxu0
    %v1019 = vadd.f32 %v172, %v1018
    %v1020 = vpop.f32.mrf.mxu0
    %v1021 = vpop.f32.mrf.mxu0
    %v1022 = vadd.f32 %v172, %v1021
    %v1023 = vpop.f32.mrf.mxu0
    %1024 = vdwg.mxu0
    %v1025 = vsel %vm509, %v1019, -inf
    %1026 = vmax.xlane.f32.xlu0 %v1025
    %v1027 = vpop.xlane.xlu0 %1026
    %v1028 = vsel %vm509, %v1022, -inf
    %1029 = vmax.xlane.f32.xlu0 %v1028
    %v1030 = vpop.xlane.xlu0 %1029
    %v1031 = vsub.f32 %v1019, %v1027
    %v1032 = vsub.f32 %v1022, %v1030
    %v1033 = vmul.f32 %v1031, 1.442695
    %v1034 = vpow.pop %v1033
    %v1035 = vmul.f32 %v1032, 1.442695
    %v1036 = vpow.pop %v1035
    %v1037 = vsel %vm509, %v1034, 0.0
    %1038 = vadd.xlane.f32.xlu0 %v1037
    %v1039 = vpop.xlane.xlu0 %1038
    %v1040 = vsel %vm509, %v1036, 0.0
    %1041 = vadd.xlane.f32.xlu0 %v1040
    %v1042 = vpop.xlane.xlu0 %1041
    %v1043 = vrcp.pop %v1039
    %v1044 = vrcp.pop %v1042
    %v1045 = vmul.f32 %v1034, %v1043
    %v1046 = vmul.f32 %v1036, %v1044
    %v1047 = vpack.c.bf16 %v1046, %v1045
    %v1049 = vsel %vm509, %v1047, 0
    %1051 = vmatprep.subr.bf16.mxu0 0
    %1052 = vmatpush1.bf16.msra.mxu0 0
    %1053 = vmatprep.subr.bf16.mxu0 0
    %1054 = vmatpush1.bf16.msra.mxu0 0
    %1055 = vmatprep.subr.bf16.mxu0 0
    %1056 = vmatpush1.bf16.msra.mxu0 0
    %1057 = vmatprep.subr.bf16.mxu0 0
    %1058 = vmatpush1.bf16.msra.mxu0 0
    %1059 = vmatprep.subr.bf16.mxu0 0
    %1060 = vmatpush1.bf16.msra.mxu0 0
    %1061 = vmatprep.subr.bf16.mxu0 0
    %1062 = vmatpush1.bf16.msra.mxu0 0
    %1063 = vmatprep.subr.bf16.mxu0 0
    %1064 = vmatpush1.bf16.msra.mxu0 0
    %1065 = vmatprep.subr.bf16.mxu0 0
    %1066 = vmatpush1.bf16.msra.mxu0 %v460
    %1067 = vmatprep.subr.bf16.mxu0 0
    %1068 = vmatpush2.bf16.msra.mxu0 0
    %1069 = vmatprep.subr.bf16.mxu0 0
    %1070 = vmatpush2.bf16.msra.mxu0 0
    %1071 = vmatprep.subr.bf16.mxu0 0
    %1072 = vmatpush2.bf16.msra.mxu0 0
    %1073 = vmatprep.subr.bf16.mxu0 0
    %1074 = vmatpush2.bf16.msra.mxu0 0
    %1075 = vmatprep.subr.bf16.mxu0 0
    %1076 = vmatpush2.bf16.msra.mxu0 0
    %1077 = vmatprep.subr.bf16.mxu0 0
    %1078 = vmatpush2.bf16.msra.mxu0 0
    %1079 = vmatprep.subr.bf16.mxu0 0
    %1080 = vmatpush2.bf16.msra.mxu0 0
    %1081 = vmatprep.subr.bf16.mxu0 0
    %1082 = vmatpush2.bf16.msra.mxu0 0
    %1083 = vmatprep.mubr.bf16.mxu0 0
    %1084 = vmatmul.mubr.bf16.gmra.mxu0 %v1049
    %v1085 = vpop.f32.mrf.mxu0
    %v1086 = vadd.f32 0.0, %v1085
    %v1087 = vpop.f32.mrf.mxu0
    %v1088 = vpop.f32.mrf.mxu0
    %v1089 = vadd.f32 0.0, %v1088
    %v1090 = vpop.f32.mrf.mxu0
    %1091 = vdwg.mxu0
    %1092 = vst.msk [vmem:[#allocation2 + $0x10] sm:$0xff] %vm461, %v1086
    %1093 = vst.msk [vmem:[#allocation2 + $0x18] sm:$0xff] %vm461, %v1089
    %1095 = vrot.lane.b32.xlu0 %v456, 96
    %v1096 = vpop.permute.xlu0 %1095
    %1098 = vrot.lane.b32.xlu0 %v458, 96
    %v1099 = vpop.permute.xlu0 %1098
    %v1101 = vsel %vm461, %v1096, 0
    %v1104 = vsel %vm461, %v1099, 0
    %1106 = vmatprep.subr.bf16.mxu0 0
    %1107 = vmatpush1.bf16.xpose.msra.mxu0 0
    %1108 = vmatprep.subr.bf16.mxu0 0
    %1109 = vmatpush1.bf16.xpose.msra.mxu0 0
    %1110 = vmatprep.subr.bf16.mxu0 0
    %1111 = vmatpush1.bf16.xpose.msra.mxu0 0
    %1112 = vmatprep.subr.bf16.mxu0 0
    %1113 = vmatpush1.bf16.xpose.msra.mxu0 0
    %1114 = vmatprep.subr.bf16.mxu0 0
    %1115 = vmatpush1.bf16.xpose.msra.mxu0 0
    %1116 = vmatprep.subr.bf16.mxu0 0
    %1117 = vmatpush1.bf16.xpose.msra.mxu0 0
    %1118 = vmatprep.subr.bf16.mxu0 0
    %1119 = vmatpush1.bf16.xpose.msra.mxu0 0
    %1120 = vmatprep.subr.bf16.mxu0 0
    %1121 = vmatpush1.bf16.xpose.msra.mxu0 %v1104
    %1122 = vmatprep.subr.bf16.mxu0 0
    %1123 = vmatpush2.bf16.xpose.msra.mxu0 0
    %1124 = vmatprep.subr.bf16.mxu0 0
    %1125 = vmatpush2.bf16.xpose.msra.mxu0 0
    %1126 = vmatprep.subr.bf16.mxu0 0
    %1127 = vmatpush2.bf16.xpose.msra.mxu0 0
    %1128 = vmatprep.subr.bf16.mxu0 0
    %1129 = vmatpush2.bf16.xpose.msra.mxu0 0
    %1130 = vmatprep.subr.bf16.mxu0 0
    %1131 = vmatpush2.bf16.xpose.msra.mxu0 0
    %1132 = vmatprep.subr.bf16.mxu0 0
    %1133 = vmatpush2.bf16.xpose.msra.mxu0 0
    %1134 = vmatprep.subr.bf16.mxu0 0
    %1135 = vmatpush2.bf16.xpose.msra.mxu0 0
    %1136 = vmatprep.subr.bf16.mxu0 0
    %1137 = vmatpush2.bf16.xpose.msra.mxu0 0
    %1138 = vmatprep.mubr.bf16.mxu0 0
    %1139 = vmatmul.mubr.bf16.gmra.mxu0 %v1101
    %v1140 = vpop.f32.mrf.mxu0
    %v1141 = vadd.f32 %v172, %v1140
    %v1142 = vpop.f32.mrf.mxu0
    %v1143 = vpop.f32.mrf.mxu0
    %v1144 = vadd.f32 %v172, %v1143
    %v1145 = vpop.f32.mrf.mxu0
    %1146 = vdwg.mxu0
    %v1147 = vsel %vm509, %v1141, -inf
    %1148 = vmax.xlane.f32.xlu0 %v1147
    %v1149 = vpop.xlane.xlu0 %1148
    %v1150 = vsel %vm509, %v1144, -inf
    %1151 = vmax.xlane.f32.xlu0 %v1150
    %v1152 = vpop.xlane.xlu0 %1151
    %v1153 = vsub.f32 %v1141, %v1149
    %v1154 = vsub.f32 %v1144, %v1152
    %v1155 = vmul.f32 %v1153, 1.442695
    %v1156 = vpow.pop %v1155
    %v1157 = vmul.f32 %v1154, 1.442695
    %v1158 = vpow.pop %v1157
    %v1159 = vsel %vm509, %v1156, 0.0
    %1160 = vadd.xlane.f32.xlu0 %v1159
    %v1161 = vpop.xlane.xlu0 %1160
    %v1162 = vsel %vm509, %v1158, 0.0
    %1163 = vadd.xlane.f32.xlu0 %v1162
    %v1164 = vpop.xlane.xlu0 %1163
    %v1165 = vrcp.pop %v1161
    %v1166 = vrcp.pop %v1164
    %v1167 = vmul.f32 %v1156, %v1165
    %v1168 = vmul.f32 %v1158, %v1166
    %v1169 = vpack.c.bf16 %v1168, %v1167
    %1171 = vrot.lane.b32.xlu0 %v460, 96
    %v1172 = vpop.permute.xlu0 %1171
    %v1175 = vsel %vm509, %v1169, 0
    %1177 = vmatprep.subr.bf16.mxu0 0
    %1178 = vmatpush1.bf16.msra.mxu0 0
    %1179 = vmatprep.subr.bf16.mxu0 0
    %1180 = vmatpush1.bf16.msra.mxu0 0
    %1181 = vmatprep.subr.bf16.mxu0 0
    %1182 = vmatpush1.bf16.msra.mxu0 0
    %1183 = vmatprep.subr.bf16.mxu0 0
    %1184 = vmatpush1.bf16.msra.mxu0 0
    %1185 = vmatprep.subr.bf16.mxu0 0
    %1186 = vmatpush1.bf16.msra.mxu0 0
    %1187 = vmatprep.subr.bf16.mxu0 0
    %1188 = vmatpush1.bf16.msra.mxu0 0
    %1189 = vmatprep.subr.bf16.mxu0 0
    %1190 = vmatpush1.bf16.msra.mxu0 0
    %1191 = vmatprep.subr.bf16.mxu0 0
    %1192 = vmatpush1.bf16.msra.mxu0 %v1172
    %1193 = vmatprep.subr.bf16.mxu0 0
    %1194 = vmatpush2.bf16.msra.mxu0 0
    %1195 = vmatprep.subr.bf16.mxu0 0
    %1196 = vmatpush2.bf16.msra.mxu0 0
    %1197 = vmatprep.subr.bf16.mxu0 0
    %1198 = vmatpush2.bf16.msra.mxu0 0
    %1199 = vmatprep.subr.bf16.mxu0 0
    %1200 = vmatpush2.bf16.msra.mxu0 0
    %1201 = vmatprep.subr.bf16.mxu0 0
    %1202 = vmatpush2.bf16.msra.mxu0 0
    %1203 = vmatprep.subr.bf16.mxu0 0
    %1204 = vmatpush2.bf16.msra.mxu0 0
    %1205 = vmatprep.subr.bf16.mxu0 0
    %1206 = vmatpush2.bf16.msra.mxu0 0
    %1207 = vmatprep.subr.bf16.mxu0 0
    %1208 = vmatpush2.bf16.msra.mxu0 0
    %1209 = vmatprep.mubr.bf16.mxu0 0
    %1210 = vmatmul.mubr.bf16.gmra.mxu0 %v1175
    %v1211 = vpop.f32.mrf.mxu0
    %v1212 = vadd.f32 0.0, %v1211
    %v1213 = vpop.f32.mrf.mxu0
    %v1214 = vpop.f32.mrf.mxu0
    %v1215 = vadd.f32 0.0, %v1214
    %v1216 = vpop.f32.mrf.mxu0
    %1217 = vdwg.mxu0
    %1220 = vrot.lane.b32.xlu0 %v1212, 32
    %v1221 = vpop.permute.xlu0 %1220
    %1222 = vrot.lane.b32.xlu0 %v1215, 32
    %v1223 = vpop.permute.xlu0 %1222
    %1226 = vst.msk [vmem:[#allocation2 + $0x10] sm:$0xff] %vm711, %v1221
    %1227 = vst.msk [vmem:[#allocation2 + $0x18] sm:$0xff] %vm711, %v1223
    %1228 = vrot.lane.b32.xlu0 %v456, 64
    %v1229 = vpop.permute.xlu0 %1228
    %1230 = vrot.lane.b32.xlu0 %v458, 64
    %v1231 = vpop.permute.xlu0 %1230
    %v1233 = vsel %vm461, %v1229, 0
    %v1236 = vsel %vm461, %v1231, 0
    %1238 = vmatprep.subr.bf16.mxu0 0
    %1239 = vmatpush1.bf16.xpose.msra.mxu0 0
    %1240 = vmatprep.subr.bf16.mxu0 0
    %1241 = vmatpush1.bf16.xpose.msra.mxu0 0
    %1242 = vmatprep.subr.bf16.mxu0 0
    %1243 = vmatpush1.bf16.xpose.msra.mxu0 0
    %1244 = vmatprep.subr.bf16.mxu0 0
    %1245 = vmatpush1.bf16.xpose.msra.mxu0 0
    %1246 = vmatprep.subr.bf16.mxu0 0
    %1247 = vmatpush1.bf16.xpose.msra.mxu0 0
    %1248 = vmatprep.subr.bf16.mxu0 0
    %1249 = vmatpush1.bf16.xpose.msra.mxu0 0
    %1250 = vmatprep.subr.bf16.mxu0 0
    %1251 = vmatpush1.bf16.xpose.msra.mxu0 0
    %1252 = vmatprep.subr.bf16.mxu0 0
    %1253 = vmatpush1.bf16.xpose.msra.mxu0 %v1236
    %1254 = vmatprep.subr.bf16.mxu0 0
    %1255 = vmatpush2.bf16.xpose.msra.mxu0 0
    %1256 = vmatprep.subr.bf16.mxu0 0
    %1257 = vmatpush2.bf16.xpose.msra.mxu0 0
    %1258 = vmatprep.subr.bf16.mxu0 0
    %1259 = vmatpush2.bf16.xpose.msra.mxu0 0
    %1260 = vmatprep.subr.bf16.mxu0 0
    %1261 = vmatpush2.bf16.xpose.msra.mxu0 0
    %1262 = vmatprep.subr.bf16.mxu0 0
    %1263 = vmatpush2.bf16.xpose.msra.mxu0 0
    %1264 = vmatprep.subr.bf16.mxu0 0
    %1265 = vmatpush2.bf16.xpose.msra.mxu0 0
    %1266 = vmatprep.subr.bf16.mxu0 0
    %1267 = vmatpush2.bf16.xpose.msra.mxu0 0
    %1268 = vmatprep.subr.bf16.mxu0 0
    %1269 = vmatpush2.bf16.xpose.msra.mxu0 0
    %1270 = vmatprep.mubr.bf16.mxu0 0
    %1271 = vmatmul.mubr.bf16.gmra.mxu0 %v1233
    %v1272 = vpop.f32.mrf.mxu0
    %v1273 = vadd.f32 %v172, %v1272
    %v1274 = vpop.f32.mrf.mxu0
    %v1275 = vpop.f32.mrf.mxu0
    %v1276 = vadd.f32 %v172, %v1275
    %v1277 = vpop.f32.mrf.mxu0
    %1278 = vdwg.mxu0
    %v1279 = vsel %vm509, %v1273, -inf
    %1280 = vmax.xlane.f32.xlu0 %v1279
    %v1281 = vpop.xlane.xlu0 %1280
    %v1282 = vsel %vm509, %v1276, -inf
    %1283 = vmax.xlane.f32.xlu0 %v1282
    %v1284 = vpop.xlane.xlu0 %1283
    %v1285 = vsub.f32 %v1273, %v1281
    %v1286 = vsub.f32 %v1276, %v1284
    %v1287 = vmul.f32 %v1285, 1.442695
    %v1288 = vpow.pop %v1287
    %v1289 = vmul.f32 %v1286, 1.442695
    %v1290 = vpow.pop %v1289
    %v1291 = vsel %vm509, %v1288, 0.0
    %1292 = vadd.xlane.f32.xlu0 %v1291
    %v1293 = vpop.xlane.xlu0 %1292
    %v1294 = vsel %vm509, %v1290, 0.0
    %1295 = vadd.xlane.f32.xlu0 %v1294
    %v1296 = vpop.xlane.xlu0 %1295
    %v1297 = vrcp.pop %v1293
    %v1298 = vrcp.pop %v1296
    %v1299 = vmul.f32 %v1288, %v1297
    %v1300 = vmul.f32 %v1290, %v1298
    %v1301 = vpack.c.bf16 %v1300, %v1299
    %1302 = vrot.lane.b32.xlu0 %v460, 64
    %v1303 = vpop.permute.xlu0 %1302
    %v1306 = vsel %vm509, %v1301, 0
    %1308 = vmatprep.subr.bf16.mxu0 0
    %1309 = vmatpush1.bf16.msra.mxu0 0
    %1310 = vmatprep.subr.bf16.mxu0 0
    %1311 = vmatpush1.bf16.msra.mxu0 0
    %1312 = vmatprep.subr.bf16.mxu0 0
    %1313 = vmatpush1.bf16.msra.mxu0 0
    %1314 = vmatprep.subr.bf16.mxu0 0
    %1315 = vmatpush1.bf16.msra.mxu0 0
    %1316 = vmatprep.subr.bf16.mxu0 0
    %1317 = vmatpush1.bf16.msra.mxu0 0
    %1318 = vmatprep.subr.bf16.mxu0 0
    %1319 = vmatpush1.bf16.msra.mxu0 0
    %1320 = vmatprep.subr.bf16.mxu0 0
    %1321 = vmatpush1.bf16.msra.mxu0 0
    %1322 = vmatprep.subr.bf16.mxu0 0
    %1323 = vmatpush1.bf16.msra.mxu0 %v1303
    %1324 = vmatprep.subr.bf16.mxu0 0
    %1325 = vmatpush2.bf16.msra.mxu0 0
    %1326 = vmatprep.subr.bf16.mxu0 0
    %1327 = vmatpush2.bf16.msra.mxu0 0
    %1328 = vmatprep.subr.bf16.mxu0 0
    %1329 = vmatpush2.bf16.msra.mxu0 0
    %1330 = vmatprep.subr.bf16.mxu0 0
    %1331 = vmatpush2.bf16.msra.mxu0 0
    %1332 = vmatprep.subr.bf16.mxu0 0
    %1333 = vmatpush2.bf16.msra.mxu0 0
    %1334 = vmatprep.subr.bf16.mxu0 0
    %1335 = vmatpush2.bf16.msra.mxu0 0
    %1336 = vmatprep.subr.bf16.mxu0 0
    %1337 = vmatpush2.bf16.msra.mxu0 0
    %1338 = vmatprep.subr.bf16.mxu0 0
    %1339 = vmatpush2.bf16.msra.mxu0 0
    %1340 = vmatprep.mubr.bf16.mxu0 0
    %1341 = vmatmul.mubr.bf16.gmra.mxu0 %v1306
    %v1342 = vpop.f32.mrf.mxu0
    %v1343 = vadd.f32 0.0, %v1342
    %v1344 = vpop.f32.mrf.mxu0
    %v1345 = vpop.f32.mrf.mxu0
    %v1346 = vadd.f32 0.0, %v1345
    %v1347 = vpop.f32.mrf.mxu0
    %1348 = vdwg.mxu0
    %1351 = vrot.lane.b32.xlu0 %v1343, 64
    %v1352 = vpop.permute.xlu0 %1351
    %1353 = vrot.lane.b32.xlu0 %v1346, 64
    %v1354 = vpop.permute.xlu0 %1353
    %1357 = vst.msk [vmem:[#allocation2 + $0x10] sm:$0xff] %vm843, %v1352
    %1358 = vst.msk [vmem:[#allocation2 + $0x18] sm:$0xff] %vm843, %v1354
    %1359 = vrot.lane.b32.xlu0 %v456, 32
    %v1360 = vpop.permute.xlu0 %1359
    %1361 = vrot.lane.b32.xlu0 %v458, 32
    %v1362 = vpop.permute.xlu0 %1361
    %v1364 = vsel %vm461, %v1360, 0
    %v1367 = vsel %vm461, %v1362, 0
    %1369 = vmatprep.subr.bf16.mxu0 0
    %1370 = vmatpush1.bf16.xpose.msra.mxu0 0
    %1371 = vmatprep.subr.bf16.mxu0 0
    %1372 = vmatpush1.bf16.xpose.msra.mxu0 0
    %1373 = vmatprep.subr.bf16.mxu0 0
    %1374 = vmatpush1.bf16.xpose.msra.mxu0 0
    %1375 = vmatprep.subr.bf16.mxu0 0
    %1376 = vmatpush1.bf16.xpose.msra.mxu0 0
    %1377 = vmatprep.subr.bf16.mxu0 0
    %1378 = vmatpush1.bf16.xpose.msra.mxu0 0
    %1379 = vmatprep.subr.bf16.mxu0 0
    %1380 = vmatpush1.bf16.xpose.msra.mxu0 0
    %1381 = vmatprep.subr.bf16.mxu0 0
    %1382 = vmatpush1.bf16.xpose.msra.mxu0 0
    %1383 = vmatprep.subr.bf16.mxu0 0
    %1384 = vmatpush1.bf16.xpose.msra.mxu0 %v1367
    %1385 = vmatprep.subr.bf16.mxu0 0
    %1386 = vmatpush2.bf16.xpose.msra.mxu0 0
    %1387 = vmatprep.subr.bf16.mxu0 0
    %1388 = vmatpush2.bf16.xpose.msra.mxu0 0
    %1389 = vmatprep.subr.bf16.mxu0 0
    %1390 = vmatpush2.bf16.xpose.msra.mxu0 0
    %1391 = vmatprep.subr.bf16.mxu0 0
    %1392 = vmatpush2.bf16.xpose.msra.mxu0 0
    %1393 = vmatprep.subr.bf16.mxu0 0
    %1394 = vmatpush2.bf16.xpose.msra.mxu0 0
    %1395 = vmatprep.subr.bf16.mxu0 0
    %1396 = vmatpush2.bf16.xpose.msra.mxu0 0
    %1397 = vmatprep.subr.bf16.mxu0 0
    %1398 = vmatpush2.bf16.xpose.msra.mxu0 0
    %1399 = vmatprep.subr.bf16.mxu0 0
    %1400 = vmatpush2.bf16.xpose.msra.mxu0 0
    %1401 = vmatprep.mubr.bf16.mxu0 0
    %1402 = vmatmul.mubr.bf16.gmra.mxu0 %v1364
    %v1403 = vpop.f32.mrf.mxu0
    %v1404 = vadd.f32 %v172, %v1403
    %v1405 = vpop.f32.mrf.mxu0
    %v1406 = vpop.f32.mrf.mxu0
    %v1407 = vadd.f32 %v172, %v1406
    %v1408 = vpop.f32.mrf.mxu0
    %1409 = vdwg.mxu0
    %v1410 = vsel %vm509, %v1404, -inf
    %1411 = vmax.xlane.f32.xlu0 %v1410
    %v1412 = vpop.xlane.xlu0 %1411
    %v1413 = vsel %vm509, %v1407, -inf
    %1414 = vmax.xlane.f32.xlu0 %v1413
    %v1415 = vpop.xlane.xlu0 %1414
    %v1416 = vsub.f32 %v1404, %v1412
    %v1417 = vsub.f32 %v1407, %v1415
    %v1418 = vmul.f32 %v1416, 1.442695
    %v1419 = vpow.pop %v1418
    %v1420 = vmul.f32 %v1417, 1.442695
    %v1421 = vpow.pop %v1420
    %v1422 = vsel %vm509, %v1419, 0.0
    %1423 = vadd.xlane.f32.xlu0 %v1422
    %v1424 = vpop.xlane.xlu0 %1423
    %v1425 = vsel %vm509, %v1421, 0.0
    %1426 = vadd.xlane.f32.xlu0 %v1425
    %v1427 = vpop.xlane.xlu0 %1426
    %v1428 = vrcp.pop %v1424
    %v1429 = vrcp.pop %v1427
    %v1430 = vmul.f32 %v1419, %v1428
    %v1431 = vmul.f32 %v1421, %v1429
    %v1432 = vpack.c.bf16 %v1431, %v1430
    %1433 = vrot.lane.b32.xlu0 %v460, 32
    %v1434 = vpop.permute.xlu0 %1433
    %v1437 = vsel %vm509, %v1432, 0
    %1439 = vmatprep.subr.bf16.mxu0 0
    %1440 = vmatpush1.bf16.msra.mxu0 0
    %1441 = vmatprep.subr.bf16.mxu0 0
    %1442 = vmatpush1.bf16.msra.mxu0 0
    %1443 = vmatprep.subr.bf16.mxu0 0
    %1444 = vmatpush1.bf16.msra.mxu0 0
    %1445 = vmatprep.subr.bf16.mxu0 0
    %1446 = vmatpush1.bf16.msra.mxu0 0
    %1447 = vmatprep.subr.bf16.mxu0 0
    %1448 = vmatpush1.bf16.msra.mxu0 0
    %1449 = vmatprep.subr.bf16.mxu0 0
    %1450 = vmatpush1.bf16.msra.mxu0 0
    %1451 = vmatprep.subr.bf16.mxu0 0
    %1452 = vmatpush1.bf16.msra.mxu0 0
    %1453 = vmatprep.subr.bf16.mxu0 0
    %1454 = vmatpush1.bf16.msra.mxu0 %v1434
    %1455 = vmatprep.subr.bf16.mxu0 0
    %1456 = vmatpush2.bf16.msra.mxu0 0
    %1457 = vmatprep.subr.bf16.mxu0 0
    %1458 = vmatpush2.bf16.msra.mxu0 0
    %1459 = vmatprep.subr.bf16.mxu0 0
    %1460 = vmatpush2.bf16.msra.mxu0 0
    %1461 = vmatprep.subr.bf16.mxu0 0
    %1462 = vmatpush2.bf16.msra.mxu0 0
    %1463 = vmatprep.subr.bf16.mxu0 0
    %1464 = vmatpush2.bf16.msra.mxu0 0
    %1465 = vmatprep.subr.bf16.mxu0 0
    %1466 = vmatpush2.bf16.msra.mxu0 0
    %1467 = vmatprep.subr.bf16.mxu0 0
    %1468 = vmatpush2.bf16.msra.mxu0 0
    %1469 = vmatprep.subr.bf16.mxu0 0
    %1470 = vmatpush2.bf16.msra.mxu0 0
    %1471 = vmatprep.mubr.bf16.mxu0 0
    %1472 = vmatmul.mubr.bf16.gmra.mxu0 %v1437
    %v1473 = vpop.f32.mrf.mxu0
    %v1474 = vadd.f32 0.0, %v1473
    %v1475 = vpop.f32.mrf.mxu0
    %v1476 = vpop.f32.mrf.mxu0
    %v1477 = vadd.f32 0.0, %v1476
    %v1478 = vpop.f32.mrf.mxu0
    %1479 = vdwg.mxu0
    %1482 = vrot.lane.b32.xlu0 %v1474, 96
    %v1483 = vpop.permute.xlu0 %1482
    %1484 = vrot.lane.b32.xlu0 %v1477, 96
    %v1485 = vpop.permute.xlu0 %1484
    %1488 = vst.msk [vmem:[#allocation2 + $0x10] sm:$0xff] %vm975, %v1483
    %1489 = vst.msk [vmem:[#allocation2 + $0x18] sm:$0xff] %vm975, %v1485
    %v1490 = vld [vmem:[#allocation2] sm:$0xff]
    %v1491 = vld [vmem:[#allocation2 + $0x8] sm:$0xff]
    %v1492 = vld [vmem:[#allocation2 + $0x10] sm:$0xff]
    %v1493 = vld [vmem:[#allocation2 + $0x18] sm:$0xff]
    %v1494 = vld [vmem:[%s6] sm:$0xf]
    %v1495 = vld [vmem:[%s6 + $0x4] sm:$0xf]
    %v1496 = vld [vmem:[%s6 + $0x8] sm:$0xf]
    %v1497 = vld [vmem:[%s6 + $0xc] sm:$0xf]
    %v1498 = vld [vmem:[%s6 + $0x10] sm:$0xf]
    %v1499 = vld [vmem:[%s6 + $0x14] sm:$0xf]
    %v1500 = vld [vmem:[%s6 + $0x18] sm:$0xf]
    %v1501 = vld [vmem:[%s6 + $0x1c] sm:$0xf]
    %v1502 = vld [vmem:[%s6 + $0x20] sm:$0xf]
    %v1503 = vld [vmem:[%s6 + $0x24] sm:$0xf]
    %v1504 = vld [vmem:[%s6 + $0x28] sm:$0xf]
    %v1505 = vld [vmem:[%s6 + $0x2c] sm:$0xf]
    %v1506 = vld [vmem:[%s6 + $0x30] sm:$0xf]
    %v1507 = vld [vmem:[%s6 + $0x34] sm:$0xf]
    %v1508 = vld [vmem:[%s6 + $0x38] sm:$0xf]
    %v1509 = vld [vmem:[%s6 + $0x3c] sm:$0xf]
    %v1510 = vld [vmem:[%s7] sm:$0x1]
    %v1511 = vpack.c.bf16 %v1491, %v1490
    %v1512 = vpack.c.bf16 %v1493, %v1492
    %v1514 = vlaneseq
    %v1515 = vshrl.u32 %v1514, 7
    %v1516 = vsub.s32 0, %v1515
    %v1517 = vrot.slane %v1510, %v1516
    %v1535 = vunpack.c.l.b16 %v1494
    %v1536 = vunpack.c.l.b16 %v1495
    %v1537 = vunpack.c.l.b16 %v1496
    %v1538 = vunpack.c.l.b16 %v1497
    %v1539 = vunpack.c.l.b16 %v1498
    %v1540 = vunpack.c.l.b16 %v1499
    %v1541 = vunpack.c.l.b16 %v1500
    %v1542 = vunpack.c.l.b16 %v1501
    %v1543 = vunpack.c.l.b16 %v1502
    %v1544 = vunpack.c.l.b16 %v1503
    %v1545 = vunpack.c.l.b16 %v1504
    %v1546 = vunpack.c.l.b16 %v1505
    %v1547 = vunpack.c.l.b16 %v1506
    %v1548 = vunpack.c.l.b16 %v1507
    %v1549 = vunpack.c.l.b16 %v1508
    %v1550 = vunpack.c.l.b16 %v1509
    %v1551 = vpack.c.b16 %v1536, %v1535
    %v1552 = vpack.c.b16 %v1538, %v1537
    %v1553 = vpack.c.b16 %v1540, %v1539
    %v1554 = vpack.c.b16 %v1542, %v1541
    %v1555 = vpack.c.b16 %v1544, %v1543
    %v1556 = vpack.c.b16 %v1546, %v1545
    %v1557 = vpack.c.b16 %v1548, %v1547
    %v1558 = vpack.c.b16 %v1550, %v1549
    %1567 = vmatprep.subr.bf16.mxu0 0
    %1568 = vmatpush1.bf16.msra.mxu0 %v1558
    %1569 = vmatprep.subr.bf16.mxu0 0
    %1570 = vmatpush1.bf16.msra.mxu0 %v1557
    %1571 = vmatprep.subr.bf16.mxu0 0
    %1572 = vmatpush1.bf16.msra.mxu0 %v1556
    %1573 = vmatprep.subr.bf16.mxu0 0
    %1574 = vmatpush1.bf16.msra.mxu0 %v1555
    %1575 = vmatprep.subr.bf16.mxu0 0
    %1576 = vmatpush1.bf16.msra.mxu0 %v1554
    %1577 = vmatprep.subr.bf16.mxu0 0
    %1578 = vmatpush1.bf16.msra.mxu0 %v1553
    %1579 = vmatprep.subr.bf16.mxu0 0
    %1580 = vmatpush1.bf16.msra.mxu0 %v1552
    %1581 = vmatprep.subr.bf16.mxu0 0
    %1582 = vmatpush1.bf16.msra.mxu0 %v1551
    %1583 = vmatprep.subr.bf16.mxu0 0
    %1584 = vmatpush2.bf16.msra.mxu0 0
    %1585 = vmatprep.subr.bf16.mxu0 0
    %1586 = vmatpush2.bf16.msra.mxu0 0
    %1587 = vmatprep.subr.bf16.mxu0 0
    %1588 = vmatpush2.bf16.msra.mxu0 0
    %1589 = vmatprep.subr.bf16.mxu0 0
    %1590 = vmatpush2.bf16.msra.mxu0 0
    %1591 = vmatprep.subr.bf16.mxu0 0
    %1592 = vmatpush2.bf16.msra.mxu0 0
    %1593 = vmatprep.subr.bf16.mxu0 0
    %1594 = vmatpush2.bf16.msra.mxu0 0
    %1595 = vmatprep.subr.bf16.mxu0 0
    %1596 = vmatpush2.bf16.msra.mxu0 0
    %1597 = vmatprep.subr.bf16.mxu0 0
    %1598 = vmatpush2.bf16.msra.mxu0 0
    %1599 = vmatprep.mubr.bf16.mxu0 0
    %1600 = vmatmul.mubr.bf16.gmra.mxu0 %v1511
    %v1601 = vpop.f32.mrf.mxu0
    %v1602 = vadd.f32 %v1517, %v1601
    %v1603 = vpop.f32.mrf.mxu0
    %v1604 = vpop.f32.mrf.mxu0
    %v1605 = vadd.f32 %v1517, %v1604
    %v1606 = vpop.f32.mrf.mxu0
    %1607 = vmatprep.mubr.bf16.mxu0 0
    %1608 = vmatmul.mubr.bf16.gmra.mxu0 %v1512
    %v1609 = vpop.f32.mrf.mxu0
    %v1610 = vadd.f32 %v1517, %v1609
    %v1611 = vpop.f32.mrf.mxu0
    %v1612 = vpop.f32.mrf.mxu0
    %v1613 = vadd.f32 %v1517, %v1612
    %v1614 = vpop.f32.mrf.mxu0
    %1615 = vdwg.mxu0
    %v1616 = vadd.f32 %v1602, %v155
    %v1617 = vadd.f32 %v1605, %v156
    %v1618 = vadd.f32 %v1610, %v157
    %v1619 = vadd.f32 %v1613, %v158
    %v1620 = vld [vmem:[%s8] sm:$0x1]
    %v1621 = vld [vmem:[%s9] sm:$0x1]
    %1622 = vadd.xlane.f32.xlu0 %v1616
    %v1623 = vpop.xlane.xlu0 %1622
    %1624 = vadd.xlane.f32.xlu0 %v1617
    %v1625 = vpop.xlane.xlu0 %1624
    %1626 = vadd.xlane.f32.xlu0 %v1618
    %v1627 = vpop.xlane.xlu0 %1626
    %1628 = vadd.xlane.f32.xlu0 %v1619
    %v1629 = vpop.xlane.xlu0 %1628
    %v1630 = vmul.f32 %v1623, %v102
    %v1631 = vmul.f32 %v1625, %v102
    %v1632 = vmul.f32 %v1627, %v102
    %v1633 = vmul.f32 %v1629, %v102
    %v1634 = vsub.f32 %v1616, %v1630
    %v1635 = vsub.f32 %v1617, %v1631
    %v1636 = vsub.f32 %v1618, %v1632
    %v1637 = vsub.f32 %v1619, %v1633
    %v1638 = vmul.f32 %v1634, %v1634
    %v1639 = vmul.f32 %v1635, %v1635
    %v1640 = vmul.f32 %v1636, %v1636
    %v1641 = vmul.f32 %v1637, %v1637
    %1642 = vadd.xlane.f32.xlu0 %v1638
    %v1643 = vpop.xlane.xlu0 %1642
    %1644 = vadd.xlane.f32.xlu0 %v1639
    %v1645 = vpop.xlane.xlu0 %1644
    %1646 = vadd.xlane.f32.xlu0 %v1640
    %v1647 = vpop.xlane.xlu0 %1646
    %1648 = vadd.xlane.f32.xlu0 %v1641
    %v1649 = vpop.xlane.xlu0 %1648
    %v1650 = vmul.f32 %v1643, %v102
    %v1651 = vmul.f32 %v1645, %v102
    %v1652 = vmul.f32 %v1647, %v102
    %v1653 = vmul.f32 %v1649, %v102
    %v1654 = vadd.f32 %v1650, 1e-12
    %v1655 = vadd.f32 %v1651, 1e-12
    %v1656 = vadd.f32 %v1652, 1e-12
    %v1657 = vadd.f32 %v1653, 1e-12
    %v1658 = vrsqrt.pop %v1654
    %v1659 = vrsqrt.pop %v1655
    %v1660 = vrsqrt.pop %v1656
    %v1661 = vrsqrt.pop %v1657
    %v1662 = vmul.f32 %v1634, %v1658
    %v1663 = vmul.f32 %v1635, %v1659
    %v1664 = vmul.f32 %v1636, %v1660
    %v1665 = vmul.f32 %v1637, %v1661
    %v1667 = vlaneseq
    %v1668 = vshrl.u32 %v1667, 7
    %v1669 = vsub.s32 0, %v1668
    %v1670 = vrot.slane %v1620, %v1669
    %v1672 = vmul.f32 %v1662, %v1670
    %v1673 = vmul.f32 %v1663, %v1670
    %v1674 = vmul.f32 %v1664, %v1670
    %v1675 = vmul.f32 %v1665, %v1670
    %v1677 = vlaneseq
    %v1678 = vshrl.u32 %v1677, 7
    %v1679 = vsub.s32 0, %v1678
    %v1680 = vrot.slane %v1621, %v1679
    %v1682 = vadd.f32 %v1672, %v1680
    %v1683 = vadd.f32 %v1673, %v1680
    %v1684 = vadd.f32 %v1674, %v1680
    %v1685 = vadd.f32 %v1675, %v1680
    %v1686 = vld [vmem:[#allocation3] sm:$0xff]
    %v1687 = vld [vmem:[#allocation3 + $0x8] sm:$0xff]
    %v1688 = vld [vmem:[#allocation3 + $0x10] sm:$0xff]
    %v1689 = vld [vmem:[#allocation3 + $0x18] sm:$0xff]
    %v1690 = vld [vmem:[#allocation3 + $0x20] sm:$0xff]
    %v1691 = vld [vmem:[#allocation3 + $0x28] sm:$0xff]
    %v1692 = vld [vmem:[#allocation3 + $0x30] sm:$0xff]
    %v1693 = vld [vmem:[#allocation3 + $0x38] sm:$0xff]
    %v1694 = vld [vmem:[#allocation3 + $0x40] sm:$0xff]
    %v1695 = vld [vmem:[#allocation3 + $0x48] sm:$0xff]
    %v1696 = vld [vmem:[#allocation3 + $0x50] sm:$0xff]
    %v1697 = vld [vmem:[#allocation3 + $0x58] sm:$0xff]
    %v1698 = vld [vmem:[#allocation3 + $0x60] sm:$0xff]
    %v1699 = vld [vmem:[#allocation3 + $0x68] sm:$0xff]
    %v1700 = vld [vmem:[#allocation3 + $0x70] sm:$0xff]
    %v1701 = vld [vmem:[#allocation3 + $0x78] sm:$0xff]
    %v1702 = vld [vmem:[#allocation3 + $0x80] sm:$0xff]
    %v1703 = vld [vmem:[#allocation3 + $0x88] sm:$0xff]
    %v1704 = vld [vmem:[#allocation3 + $0x90] sm:$0xff]
    %v1705 = vld [vmem:[#allocation3 + $0x98] sm:$0xff]
    %v1706 = vld [vmem:[#allocation3 + $0xa0] sm:$0xff]
    %v1707 = vld [vmem:[#allocation3 + $0xa8] sm:$0xff]
    %v1708 = vld [vmem:[#allocation3 + $0xb0] sm:$0xff]
    %v1709 = vld [vmem:[#allocation3 + $0xb8] sm:$0xff]
    %v1710 = vld [vmem:[#allocation3 + $0xc0] sm:$0xff]
    %v1711 = vld [vmem:[#allocation3 + $0xc8] sm:$0xff]
    %v1712 = vld [vmem:[#allocation3 + $0xd0] sm:$0xff]
    %v1713 = vld [vmem:[#allocation3 + $0xd8] sm:$0xff]
    %v1714 = vld [vmem:[#allocation3 + $0xe0] sm:$0xff]
    %v1715 = vld [vmem:[#allocation3 + $0xe8] sm:$0xff]
    %v1716 = vld [vmem:[#allocation3 + $0xf0] sm:$0xff]
    %v1717 = vld [vmem:[#allocation3 + $0xf8] sm:$0xff]
    %v1718 = vld [vmem:[%s11] sm:$0xf]
    %v1719 = vpack.c.bf16 %v1683, %v1682
    %v1720 = vpack.c.bf16 %v1685, %v1684
    %v1722 = vlaneseq
    %v1723 = vshrl.u32 %v1722, 7
    %v1724 = vsub.s32 0, %v1723
    %v1725 = vrot.slane %v1718, %v1724
    %v1726 = vlaneseq
    %v1727 = vshrl.u32 %v1726, 7
    %v1728 = vsub.s32 1, %v1727
    %v1729 = vrot.slane %v1718, %v1728
    %v1730 = vlaneseq
    %v1731 = vshrl.u32 %v1730, 7
    %v1732 = vsub.s32 2, %v1731
    %v1733 = vrot.slane %v1718, %v1732
    %v1734 = vlaneseq
    %v1735 = vshrl.u32 %v1734, 7
    %v1736 = vsub.s32 3, %v1735
    %v1737 = vrot.slane %v1718, %v1736
    %v1774 = vunpack.c.l.b16 %v1686
    %v1775 = vunpack.c.h.b16 %v1686
    %v1776 = vunpack.c.l.b16 %v1687
    %v1777 = vunpack.c.h.b16 %v1687
    %v1778 = vunpack.c.l.b16 %v1688
    %v1779 = vunpack.c.h.b16 %v1688
    %v1780 = vunpack.c.l.b16 %v1689
    %v1781 = vunpack.c.h.b16 %v1689
    %v1782 = vunpack.c.l.b16 %v1690
    %v1783 = vunpack.c.h.b16 %v1690
    %v1784 = vunpack.c.l.b16 %v1691
    %v1785 = vunpack.c.h.b16 %v1691
    %v1786 = vunpack.c.l.b16 %v1692
    %v1787 = vunpack.c.h.b16 %v1692
    %v1788 = vunpack.c.l.b16 %v1693
    %v1789 = vunpack.c.h.b16 %v1693
    %v1790 = vunpack.c.l.b16 %v1694
    %v1791 = vunpack.c.h.b16 %v1694
    %v1792 = vunpack.c.l.b16 %v1695
    %v1793 = vunpack.c.h.b16 %v1695
    %v1794 = vunpack.c.l.b16 %v1696
    %v1795 = vunpack.c.h.b16 %v1696
    %v1796 = vunpack.c.l.b16 %v1697
    %v1797 = vunpack.c.h.b16 %v1697
    %v1798 = vunpack.c.l.b16 %v1698
    %v1799 = vunpack.c.h.b16 %v1698
    %v1800 = vunpack.c.l.b16 %v1699
    %v1801 = vunpack.c.h.b16 %v1699
    %v1802 = vunpack.c.l.b16 %v1700
    %v1803 = vunpack.c.h.b16 %v1700
    %v1804 = vunpack.c.l.b16 %v1701
    %v1805 = vunpack.c.h.b16 %v1701
    %v1806 = vunpack.c.l.b16 %v1702
    %v1807 = vunpack.c.h.b16 %v1702
    %v1808 = vunpack.c.l.b16 %v1703
    %v1809 = vunpack.c.h.b16 %v1703
    %v1810 = vunpack.c.l.b16 %v1704
    %v1811 = vunpack.c.h.b16 %v1704
    %v1812 = vunpack.c.l.b16 %v1705
    %v1813 = vunpack.c.h.b16 %v1705
    %v1814 = vunpack.c.l.b16 %v1706
    %v1815 = vunpack.c.h.b16 %v1706
    %v1816 = vunpack.c.l.b16 %v1707
    %v1817 = vunpack.c.h.b16 %v1707
    %v1818 = vunpack.c.l.b16 %v1708
    %v1819 = vunpack.c.h.b16 %v1708
    %v1820 = vunpack.c.l.b16 %v1709
    %v1821 = vunpack.c.h.b16 %v1709
    %v1822 = vunpack.c.l.b16 %v1710
    %v1823 = vunpack.c.h.b16 %v1710
    %v1824 = vunpack.c.l.b16 %v1711
    %v1825 = vunpack.c.h.b16 %v1711
    %v1826 = vunpack.c.l.b16 %v1712
    %v1827 = vunpack.c.h.b16 %v1712
    %v1828 = vunpack.c.l.b16 %v1713
    %v1829 = vunpack.c.h.b16 %v1713
    %v1830 = vunpack.c.l.b16 %v1714
    %v1831 = vunpack.c.h.b16 %v1714
    %v1832 = vunpack.c.l.b16 %v1715
    %v1833 = vunpack.c.h.b16 %v1715
    %v1834 = vunpack.c.l.b16 %v1716
    %v1835 = vunpack.c.h.b16 %v1716
    %v1836 = vunpack.c.l.b16 %v1717
    %v1837 = vunpack.c.h.b16 %v1717
    %v1838 = vpack.c.b16 %v1778, %v1774
    %v1839 = vpack.c.b16 %v1779, %v1775
    %v1840 = vpack.c.b16 %v1780, %v1776
    %v1841 = vpack.c.b16 %v1781, %v1777
    %v1842 = vpack.c.b16 %v1786, %v1782
    %v1843 = vpack.c.b16 %v1787, %v1783
    %v1844 = vpack.c.b16 %v1788, %v1784
    %v1845 = vpack.c.b16 %v1789, %v1785
    %v1846 = vpack.c.b16 %v1794, %v1790
    %v1847 = vpack.c.b16 %v1795, %v1791
    %v1848 = vpack.c.b16 %v1796, %v1792
    %v1849 = vpack.c.b16 %v1797, %v1793
    %v1850 = vpack.c.b16 %v1802, %v1798
    %v1851 = vpack.c.b16 %v1803, %v1799
    %v1852 = vpack.c.b16 %v1804, %v1800
    %v1853 = vpack.c.b16 %v1805, %v1801
    %v1854 = vpack.c.b16 %v1810, %v1806
    %v1855 = vpack.c.b16 %v1811, %v1807
    %v1856 = vpack.c.b16 %v1812, %v1808
    %v1857 = vpack.c.b16 %v1813, %v1809
    %v1858 = vpack.c.b16 %v1818, %v1814
    %v1859 = vpack.c.b16 %v1819, %v1815
    %v1860 = vpack.c.b16 %v1820, %v1816
    %v1861 = vpack.c.b16 %v1821, %v1817
    %v1862 = vpack.c.b16 %v1826, %v1822
    %v1863 = vpack.c.b16 %v1827, %v1823
    %v1864 = vpack.c.b16 %v1828, %v1824
    %v1865 = vpack.c.b16 %v1829, %v1825
    %v1866 = vpack.c.b16 %v1834, %v1830
    %v1867 = vpack.c.b16 %v1835, %v1831
    %v1868 = vpack.c.b16 %v1836, %v1832
    %v1869 = vpack.c.b16 %v1837, %v1833
    %1902 = vmatprep.subr.bf16.mxu0 %v1867
    %1903 = vmatpush1.bf16.msra.mxu0 %v1866
    %1904 = vmatprep.subr.bf16.mxu0 %v1863
    %1905 = vmatpush1.bf16.msra.mxu0 %v1862
    %1906 = vmatprep.subr.bf16.mxu0 %v1859
    %1907 = vmatpush1.bf16.msra.mxu0 %v1858
    %1908 = vmatprep.subr.bf16.mxu0 %v1855
    %1909 = vmatpush1.bf16.msra.mxu0 %v1854
    %1910 = vmatprep.subr.bf16.mxu0 %v1851
    %1911 = vmatpush1.bf16.msra.mxu0 %v1850
    %1912 = vmatprep.subr.bf16.mxu0 %v1847
    %1913 = vmatpush1.bf16.msra.mxu0 %v1846
    %1914 = vmatprep.subr.bf16.mxu0 %v1843
    %1915 = vmatpush1.bf16.msra.mxu0 %v1842
    %1916 = vmatprep.subr.bf16.mxu0 %v1839
    %1917 = vmatpush1.bf16.msra.mxu0 %v1838
    %1918 = vmatprep.subr.bf16.mxu0 0
    %1919 = vmatpush2.bf16.msra.mxu0 0
    %1920 = vmatprep.subr.bf16.mxu0 0
    %1921 = vmatpush2.bf16.msra.mxu0 0
    %1922 = vmatprep.subr.bf16.mxu0 0
    %1923 = vmatpush2.bf16.msra.mxu0 0
    %1924 = vmatprep.subr.bf16.mxu0 0
    %1925 = vmatpush2.bf16.msra.mxu0 0
    %1926 = vmatprep.subr.bf16.mxu0 0
    %1927 = vmatpush2.bf16.msra.mxu0 0
    %1928 = vmatprep.subr.bf16.mxu0 0
    %1929 = vmatpush2.bf16.msra.mxu0 0
    %1930 = vmatprep.subr.bf16.mxu0 0
    %1931 = vmatpush2.bf16.msra.mxu0 0
    %1932 = vmatprep.subr.bf16.mxu0 0
    %1933 = vmatpush2.bf16.msra.mxu0 0
    %1934 = vmatprep.mubr.bf16.mxu0 0
    %1935 = vmatmul.mubr.bf16.gmra.mxu0 %v1719
    %v1936 = vpop.f32.mrf.mxu0
    %v1937 = vadd.f32 %v1725, %v1936
    %v1938 = vpop.f32.mrf.mxu0
    %v1939 = vadd.f32 %v1729, %v1938
    %v1940 = vpop.f32.mrf.mxu0
    %v1941 = vadd.f32 %v1725, %v1940
    %v1942 = vpop.f32.mrf.mxu0
    %v1943 = vadd.f32 %v1729, %v1942
    %1944 = vmatprep.mubr.bf16.mxu0 0
    %1945 = vmatmul.mubr.bf16.gmra.mxu0 %v1720
    %v1946 = vpop.f32.mrf.mxu0
    %v1947 = vadd.f32 %v1725, %v1946
    %v1948 = vpop.f32.mrf.mxu0
    %v1949 = vadd.f32 %v1729, %v1948
    %v1950 = vpop.f32.mrf.mxu0
    %v1951 = vadd.f32 %v1725, %v1950
    %v1952 = vpop.f32.mrf.mxu0
    %v1953 = vadd.f32 %v1729, %v1952
    %1954 = vdwg.mxu0
    %1955 = vmatprep.subr.bf16.mxu0 %v1869
    %1956 = vmatpush1.bf16.msra.mxu0 %v1868
    %1957 = vmatprep.subr.bf16.mxu0 %v1865
    %1958 = vmatpush1.bf16.msra.mxu0 %v1864
    %1959 = vmatprep.subr.bf16.mxu0 %v1861
    %1960 = vmatpush1.bf16.msra.mxu0 %v1860
    %1961 = vmatprep.subr.bf16.mxu0 %v1857
    %1962 = vmatpush1.bf16.msra.mxu0 %v1856
    %1963 = vmatprep.subr.bf16.mxu0 %v1853
    %1964 = vmatpush1.bf16.msra.mxu0 %v1852
    %1965 = vmatprep.subr.bf16.mxu0 %v1849
    %1966 = vmatpush1.bf16.msra.mxu0 %v1848
    %1967 = vmatprep.subr.bf16.mxu0 %v1845
    %1968 = vmatpush1.bf16.msra.mxu0 %v1844
    %1969 = vmatprep.subr.bf16.mxu0 %v1841
    %1970 = vmatpush1.bf16.msra.mxu0 %v1840
    %1971 = vmatprep.subr.bf16.mxu0 0
    %1972 = vmatpush2.bf16.msra.mxu0 0
    %1973 = vmatprep.subr.bf16.mxu0 0
    %1974 = vmatpush2.bf16.msra.mxu0 0
    %1975 = vmatprep.subr.bf16.mxu0 0
    %1976 = vmatpush2.bf16.msra.mxu0 0
    %1977 = vmatprep.subr.bf16.mxu0 0
    %1978 = vmatpush2.bf16.msra.mxu0 0
    %1979 = vmatprep.subr.bf16.mxu0 0
    %1980 = vmatpush2.bf16.msra.mxu0 0
    %1981 = vmatprep.subr.bf16.mxu0 0
    %1982 = vmatpush2.bf16.msra.mxu0 0
    %1983 = vmatprep.subr.bf16.mxu0 0
    %1984 = vmatpush2.bf16.msra.mxu0 0
    %1985 = vmatprep.subr.bf16.mxu0 0
    %1986 = vmatpush2.bf16.msra.mxu0 0
    %1987 = vmatprep.mubr.bf16.mxu0 0
    %1988 = vmatmul.mubr.bf16.gmra.mxu0 %v1719
    %v1989 = vpop.f32.mrf.mxu0
    %v1990 = vadd.f32 %v1733, %v1989
    %v1991 = vpop.f32.mrf.mxu0
    %v1992 = vadd.f32 %v1737, %v1991
    %v1993 = vpop.f32.mrf.mxu0
    %v1994 = vadd.f32 %v1733, %v1993
    %v1995 = vpop.f32.mrf.mxu0
    %v1996 = vadd.f32 %v1737, %v1995
    %1997 = vmatprep.mubr.bf16.mxu0 0
    %1998 = vmatmul.mubr.bf16.gmra.mxu0 %v1720
    %v1999 = vpop.f32.mrf.mxu0
    %v2000 = vadd.f32 %v1733, %v1999
    %v2001 = vpop.f32.mrf.mxu0
    %v2002 = vadd.f32 %v1737, %v2001
    %v2003 = vpop.f32.mrf.mxu0
    %v2004 = vadd.f32 %v1733, %v2003
    %v2005 = vpop.f32.mrf.mxu0
    %v2006 = vadd.f32 %v1737, %v2005
    %2007 = vdwg.mxu0
    %v2008 = vmul.f32 %v1937, %v1937
    %v2009 = vmul.f32 %v1939, %v1939
    %v2010 = vmul.f32 %v1990, %v1990
    %v2011 = vmul.f32 %v1992, %v1992
    %v2012 = vmul.f32 %v1941, %v1941
    %v2013 = vmul.f32 %v1943, %v1943
    %v2014 = vmul.f32 %v1994, %v1994
    %v2015 = vmul.f32 %v1996, %v1996
    %v2016 = vmul.f32 %v1947, %v1947
    %v2017 = vmul.f32 %v1949, %v1949
    %v2018 = vmul.f32 %v2000, %v2000
    %v2019 = vmul.f32 %v2002, %v2002
    %v2020 = vmul.f32 %v1951, %v1951
    %v2021 = vmul.f32 %v1953, %v1953
    %v2022 = vmul.f32 %v2004, %v2004
    %v2023 = vmul.f32 %v2006, %v2006
    %v2024 = vmul.f32 %v1937, %v2008
    %v2025 = vmul.f32 %v1939, %v2009
    %v2026 = vmul.f32 %v1990, %v2010
    %v2027 = vmul.f32 %v1992, %v2011
    %v2028 = vmul.f32 %v1941, %v2012
    %v2029 = vmul.f32 %v1943, %v2013
    %v2030 = vmul.f32 %v1994, %v2014
    %v2031 = vmul.f32 %v1996, %v2015
    %v2032 = vmul.f32 %v1947, %v2016
    %v2033 = vmul.f32 %v1949, %v2017
    %v2034 = vmul.f32 %v2000, %v2018
    %v2035 = vmul.f32 %v2002, %v2019
    %v2036 = vmul.f32 %v1951, %v2020
    %v2037 = vmul.f32 %v1953, %v2021
    %v2038 = vmul.f32 %v2004, %v2022
    %v2039 = vmul.f32 %v2006, %v2023
    %v2040 = vmul.f32 %v2024, 0.044715
    %v2041 = vmul.f32 %v2025, 0.044715
    %v2042 = vmul.f32 %v2026, 0.044715
    %v2043 = vmul.f32 %v2027, 0.044715
    %v2044 = vmul.f32 %v2028, 0.044715
    %v2045 = vmul.f32 %v2029, 0.044715
    %v2046 = vmul.f32 %v2030, 0.044715
    %v2047 = vmul.f32 %v2031, 0.044715
    %v2048 = vmul.f32 %v2032, 0.044715
    %v2049 = vmul.f32 %v2033, 0.044715
    %v2050 = vmul.f32 %v2034, 0.044715
    %v2051 = vmul.f32 %v2035, 0.044715
    %v2052 = vmul.f32 %v2036, 0.044715
    %v2053 = vmul.f32 %v2037, 0.044715
    %v2054 = vmul.f32 %v2038, 0.044715
    %v2055 = vmul.f32 %v2039, 0.044715
    %v2056 = vadd.f32 %v1937, %v2040
    %v2057 = vadd.f32 %v1939, %v2041
    %v2058 = vadd.f32 %v1990, %v2042
    %v2059 = vadd.f32 %v1992, %v2043
    %v2060 = vadd.f32 %v1941, %v2044
    %v2061 = vadd.f32 %v1943, %v2045
    %v2062 = vadd.f32 %v1994, %v2046
    %v2063 = vadd.f32 %v1996, %v2047
    %v2064 = vadd.f32 %v1947, %v2048
    %v2065 = vadd.f32 %v1949, %v2049
    %v2066 = vadd.f32 %v2000, %v2050
    %v2067 = vadd.f32 %v2002, %v2051
    %v2068 = vadd.f32 %v1951, %v2052
    %v2069 = vadd.f32 %v1953, %v2053
    %v2070 = vadd.f32 %v2004, %v2054
    %v2071 = vadd.f32 %v2006, %v2055
    %v2072 = vmul.f32 %v2056, 0.7978846
    %v2073 = vmul.f32 %v2057, 0.7978846
    %v2074 = vmul.f32 %v2058, 0.7978846
    %v2075 = vmul.f32 %v2059, 0.7978846
    %v2076 = vmul.f32 %v2060, 0.7978846
    %v2077 = vmul.f32 %v2061, 0.7978846
    %v2078 = vmul.f32 %v2062, 0.7978846
    %v2079 = vmul.f32 %v2063, 0.7978846
    %v2080 = vmul.f32 %v2064, 0.7978846
    %v2081 = vmul.f32 %v2065, 0.7978846
    %v2082 = vmul.f32 %v2066, 0.7978846
    %v2083 = vmul.f32 %v2067, 0.7978846
    %v2084 = vmul.f32 %v2068, 0.7978846
    %v2085 = vmul.f32 %v2069, 0.7978846
    %v2086 = vmul.f32 %v2070, 0.7978846
    %v2087 = vmul.f32 %v2071, 0.7978846
    %v2088 = vtanh.pop %v2072
    %v2089 = vtanh.pop %v2073
    %v2090 = vtanh.pop %v2074
    %v2091 = vtanh.pop %v2075
    %v2092 = vtanh.pop %v2076
    %v2093 = vtanh.pop %v2077
    %v2094 = vtanh.pop %v2078
    %v2095 = vtanh.pop %v2079
    %v2096 = vtanh.pop %v2080
    %v2097 = vtanh.pop %v2081
    %v2098 = vtanh.pop %v2082
    %v2099 = vtanh.pop %v2083
    %v2100 = vtanh.pop %v2084
    %v2101 = vtanh.pop %v2085
    %v2102 = vtanh.pop %v2086
    %v2103 = vtanh.pop %v2087
    %v2104 = vadd.f32 %v2088, 1.0
    %v2105 = vadd.f32 %v2089, 1.0
    %v2106 = vadd.f32 %v2090, 1.0
    %v2107 = vadd.f32 %v2091, 1.0
    %v2108 = vadd.f32 %v2092, 1.0
    %v2109 = vadd.f32 %v2093, 1.0
    %v2110 = vadd.f32 %v2094, 1.0
    %v2111 = vadd.f32 %v2095, 1.0
    %v2112 = vadd.f32 %v2096, 1.0
    %v2113 = vadd.f32 %v2097, 1.0
    %v2114 = vadd.f32 %v2098, 1.0
    %v2115 = vadd.f32 %v2099, 1.0
    %v2116 = vadd.f32 %v2100, 1.0
    %v2117 = vadd.f32 %v2101, 1.0
    %v2118 = vadd.f32 %v2102, 1.0
    %v2119 = vadd.f32 %v2103, 1.0
    %v2120 = vmul.f32 %v2104, 0.5
    %v2121 = vmul.f32 %v2105, 0.5
    %v2122 = vmul.f32 %v2106, 0.5
    %v2123 = vmul.f32 %v2107, 0.5
    %v2124 = vmul.f32 %v2108, 0.5
    %v2125 = vmul.f32 %v2109, 0.5
    %v2126 = vmul.f32 %v2110, 0.5
    %v2127 = vmul.f32 %v2111, 0.5
    %v2128 = vmul.f32 %v2112, 0.5
    %v2129 = vmul.f32 %v2113, 0.5
    %v2130 = vmul.f32 %v2114, 0.5
    %v2131 = vmul.f32 %v2115, 0.5
    %v2132 = vmul.f32 %v2116, 0.5
    %v2133 = vmul.f32 %v2117, 0.5
    %v2134 = vmul.f32 %v2118, 0.5
    %v2135 = vmul.f32 %v2119, 0.5
    %v2136 = vmul.f32 %v1937, %v2120
    %v2137 = vmul.f32 %v1939, %v2121
    %v2138 = vmul.f32 %v1990, %v2122
    %v2139 = vmul.f32 %v1992, %v2123
    %v2140 = vmul.f32 %v1941, %v2124
    %v2141 = vmul.f32 %v1943, %v2125
    %v2142 = vmul.f32 %v1994, %v2126
    %v2143 = vmul.f32 %v1996, %v2127
    %v2144 = vmul.f32 %v1947, %v2128
    %v2145 = vmul.f32 %v1949, %v2129
    %v2146 = vmul.f32 %v2000, %v2130
    %v2147 = vmul.f32 %v2002, %v2131
    %v2148 = vmul.f32 %v1951, %v2132
    %v2149 = vmul.f32 %v1953, %v2133
    %v2150 = vmul.f32 %v2004, %v2134
    %v2151 = vmul.f32 %v2006, %v2135
    %v2152 = vld [vmem:[#allocation5] sm:$0xf]
    %v2153 = vld [vmem:[#allocation5 + $0x4] sm:$0xf]
    %v2154 = vld [vmem:[#allocation5 + $0x8] sm:$0xf]
    %v2155 = vld [vmem:[#allocation5 + $0xc] sm:$0xf]
    %v2156 = vld [vmem:[#allocation5 + $0x10] sm:$0xf]
    %v2157 = vld [vmem:[#allocation5 + $0x14] sm:$0xf]
    %v2158 = vld [vmem:[#allocation5 + $0x18] sm:$0xf]
    %v2159 = vld [vmem:[#allocation5 + $0x1c] sm:$0xf]
    %v2160 = vld [vmem:[#allocation5 + $0x20] sm:$0xf]
    %v2161 = vld [vmem:[#allocation5 + $0x24] sm:$0xf]
    %v2162 = vld [vmem:[#allocation5 + $0x28] sm:$0xf]
    %v2163 = vld [vmem:[#allocation5 + $0x2c] sm:$0xf]
    %v2164 = vld [vmem:[#allocation5 + $0x30] sm:$0xf]
    %v2165 = vld [vmem:[#allocation5 + $0x34] sm:$0xf]
    %v2166 = vld [vmem:[#allocation5 + $0x38] sm:$0xf]
    %v2167 = vld [vmem:[#allocation5 + $0x3c] sm:$0xf]
    %v2168 = vld [vmem:[#allocation5 + $0x40] sm:$0xf]
    %v2169 = vld [vmem:[#allocation5 + $0x44] sm:$0xf]
    %v2170 = vld [vmem:[#allocation5 + $0x48] sm:$0xf]
    %v2171 = vld [vmem:[#allocation5 + $0x4c] sm:$0xf]
    %v2172 = vld [vmem:[#allocation5 + $0x50] sm:$0xf]
    %v2173 = vld [vmem:[#allocation5 + $0x54] sm:$0xf]
    %v2174 = vld [vmem:[#allocation5 + $0x58] sm:$0xf]
    %v2175 = vld [vmem:[#allocation5 + $0x5c] sm:$0xf]
    %v2176 = vld [vmem:[#allocation5 + $0x60] sm:$0xf]
    %v2177 = vld [vmem:[#allocation5 + $0x64] sm:$0xf]
    %v2178 = vld [vmem:[#allocation5 + $0x68] sm:$0xf]
    %v2179 = vld [vmem:[#allocation5 + $0x6c] sm:$0xf]
    %v2180 = vld [vmem:[#allocation5 + $0x70] sm:$0xf]
    %v2181 = vld [vmem:[#allocation5 + $0x74] sm:$0xf]
    %v2182 = vld [vmem:[#allocation5 + $0x78] sm:$0xf]
    %v2183 = vld [vmem:[#allocation5 + $0x7c] sm:$0xf]
    %v2184 = vld [vmem:[#allocation5 + $0x80] sm:$0xf]
    %v2185 = vld [vmem:[#allocation5 + $0x84] sm:$0xf]
    %v2186 = vld [vmem:[#allocation5 + $0x88] sm:$0xf]
    %v2187 = vld [vmem:[#allocation5 + $0x8c] sm:$0xf]
    %v2188 = vld [vmem:[#allocation5 + $0x90] sm:$0xf]
    %v2189 = vld [vmem:[#allocation5 + $0x94] sm:$0xf]
    %v2190 = vld [vmem:[#allocation5 + $0x98] sm:$0xf]
    %v2191 = vld [vmem:[#allocation5 + $0x9c] sm:$0xf]
    %v2192 = vld [vmem:[#allocation5 + $0xa0] sm:$0xf]
    %v2193 = vld [vmem:[#allocation5 + $0xa4] sm:$0xf]
    %v2194 = vld [vmem:[#allocation5 + $0xa8] sm:$0xf]
    %v2195 = vld [vmem:[#allocation5 + $0xac] sm:$0xf]
    %v2196 = vld [vmem:[#allocation5 + $0xb0] sm:$0xf]
    %v2197 = vld [vmem:[#allocation5 + $0xb4] sm:$0xf]
    %v2198 = vld [vmem:[#allocation5 + $0xb8] sm:$0xf]
    %v2199 = vld [vmem:[#allocation5 + $0xbc] sm:$0xf]
    %v2200 = vld [vmem:[#allocation5 + $0xc0] sm:$0xf]
    %v2201 = vld [vmem:[#allocation5 + $0xc4] sm:$0xf]
    %v2202 = vld [vmem:[#allocation5 + $0xc8] sm:$0xf]
    %v2203 = vld [vmem:[#allocation5 + $0xcc] sm:$0xf]
    %v2204 = vld [vmem:[#allocation5 + $0xd0] sm:$0xf]
    %v2205 = vld [vmem:[#allocation5 + $0xd4] sm:$0xf]
    %v2206 = vld [vmem:[#allocation5 + $0xd8] sm:$0xf]
    %v2207 = vld [vmem:[#allocation5 + $0xdc] sm:$0xf]
    %v2208 = vld [vmem:[#allocation5 + $0xe0] sm:$0xf]
    %v2209 = vld [vmem:[#allocation5 + $0xe4] sm:$0xf]
    %v2210 = vld [vmem:[#allocation5 + $0xe8] sm:$0xf]
    %v2211 = vld [vmem:[#allocation5 + $0xec] sm:$0xf]
    %v2212 = vld [vmem:[#allocation5 + $0xf0] sm:$0xf]
    %v2213 = vld [vmem:[#allocation5 + $0xf4] sm:$0xf]
    %v2214 = vld [vmem:[#allocation5 + $0xf8] sm:$0xf]
    %v2215 = vld [vmem:[#allocation5 + $0xfc] sm:$0xf]
    %v2216 = vld [vmem:[%s13] sm:$0x1]
    %v2217 = vpack.c.bf16 %v2140, %v2136
    %v2218 = vpack.c.bf16 %v2141, %v2137
    %v2219 = vpack.c.bf16 %v2142, %v2138
    %v2220 = vpack.c.bf16 %v2143, %v2139
    %v2221 = vpack.c.bf16 %v2148, %v2144
    %v2222 = vpack.c.bf16 %v2149, %v2145
    %v2223 = vpack.c.bf16 %v2150, %v2146
    %v2224 = vpack.c.bf16 %v2151, %v2147
    %v2226 = vlaneseq
    %v2227 = vshrl.u32 %v2226, 7
    %v2228 = vsub.s32 0, %v2227
    %v2229 = vrot.slane %v2216, %v2228
    %v2295 = vunpack.c.l.b16 %v2152
    %v2296 = vunpack.c.l.b16 %v2153
    %v2297 = vunpack.c.l.b16 %v2154
    %v2298 = vunpack.c.l.b16 %v2155
    %v2299 = vunpack.c.l.b16 %v2156
    %v2300 = vunpack.c.l.b16 %v2157
    %v2301 = vunpack.c.l.b16 %v2158
    %v2302 = vunpack.c.l.b16 %v2159
    %v2303 = vunpack.c.l.b16 %v2160
    %v2304 = vunpack.c.l.b16 %v2161
    %v2305 = vunpack.c.l.b16 %v2162
    %v2306 = vunpack.c.l.b16 %v2163
    %v2307 = vunpack.c.l.b16 %v2164
    %v2308 = vunpack.c.l.b16 %v2165
    %v2309 = vunpack.c.l.b16 %v2166
    %v2310 = vunpack.c.l.b16 %v2167
    %v2311 = vunpack.c.l.b16 %v2168
    %v2312 = vunpack.c.l.b16 %v2169
    %v2313 = vunpack.c.l.b16 %v2170
    %v2314 = vunpack.c.l.b16 %v2171
    %v2315 = vunpack.c.l.b16 %v2172
    %v2316 = vunpack.c.l.b16 %v2173
    %v2317 = vunpack.c.l.b16 %v2174
    %v2318 = vunpack.c.l.b16 %v2175
    %v2319 = vunpack.c.l.b16 %v2176
    %v2320 = vunpack.c.l.b16 %v2177
    %v2321 = vunpack.c.l.b16 %v2178
    %v2322 = vunpack.c.l.b16 %v2179
    %v2323 = vunpack.c.l.b16 %v2180
    %v2324 = vunpack.c.l.b16 %v2181
    %v2325 = vunpack.c.l.b16 %v2182
    %v2326 = vunpack.c.l.b16 %v2183
    %v2327 = vunpack.c.l.b16 %v2184
    %v2328 = vunpack.c.l.b16 %v2185
    %v2329 = vunpack.c.l.b16 %v2186
    %v2330 = vunpack.c.l.b16 %v2187
    %v2331 = vunpack.c.l.b16 %v2188
    %v2332 = vunpack.c.l.b16 %v2189
    %v2333 = vunpack.c.l.b16 %v2190
    %v2334 = vunpack.c.l.b16 %v2191
    %v2335 = vunpack.c.l.b16 %v2192
    %v2336 = vunpack.c.l.b16 %v2193
    %v2337 = vunpack.c.l.b16 %v2194
    %v2338 = vunpack.c.l.b16 %v2195
    %v2339 = vunpack.c.l.b16 %v2196
    %v2340 = vunpack.c.l.b16 %v2197
    %v2341 = vunpack.c.l.b16 %v2198
    %v2342 = vunpack.c.l.b16 %v2199
    %v2343 = vunpack.c.l.b16 %v2200
    %v2344 = vunpack.c.l.b16 %v2201
    %v2345 = vunpack.c.l.b16 %v2202
    %v2346 = vunpack.c.l.b16 %v2203
    %v2347 = vunpack.c.l.b16 %v2204
    %v2348 = vunpack.c.l.b16 %v2205
    %v2349 = vunpack.c.l.b16 %v2206
    %v2350 = vunpack.c.l.b16 %v2207
    %v2351 = vunpack.c.l.b16 %v2208
    %v2352 = vunpack.c.l.b16 %v2209
    %v2353 = vunpack.c.l.b16 %v2210
    %v2354 = vunpack.c.l.b16 %v2211
    %v2355 = vunpack.c.l.b16 %v2212
    %v2356 = vunpack.c.l.b16 %v2213
    %v2357 = vunpack.c.l.b16 %v2214
    %v2358 = vunpack.c.l.b16 %v2215
    %v2359 = vpack.c.b16 %v2296, %v2295
    %v2360 = vpack.c.b16 %v2298, %v2297
    %v2361 = vpack.c.b16 %v2300, %v2299
    %v2362 = vpack.c.b16 %v2302, %v2301
    %v2363 = vpack.c.b16 %v2304, %v2303
    %v2364 = vpack.c.b16 %v2306, %v2305
    %v2365 = vpack.c.b16 %v2308, %v2307
    %v2366 = vpack.c.b16 %v2310, %v2309
    %v2367 = vpack.c.b16 %v2312, %v2311
    %v2368 = vpack.c.b16 %v2314, %v2313
    %v2369 = vpack.c.b16 %v2316, %v2315
    %v2370 = vpack.c.b16 %v2318, %v2317
    %v2371 = vpack.c.b16 %v2320, %v2319
    %v2372 = vpack.c.b16 %v2322, %v2321
    %v2373 = vpack.c.b16 %v2324, %v2323
    %v2374 = vpack.c.b16 %v2326, %v2325
    %v2375 = vpack.c.b16 %v2328, %v2327
    %v2376 = vpack.c.b16 %v2330, %v2329
    %v2377 = vpack.c.b16 %v2332, %v2331
    %v2378 = vpack.c.b16 %v2334, %v2333
    %v2379 = vpack.c.b16 %v2336, %v2335
    %v2380 = vpack.c.b16 %v2338, %v2337
    %v2381 = vpack.c.b16 %v2340, %v2339
    %v2382 = vpack.c.b16 %v2342, %v2341
    %v2383 = vpack.c.b16 %v2344, %v2343
    %v2384 = vpack.c.b16 %v2346, %v2345
    %v2385 = vpack.c.b16 %v2348, %v2347
    %v2386 = vpack.c.b16 %v2350, %v2349
    %v2387 = vpack.c.b16 %v2352, %v2351
    %v2388 = vpack.c.b16 %v2354, %v2353
    %v2389 = vpack.c.b16 %v2356, %v2355
    %v2390 = vpack.c.b16 %v2358, %v2357
    %2423 = vmatprep.subr.bf16.mxu0 0
    %2424 = vmatpush1.bf16.msra.mxu0 %v2366
    %2425 = vmatprep.subr.bf16.mxu0 0
    %2426 = vmatpush1.bf16.msra.mxu0 %v2365
    %2427 = vmatprep.subr.bf16.mxu0 0
    %2428 = vmatpush1.bf16.msra.mxu0 %v2364
    %2429 = vmatprep.subr.bf16.mxu0 0
    %2430 = vmatpush1.bf16.msra.mxu0 %v2363
    %2431 = vmatprep.subr.bf16.mxu0 0
    %2432 = vmatpush1.bf16.msra.mxu0 %v2362
    %2433 = vmatprep.subr.bf16.mxu0 0
    %2434 = vmatpush1.bf16.msra.mxu0 %v2361
    %2435 = vmatprep.subr.bf16.mxu0 0
    %2436 = vmatpush1.bf16.msra.mxu0 %v2360
    %2437 = vmatprep.subr.bf16.mxu0 0
    %2438 = vmatpush1.bf16.msra.mxu0 %v2359
    %2439 = vmatprep.subr.bf16.mxu0 0
    %2440 = vmatpush2.bf16.msra.mxu0 %v2374
    %2441 = vmatprep.subr.bf16.mxu0 0
    %2442 = vmatpush2.bf16.msra.mxu0 %v2373
    %2443 = vmatprep.subr.bf16.mxu0 0
    %2444 = vmatpush2.bf16.msra.mxu0 %v2372
    %2445 = vmatprep.subr.bf16.mxu0 0
    %2446 = vmatpush2.bf16.msra.mxu0 %v2371
    %2447 = vmatprep.subr.bf16.mxu0 0
    %2448 = vmatpush2.bf16.msra.mxu0 %v2370
    %2449 = vmatprep.subr.bf16.mxu0 0
    %2450 = vmatpush2.bf16.msra.mxu0 %v2369
    %2451 = vmatprep.subr.bf16.mxu0 0
    %2452 = vmatpush2.bf16.msra.mxu0 %v2368
    %2453 = vmatprep.subr.bf16.mxu0 0
    %2454 = vmatpush2.bf16.msra.mxu0 %v2367
    %2455 = vmatprep.mubr.bf16.mxu0 %v2218
    %2456 = vmatmul.mubr.bf16.gmra.mxu0 %v2217
    %v2457 = vpop.f32.mrf.mxu0
    %v2458 = vadd.f32 %v2229, %v2457
    %v2459 = vpop.f32.mrf.mxu0
    %v2460 = vpop.f32.mrf.mxu0
    %v2461 = vadd.f32 %v2229, %v2460
    %v2462 = vpop.f32.mrf.mxu0
    %2463 = vmatprep.mubr.bf16.mxu0 %v2222
    %2464 = vmatmul.mubr.bf16.gmra.mxu0 %v2221
    %v2465 = vpop.f32.mrf.mxu0
    %v2466 = vadd.f32 %v2229, %v2465
    %v2467 = vpop.f32.mrf.mxu0
    %v2468 = vpop.f32.mrf.mxu0
    %v2469 = vadd.f32 %v2229, %v2468
    %v2470 = vpop.f32.mrf.mxu0
    %2471 = vdwg.mxu0
    %2472 = vmatprep.subr.bf16.mxu0 0
    %2473 = vmatpush1.bf16.msra.mxu0 %v2382
    %2474 = vmatprep.subr.bf16.mxu0 0
    %2475 = vmatpush1.bf16.msra.mxu0 %v2381
    %2476 = vmatprep.subr.bf16.mxu0 0
    %2477 = vmatpush1.bf16.msra.mxu0 %v2380
    %2478 = vmatprep.subr.bf16.mxu0 0
    %2479 = vmatpush1.bf16.msra.mxu0 %v2379
    %2480 = vmatprep.subr.bf16.mxu0 0
    %2481 = vmatpush1.bf16.msra.mxu0 %v2378
    %2482 = vmatprep.subr.bf16.mxu0 0
    %2483 = vmatpush1.bf16.msra.mxu0 %v2377
    %2484 = vmatprep.subr.bf16.mxu0 0
    %2485 = vmatpush1.bf16.msra.mxu0 %v2376
    %2486 = vmatprep.subr.bf16.mxu0 0
    %2487 = vmatpush1.bf16.msra.mxu0 %v2375
    %2488 = vmatprep.subr.bf16.mxu0 0
    %2489 = vmatpush2.bf16.msra.mxu0 %v2390
    %2490 = vmatprep.subr.bf16.mxu0 0
    %2491 = vmatpush2.bf16.msra.mxu0 %v2389
    %2492 = vmatprep.subr.bf16.mxu0 0
    %2493 = vmatpush2.bf16.msra.mxu0 %v2388
    %2494 = vmatprep.subr.bf16.mxu0 0
    %2495 = vmatpush2.bf16.msra.mxu0 %v2387
    %2496 = vmatprep.subr.bf16.mxu0 0
    %2497 = vmatpush2.bf16.msra.mxu0 %v2386
    %2498 = vmatprep.subr.bf16.mxu0 0
    %2499 = vmatpush2.bf16.msra.mxu0 %v2385
    %2500 = vmatprep.subr.bf16.mxu0 0
    %2501 = vmatpush2.bf16.msra.mxu0 %v2384
    %2502 = vmatprep.subr.bf16.mxu0 0
    %2503 = vmatpush2.bf16.msra.mxu0 %v2383
    %2504 = vmatprep.mubr.bf16.mxu0 %v2220
    %2505 = vmatmul.mubr.bf16.gmra.mxu0 %v2219
    %v2506 = vpop.f32.mrf.mxu0
    %v2507 = vadd.f32 %v2458, %v2506
    %v2508 = vpop.f32.mrf.mxu0
    %v2509 = vpop.f32.mrf.mxu0
    %v2510 = vadd.f32 %v2461, %v2509
    %v2511 = vpop.f32.mrf.mxu0
    %2512 = vmatprep.mubr.bf16.mxu0 %v2224
    %2513 = vmatmul.mubr.bf16.gmra.mxu0 %v2223
    %v2514 = vpop.f32.mrf.mxu0
    %v2515 = vadd.f32 %v2466, %v2514
    %v2516 = vpop.f32.mrf.mxu0
    %v2517 = vpop.f32.mrf.mxu0
    %v2518 = vadd.f32 %v2469, %v2517
    %v2519 = vpop.f32.mrf.mxu0
    %2520 = vdwg.mxu0
    %v2521 = vadd.f32 %v2507, %v1682
    %v2522 = vadd.f32 %v2510, %v1683
    %v2523 = vadd.f32 %v2515, %v1684
    %v2524 = vadd.f32 %v2518, %v1685
    %v2525 = vld [vmem:[%s14] sm:$0x1]
    %v2526 = vld [vmem:[%s15] sm:$0x1]
    %2527 = vadd.xlane.f32.xlu0 %v2521
    %v2528 = vpop.xlane.xlu0 %2527
    %2529 = vadd.xlane.f32.xlu0 %v2522
    %v2530 = vpop.xlane.xlu0 %2529
    %2531 = vadd.xlane.f32.xlu0 %v2523
    %v2532 = vpop.xlane.xlu0 %2531
    %2533 = vadd.xlane.f32.xlu0 %v2524
    %v2534 = vpop.xlane.xlu0 %2533
    %v2535 = vmul.f32 %v2528, %v102
    %v2536 = vmul.f32 %v2530, %v102
    %v2537 = vmul.f32 %v2532, %v102
    %v2538 = vmul.f32 %v2534, %v102
    %v2539 = vsub.f32 %v2521, %v2535
    %v2540 = vsub.f32 %v2522, %v2536
    %v2541 = vsub.f32 %v2523, %v2537
    %v2542 = vsub.f32 %v2524, %v2538
    %v2543 = vmul.f32 %v2539, %v2539
    %v2544 = vmul.f32 %v2540, %v2540
    %v2545 = vmul.f32 %v2541, %v2541
    %v2546 = vmul.f32 %v2542, %v2542
    %2547 = vadd.xlane.f32.xlu0 %v2543
    %v2548 = vpop.xlane.xlu0 %2547
    %2549 = vadd.xlane.f32.xlu0 %v2544
    %v2550 = vpop.xlane.xlu0 %2549
    %2551 = vadd.xlane.f32.xlu0 %v2545
    %v2552 = vpop.xlane.xlu0 %2551
    %2553 = vadd.xlane.f32.xlu0 %v2546
    %v2554 = vpop.xlane.xlu0 %2553
    %v2555 = vmul.f32 %v2548, %v102
    %v2556 = vmul.f32 %v2550, %v102
    %v2557 = vmul.f32 %v2552, %v102
    %v2558 = vmul.f32 %v2554, %v102
    %v2559 = vadd.f32 %v2555, 1e-12
    %v2560 = vadd.f32 %v2556, 1e-12
    %v2561 = vadd.f32 %v2557, 1e-12
    %v2562 = vadd.f32 %v2558, 1e-12
    %v2563 = vrsqrt.pop %v2559
    %v2564 = vrsqrt.pop %v2560
    %v2565 = vrsqrt.pop %v2561
    %v2566 = vrsqrt.pop %v2562
    %v2567 = vmul.f32 %v2539, %v2563
    %v2568 = vmul.f32 %v2540, %v2564
    %v2569 = vmul.f32 %v2541, %v2565
    %v2570 = vmul.f32 %v2542, %v2566
    %v2572 = vlaneseq
    %v2573 = vshrl.u32 %v2572, 7
    %v2574 = vsub.s32 0, %v2573
    %v2575 = vrot.slane %v2525, %v2574
    %v2577 = vmul.f32 %v2567, %v2575
    %v2578 = vmul.f32 %v2568, %v2575
    %v2579 = vmul.f32 %v2569, %v2575
    %v2580 = vmul.f32 %v2570, %v2575
    %v2582 = vlaneseq
    %v2583 = vshrl.u32 %v2582, 7
    %v2584 = vsub.s32 0, %v2583
    %v2585 = vrot.slane %v2526, %v2584
    %v2587 = vadd.f32 %v2577, %v2585
    %v2588 = vadd.f32 %v2578, %v2585
    %v2589 = vadd.f32 %v2579, %v2585
    %v2590 = vadd.f32 %v2580, %v2585
    %s2591 = scalar_lea.vmem %s4, 192
    %v2592 = vld [vmem:[%s2591] sm:$0xff]
    %v2593 = vld [vmem:[%s2591 + $0x8] sm:$0xf]
    %v2594 = vld [vmem:[%s2591 + $0xc] sm:$0xff]
    %v2595 = vld [vmem:[%s2591 + $0x14] sm:$0xf]
    %v2596 = vld [vmem:[%s2591 + $0x18] sm:$0xff]
    %v2597 = vld [vmem:[%s2591 + $0x20] sm:$0xf]
    %v2598 = vld [vmem:[%s2591 + $0x24] sm:$0xff]
    %v2599 = vld [vmem:[%s2591 + $0x2c] sm:$0xf]
    %v2600 = vld [vmem:[%s2591 + $0x30] sm:$0xff]
    %v2601 = vld [vmem:[%s2591 + $0x38] sm:$0xf]
    %v2602 = vld [vmem:[%s2591 + $0x3c] sm:$0xff]
    %v2603 = vld [vmem:[%s2591 + $0x44] sm:$0xf]
    %v2604 = vld [vmem:[%s2591 + $0x48] sm:$0xff]
    %v2605 = vld [vmem:[%s2591 + $0x50] sm:$0xf]
    %v2606 = vld [vmem:[%s2591 + $0x54] sm:$0xff]
    %v2607 = vld [vmem:[%s2591 + $0x5c] sm:$0xf]
    %v2608 = vld [vmem:[%s2591 + $0x60] sm:$0xff]
    %v2609 = vld [vmem:[%s2591 + $0x68] sm:$0xf]
    %v2610 = vld [vmem:[%s2591 + $0x6c] sm:$0xff]
    %v2611 = vld [vmem:[%s2591 + $0x74] sm:$0xf]
    %v2612 = vld [vmem:[%s2591 + $0x78] sm:$0xff]
    %v2613 = vld [vmem:[%s2591 + $0x80] sm:$0xf]
    %v2614 = vld [vmem:[%s2591 + $0x84] sm:$0xff]
    %v2615 = vld [vmem:[%s2591 + $0x8c] sm:$0xf]
    %v2616 = vld [vmem:[%s2591 + $0x90] sm:$0xff]
    %v2617 = vld [vmem:[%s2591 + $0x98] sm:$0xf]
    %v2618 = vld [vmem:[%s2591 + $0x9c] sm:$0xff]
    %v2619 = vld [vmem:[%s2591 + $0xa4] sm:$0xf]
    %v2620 = vld [vmem:[%s2591 + $0xa8] sm:$0xff]
    %v2621 = vld [vmem:[%s2591 + $0xb0] sm:$0xf]
    %v2622 = vld [vmem:[%s2591 + $0xb4] sm:$0xff]
    %v2623 = vld [vmem:[%s2591 + $0xbc] sm:$0xf]
    %s2624 = scalar_lea.vmem %s5, 3
    %v2625 = vld [vmem:[%s2624] sm:$0x7]
    %v2626 = vpack.c.bf16 %v2588, %v2587
    %v2627 = vpack.c.bf16 %v2590, %v2589
    %v2629 = vlaneseq
    %v2630 = vshrl.u32 %v2629, 7
    %v2631 = vsub.s32 0, %v2630
    %v2632 = vrot.slane %v2625, %v2631
    %v2633 = vlaneseq
    %v2634 = vshrl.u32 %v2633, 7
    %v2635 = vsub.s32 1, %v2634
    %v2636 = vrot.slane %v2625, %v2635
    %v2637 = vlaneseq
    %v2638 = vshrl.u32 %v2637, 7
    %v2639 = vsub.s32 2, %v2638
    %v2640 = vrot.slane %v2625, %v2639
    %v2676 = vunpack.c.l.b16 %v2592
    %v2677 = vunpack.c.h.b16 %v2592
    %v2678 = vunpack.c.l.b16 %v2593
    %v2679 = vunpack.c.l.b16 %v2594
    %v2680 = vunpack.c.h.b16 %v2594
    %v2681 = vunpack.c.l.b16 %v2595
    %v2682 = vunpack.c.l.b16 %v2596
    %v2683 = vunpack.c.h.b16 %v2596
    %v2684 = vunpack.c.l.b16 %v2597
    %v2685 = vunpack.c.l.b16 %v2598
    %v2686 = vunpack.c.h.b16 %v2598
    %v2687 = vunpack.c.l.b16 %v2599
    %v2688 = vunpack.c.l.b16 %v2600
    %v2689 = vunpack.c.h.b16 %v2600
    %v2690 = vunpack.c.l.b16 %v2601
    %v2691 = vunpack.c.l.b16 %v2602
    %v2692 = vunpack.c.h.b16 %v2602
    %v2693 = vunpack.c.l.b16 %v2603
    %v2694 = vunpack.c.l.b16 %v2604
    %v2695 = vunpack.c.h.b16 %v2604
    %v2696 = vunpack.c.l.b16 %v2605
    %v2697 = vunpack.c.l.b16 %v2606
    %v2698 = vunpack.c.h.b16 %v2606
    %v2699 = vunpack.c.l.b16 %v2607
    %v2700 = vunpack.c.l.b16 %v2608
    %v2701 = vunpack.c.h.b16 %v2608
    %v2702 = vunpack.c.l.b16 %v2609
    %v2703 = vunpack.c.l.b16 %v2610
    %v2704 = vunpack.c.h.b16 %v2610
    %v2705 = vunpack.c.l.b16 %v2611
    %v2706 = vunpack.c.l.b16 %v2612
    %v2707 = vunpack.c.h.b16 %v2612
    %v2708 = vunpack.c.l.b16 %v2613
    %v2709 = vunpack.c.l.b16 %v2614
    %v2710 = vunpack.c.h.b16 %v2614
    %v2711 = vunpack.c.l.b16 %v2615
    %v2712 = vunpack.c.l.b16 %v2616
    %v2713 = vunpack.c.h.b16 %v2616
    %v2714 = vunpack.c.l.b16 %v2617
    %v2715 = vunpack.c.l.b16 %v2618
    %v2716 = vunpack.c.h.b16 %v2618
    %v2717 = vunpack.c.l.b16 %v2619
    %v2718 = vunpack.c.l.b16 %v2620
    %v2719 = vunpack.c.h.b16 %v2620
    %v2720 = vunpack.c.l.b16 %v2621
    %v2721 = vunpack.c.l.b16 %v2622
    %v2722 = vunpack.c.h.b16 %v2622
    %v2723 = vunpack.c.l.b16 %v2623
    %v2724 = vpack.c.b16 %v2679, %v2676
    %v2725 = vpack.c.b16 %v2680, %v2677
    %v2726 = vpack.c.b16 %v2681, %v2678
    %v2727 = vpack.c.b16 %v2685, %v2682
    %v2728 = vpack.c.b16 %v2686, %v2683
    %v2729 = vpack.c.b16 %v2687, %v2684
    %v2730 = vpack.c.b16 %v2691, %v2688
    %v2731 = vpack.c.b16 %v2692, %v2689
    %v2732 = vpack.c.b16 %v2693, %v2690
    %v2733 = vpack.c.b16 %v2697, %v2694
    %v2734 = vpack.c.b16 %v2698, %v2695
    %v2735 = vpack.c.b16 %v2699, %v2696
    %v2736 = vpack.c.b16 %v2703, %v2700
    %v2737 = vpack.c.b16 %v2704, %v2701
    %v2738 = vpack.c.b16 %v2705, %v2702
    %v2739 = vpack.c.b16 %v2709, %v2706
    %v2740 = vpack.c.b16 %v2710, %v2707
    %v2741 = vpack.c.b16 %v2711, %v2708
    %v2742 = vpack.c.b16 %v2715, %v2712
    %v2743 = vpack.c.b16 %v2716, %v2713
    %v2744 = vpack.c.b16 %v2717, %v2714
    %v2745 = vpack.c.b16 %v2721, %v2718
    %v2746 = vpack.c.b16 %v2722, %v2719
    %v2747 = vpack.c.b16 %v2723, %v2720
    %2772 = vmatprep.subr.bf16.mxu0 %v2746
    %2773 = vmatpush1.bf16.msra.mxu0 %v2745
    %2774 = vmatprep.subr.bf16.mxu0 %v2743
    %2775 = vmatpush1.bf16.msra.mxu0 %v2742
    %2776 = vmatprep.subr.bf16.mxu0 %v2740
    %2777 = vmatpush1.bf16.msra.mxu0 %v2739
    %2778 = vmatprep.subr.bf16.mxu0 %v2737
    %2779 = vmatpush1.bf16.msra.mxu0 %v2736
    %2780 = vmatprep.subr.bf16.mxu0 %v2734
    %2781 = vmatpush1.bf16.msra.mxu0 %v2733
    %2782 = vmatprep.subr.bf16.mxu0 %v2731
    %2783 = vmatpush1.bf16.msra.mxu0 %v2730
    %2784 = vmatprep.subr.bf16.mxu0 %v2728
    %2785 = vmatpush1.bf16.msra.mxu0 %v2727
    %2786 = vmatprep.subr.bf16.mxu0 %v2725
    %2787 = vmatpush1.bf16.msra.mxu0 %v2724
    %2788 = vmatprep.subr.bf16.mxu0 0
    %2789 = vmatpush2.bf16.msra.mxu0 0
    %2790 = vmatprep.subr.bf16.mxu0 0
    %2791 = vmatpush2.bf16.msra.mxu0 0
    %2792 = vmatprep.subr.bf16.mxu0 0
    %2793 = vmatpush2.bf16.msra.mxu0 0
    %2794 = vmatprep.subr.bf16.mxu0 0
    %2795 = vmatpush2.bf16.msra.mxu0 0
    %2796 = vmatprep.subr.bf16.mxu0 0
    %2797 = vmatpush2.bf16.msra.mxu0 0
    %2798 = vmatprep.subr.bf16.mxu0 0
    %2799 = vmatpush2.bf16.msra.mxu0 0
    %2800 = vmatprep.subr.bf16.mxu0 0
    %2801 = vmatpush2.bf16.msra.mxu0 0
    %2802 = vmatprep.subr.bf16.mxu0 0
    %2803 = vmatpush2.bf16.msra.mxu0 0
    %2804 = vmatprep.mubr.bf16.mxu0 0
    %2805 = vmatmul.mubr.bf16.gmra.mxu0 %v2626
    %v2806 = vpop.f32.mrf.mxu0
    %v2807 = vadd.f32 %v2632, %v2806
    %v2808 = vpop.f32.mrf.mxu0
    %v2809 = vadd.f32 %v2636, %v2808
    %v2810 = vpop.f32.mrf.mxu0
    %v2811 = vadd.f32 %v2632, %v2810
    %v2812 = vpop.f32.mrf.mxu0
    %v2813 = vadd.f32 %v2636, %v2812
    %2814 = vmatprep.mubr.bf16.mxu0 0
    %2815 = vmatmul.mubr.bf16.gmra.mxu0 %v2627
    %v2816 = vpop.f32.mrf.mxu0
    %v2817 = vadd.f32 %v2632, %v2816
    %v2818 = vpop.f32.mrf.mxu0
    %v2819 = vadd.f32 %v2636, %v2818
    %v2820 = vpop.f32.mrf.mxu0
    %v2821 = vadd.f32 %v2632, %v2820
    %v2822 = vpop.f32.mrf.mxu0
    %v2823 = vadd.f32 %v2636, %v2822
    %2824 = vdwg.mxu0
    %2825 = vmatprep.subr.bf16.mxu0 0
    %2826 = vmatpush1.bf16.msra.mxu0 %v2747
    %2827 = vmatprep.subr.bf16.mxu0 0
    %2828 = vmatpush1.bf16.msra.mxu0 %v2744
    %2829 = vmatprep.subr.bf16.mxu0 0
    %2830 = vmatpush1.bf16.msra.mxu0 %v2741
    %2831 = vmatprep.subr.bf16.mxu0 0
    %2832 = vmatpush1.bf16.msra.mxu0 %v2738
    %2833 = vmatprep.subr.bf16.mxu0 0
    %2834 = vmatpush1.bf16.msra.mxu0 %v2735
    %2835 = vmatprep.subr.bf16.mxu0 0
    %2836 = vmatpush1.bf16.msra.mxu0 %v2732
    %2837 = vmatprep.subr.bf16.mxu0 0
    %2838 = vmatpush1.bf16.msra.mxu0 %v2729
    %2839 = vmatprep.subr.bf16.mxu0 0
    %2840 = vmatpush1.bf16.msra.mxu0 %v2726
    %2841 = vmatprep.subr.bf16.mxu0 0
    %2842 = vmatpush2.bf16.msra.mxu0 0
    %2843 = vmatprep.subr.bf16.mxu0 0
    %2844 = vmatpush2.bf16.msra.mxu0 0
    %2845 = vmatprep.subr.bf16.mxu0 0
    %2846 = vmatpush2.bf16.msra.mxu0 0
    %2847 = vmatprep.subr.bf16.mxu0 0
    %2848 = vmatpush2.bf16.msra.mxu0 0
    %2849 = vmatprep.subr.bf16.mxu0 0
    %2850 = vmatpush2.bf16.msra.mxu0 0
    %2851 = vmatprep.subr.bf16.mxu0 0
    %2852 = vmatpush2.bf16.msra.mxu0 0
    %2853 = vmatprep.subr.bf16.mxu0 0
    %2854 = vmatpush2.bf16.msra.mxu0 0
    %2855 = vmatprep.subr.bf16.mxu0 0
    %2856 = vmatpush2.bf16.msra.mxu0 0
    %2857 = vmatprep.mubr.bf16.mxu0 0
    %2858 = vmatmul.mubr.bf16.gmra.mxu0 %v2626
    %v2859 = vpop.f32.mrf.mxu0
    %v2860 = vadd.f32 %v2640, %v2859
    %v2861 = vpop.f32.mrf.mxu0
    %v2862 = vpop.f32.mrf.mxu0
    %v2863 = vadd.f32 %v2640, %v2862
    %v2864 = vpop.f32.mrf.mxu0
    %2865 = vmatprep.mubr.bf16.mxu0 0
    %2866 = vmatmul.mubr.bf16.gmra.mxu0 %v2627
    %v2867 = vpop.f32.mrf.mxu0
    %v2868 = vadd.f32 %v2640, %v2867
    %v2869 = vpop.f32.mrf.mxu0
    %v2870 = vpop.f32.mrf.mxu0
    %v2871 = vadd.f32 %v2640, %v2870
    %v2872 = vpop.f32.mrf.mxu0
    %2873 = vdwg.mxu0
    %v2874 = vpack.c.bf16 %v2811, %v2807
    %v2875 = vpack.c.bf16 %v2821, %v2817
    %v2876 = vpack.c.bf16 %v2813, %v2809
    %v2877 = vpack.c.bf16 %v2823, %v2819
    %v2878 = vpack.c.bf16 %v2863, %v2860
    %v2879 = vpack.c.bf16 %v2871, %v2868
    %v2881 = vsel %vm461, %v2874, 0
    %v2884 = vsel %vm461, %v2876, 0
    %2886 = vmatprep.subr.bf16.mxu0 0
    %2887 = vmatpush1.bf16.xpose.msra.mxu0 0
    %2888 = vmatprep.subr.bf16.mxu0 0
    %2889 = vmatpush1.bf16.xpose.msra.mxu0 0
    %2890 = vmatprep.subr.bf16.mxu0 0
    %2891 = vmatpush1.bf16.xpose.msra.mxu0 0
    %2892 = vmatprep.subr.bf16.mxu0 0
    %2893 = vmatpush1.bf16.xpose.msra.mxu0 0
    %2894 = vmatprep.subr.bf16.mxu0 0
    %2895 = vmatpush1.bf16.xpose.msra.mxu0 0
    %2896 = vmatprep.subr.bf16.mxu0 0
    %2897 = vmatpush1.bf16.xpose.msra.mxu0 0
    %2898 = vmatprep.subr.bf16.mxu0 0
    %2899 = vmatpush1.bf16.xpose.msra.mxu0 0
    %2900 = vmatprep.subr.bf16.mxu0 0
    %2901 = vmatpush1.bf16.xpose.msra.mxu0 %v2884
    %2902 = vmatprep.subr.bf16.mxu0 0
    %2903 = vmatpush2.bf16.xpose.msra.mxu0 0
    %2904 = vmatprep.subr.bf16.mxu0 0
    %2905 = vmatpush2.bf16.xpose.msra.mxu0 0
    %2906 = vmatprep.subr.bf16.mxu0 0
    %2907 = vmatpush2.bf16.xpose.msra.mxu0 0
    %2908 = vmatprep.subr.bf16.mxu0 0
    %2909 = vmatpush2.bf16.xpose.msra.mxu0 0
    %2910 = vmatprep.subr.bf16.mxu0 0
    %2911 = vmatpush2.bf16.xpose.msra.mxu0 0
    %2912 = vmatprep.subr.bf16.mxu0 0
    %2913 = vmatpush2.bf16.xpose.msra.mxu0 0
    %2914 = vmatprep.subr.bf16.mxu0 0
    %2915 = vmatpush2.bf16.xpose.msra.mxu0 0
    %2916 = vmatprep.subr.bf16.mxu0 0
    %2917 = vmatpush2.bf16.xpose.msra.mxu0 0
    %2918 = vmatprep.mubr.bf16.mxu0 0
    %2919 = vmatmul.mubr.bf16.gmra.mxu0 %v2881
    %v2920 = vpop.f32.mrf.mxu0
    %v2921 = vadd.f32 %v164, %v2920
    %v2922 = vpop.f32.mrf.mxu0
    %v2923 = vpop.f32.mrf.mxu0
    %v2924 = vadd.f32 %v164, %v2923
    %v2925 = vpop.f32.mrf.mxu0
    %2926 = vdwg.mxu0
    %v2927 = vsel %vm509, %v2921, -inf
    %2928 = vmax.xlane.f32.xlu0 %v2927
    %v2929 = vpop.xlane.xlu0 %2928
    %v2930 = vsel %vm509, %v2924, -inf
    %2931 = vmax.xlane.f32.xlu0 %v2930
    %v2932 = vpop.xlane.xlu0 %2931
    %v2933 = vsub.f32 %v2921, %v2929
    %v2934 = vsub.f32 %v2924, %v2932
    %v2935 = vmul.f32 %v2933, 1.442695
    %v2936 = vpow.pop %v2935
    %v2937 = vmul.f32 %v2934, 1.442695
    %v2938 = vpow.pop %v2937
    %v2939 = vsel %vm509, %v2936, 0.0
    %2940 = vadd.xlane.f32.xlu0 %v2939
    %v2941 = vpop.xlane.xlu0 %2940
    %v2942 = vsel %vm509, %v2938, 0.0
    %2943 = vadd.xlane.f32.xlu0 %v2942
    %v2944 = vpop.xlane.xlu0 %2943
    %v2945 = vrcp.pop %v2941
    %v2946 = vrcp.pop %v2944
    %v2947 = vmul.f32 %v2936, %v2945
    %v2948 = vmul.f32 %v2938, %v2946
    %v2949 = vpack.c.bf16 %v2948, %v2947
    %v2951 = vsel %vm509, %v2949, 0
    %2953 = vmatprep.subr.bf16.mxu0 0
    %2954 = vmatpush1.bf16.msra.mxu0 0
    %2955 = vmatprep.subr.bf16.mxu0 0
    %2956 = vmatpush1.bf16.msra.mxu0 0
    %2957 = vmatprep.subr.bf16.mxu0 0
    %2958 = vmatpush1.bf16.msra.mxu0 0
    %2959 = vmatprep.subr.bf16.mxu0 0
    %2960 = vmatpush1.bf16.msra.mxu0 0
    %2961 = vmatprep.subr.bf16.mxu0 0
    %2962 = vmatpush1.bf16.msra.mxu0 0
    %2963 = vmatprep.subr.bf16.mxu0 0
    %2964 = vmatpush1.bf16.msra.mxu0 0
    %2965 = vmatprep.subr.bf16.mxu0 0
    %2966 = vmatpush1.bf16.msra.mxu0 0
    %2967 = vmatprep.subr.bf16.mxu0 0
    %2968 = vmatpush1.bf16.msra.mxu0 %v2878
    %2969 = vmatprep.subr.bf16.mxu0 0
    %2970 = vmatpush2.bf16.msra.mxu0 0
    %2971 = vmatprep.subr.bf16.mxu0 0
    %2972 = vmatpush2.bf16.msra.mxu0 0
    %2973 = vmatprep.subr.bf16.mxu0 0
    %2974 = vmatpush2.bf16.msra.mxu0 0
    %2975 = vmatprep.subr.bf16.mxu0 0
    %2976 = vmatpush2.bf16.msra.mxu0 0
    %2977 = vmatprep.subr.bf16.mxu0 0
    %2978 = vmatpush2.bf16.msra.mxu0 0
    %2979 = vmatprep.subr.bf16.mxu0 0
    %2980 = vmatpush2.bf16.msra.mxu0 0
    %2981 = vmatprep.subr.bf16.mxu0 0
    %2982 = vmatpush2.bf16.msra.mxu0 0
    %2983 = vmatprep.subr.bf16.mxu0 0
    %2984 = vmatpush2.bf16.msra.mxu0 0
    %2985 = vmatprep.mubr.bf16.mxu0 0
    %2986 = vmatmul.mubr.bf16.gmra.mxu0 %v2951
    %v2987 = vpop.f32.mrf.mxu0
    %v2988 = vadd.f32 0.0, %v2987
    %v2989 = vpop.f32.mrf.mxu0
    %v2990 = vpop.f32.mrf.mxu0
    %v2991 = vadd.f32 0.0, %v2990
    %v2992 = vpop.f32.mrf.mxu0
    %2993 = vdwg.mxu0
    %2994 = vst.msk [vmem:[#allocation2] sm:$0xff] %vm461, %v2988
    %2995 = vst.msk [vmem:[#allocation2 + $0x8] sm:$0xff] %vm461, %v2991
    %2997 = vrot.lane.b32.xlu0 %v2874, 96
    %v2998 = vpop.permute.xlu0 %2997
    %3000 = vrot.lane.b32.xlu0 %v2876, 96
    %v3001 = vpop.permute.xlu0 %3000
    %v3003 = vsel %vm461, %v2998, 0
    %v3006 = vsel %vm461, %v3001, 0
    %3008 = vmatprep.subr.bf16.mxu0 0
    %3009 = vmatpush1.bf16.xpose.msra.mxu0 0
    %3010 = vmatprep.subr.bf16.mxu0 0
    %3011 = vmatpush1.bf16.xpose.msra.mxu0 0
    %3012 = vmatprep.subr.bf16.mxu0 0
    %3013 = vmatpush1.bf16.xpose.msra.mxu0 0
    %3014 = vmatprep.subr.bf16.mxu0 0
    %3015 = vmatpush1.bf16.xpose.msra.mxu0 0
    %3016 = vmatprep.subr.bf16.mxu0 0
    %3017 = vmatpush1.bf16.xpose.msra.mxu0 0
    %3018 = vmatprep.subr.bf16.mxu0 0
    %3019 = vmatpush1.bf16.xpose.msra.mxu0 0
    %3020 = vmatprep.subr.bf16.mxu0 0
    %3021 = vmatpush1.bf16.xpose.msra.mxu0 0
    %3022 = vmatprep.subr.bf16.mxu0 0
    %3023 = vmatpush1.bf16.xpose.msra.mxu0 %v3006
    %3024 = vmatprep.subr.bf16.mxu0 0
    %3025 = vmatpush2.bf16.xpose.msra.mxu0 0
    %3026 = vmatprep.subr.bf16.mxu0 0
    %3027 = vmatpush2.bf16.xpose.msra.mxu0 0
    %3028 = vmatprep.subr.bf16.mxu0 0
    %3029 = vmatpush2.bf16.xpose.msra.mxu0 0
    %3030 = vmatprep.subr.bf16.mxu0 0
    %3031 = vmatpush2.bf16.xpose.msra.mxu0 0
    %3032 = vmatprep.subr.bf16.mxu0 0
    %3033 = vmatpush2.bf16.xpose.msra.mxu0 0
    %3034 = vmatprep.subr.bf16.mxu0 0
    %3035 = vmatpush2.bf16.xpose.msra.mxu0 0
    %3036 = vmatprep.subr.bf16.mxu0 0
    %3037 = vmatpush2.bf16.xpose.msra.mxu0 0
    %3038 = vmatprep.subr.bf16.mxu0 0
    %3039 = vmatpush2.bf16.xpose.msra.mxu0 0
    %3040 = vmatprep.mubr.bf16.mxu0 0
    %3041 = vmatmul.mubr.bf16.gmra.mxu0 %v3003
    %v3042 = vpop.f32.mrf.mxu0
    %v3043 = vadd.f32 %v164, %v3042
    %v3044 = vpop.f32.mrf.mxu0
    %v3045 = vpop.f32.mrf.mxu0
    %v3046 = vadd.f32 %v164, %v3045
    %v3047 = vpop.f32.mrf.mxu0
    %3048 = vdwg.mxu0
    %v3049 = vsel %vm509, %v3043, -inf
    %3050 = vmax.xlane.f32.xlu0 %v3049
    %v3051 = vpop.xlane.xlu0 %3050
    %v3052 = vsel %vm509, %v3046, -inf
    %3053 = vmax.xlane.f32.xlu0 %v3052
    %v3054 = vpop.xlane.xlu0 %3053
    %v3055 = vsub.f32 %v3043, %v3051
    %v3056 = vsub.f32 %v3046, %v3054
    %v3057 = vmul.f32 %v3055, 1.442695
    %v3058 = vpow.pop %v3057
    %v3059 = vmul.f32 %v3056, 1.442695
    %v3060 = vpow.pop %v3059
    %v3061 = vsel %vm509, %v3058, 0.0
    %3062 = vadd.xlane.f32.xlu0 %v3061
    %v3063 = vpop.xlane.xlu0 %3062
    %v3064 = vsel %vm509, %v3060, 0.0
    %3065 = vadd.xlane.f32.xlu0 %v3064
    %v3066 = vpop.xlane.xlu0 %3065
    %v3067 = vrcp.pop %v3063
    %v3068 = vrcp.pop %v3066
    %v3069 = vmul.f32 %v3058, %v3067
    %v3070 = vmul.f32 %v3060, %v3068
    %v3071 = vpack.c.bf16 %v3070, %v3069
    %3073 = vrot.lane.b32.xlu0 %v2878, 96
    %v3074 = vpop.permute.xlu0 %3073
    %v3077 = vsel %vm509, %v3071, 0
    %3079 = vmatprep.subr.bf16.mxu0 0
    %3080 = vmatpush1.bf16.msra.mxu0 0
    %3081 = vmatprep.subr.bf16.mxu0 0
    %3082 = vmatpush1.bf16.msra.mxu0 0
    %3083 = vmatprep.subr.bf16.mxu0 0
    %3084 = vmatpush1.bf16.msra.mxu0 0
    %3085 = vmatprep.subr.bf16.mxu0 0
    %3086 = vmatpush1.bf16.msra.mxu0 0
    %3087 = vmatprep.subr.bf16.mxu0 0
    %3088 = vmatpush1.bf16.msra.mxu0 0
    %3089 = vmatprep.subr.bf16.mxu0 0
    %3090 = vmatpush1.bf16.msra.mxu0 0
    %3091 = vmatprep.subr.bf16.mxu0 0
    %3092 = vmatpush1.bf16.msra.mxu0 0
    %3093 = vmatprep.subr.bf16.mxu0 0
    %3094 = vmatpush1.bf16.msra.mxu0 %v3074
    %3095 = vmatprep.subr.bf16.mxu0 0
    %3096 = vmatpush2.bf16.msra.mxu0 0
    %3097 = vmatprep.subr.bf16.mxu0 0
    %3098 = vmatpush2.bf16.msra.mxu0 0
    %3099 = vmatprep.subr.bf16.mxu0 0
    %3100 = vmatpush2.bf16.msra.mxu0 0
    %3101 = vmatprep.subr.bf16.mxu0 0
    %3102 = vmatpush2.bf16.msra.mxu0 0
    %3103 = vmatprep.subr.bf16.mxu0 0
    %3104 = vmatpush2.bf16.msra.mxu0 0
    %3105 = vmatprep.subr.bf16.mxu0 0
    %3106 = vmatpush2.bf16.msra.mxu0 0
    %3107 = vmatprep.subr.bf16.mxu0 0
    %3108 = vmatpush2.bf16.msra.mxu0 0
    %3109 = vmatprep.subr.bf16.mxu0 0
    %3110 = vmatpush2.bf16.msra.mxu0 0
    %3111 = vmatprep.mubr.bf16.mxu0 0
    %3112 = vmatmul.mubr.bf16.gmra.mxu0 %v3077
    %v3113 = vpop.f32.mrf.mxu0
    %v3114 = vadd.f32 0.0, %v3113
    %v3115 = vpop.f32.mrf.mxu0
    %v3116 = vpop.f32.mrf.mxu0
    %v3117 = vadd.f32 0.0, %v3116
    %v3118 = vpop.f32.mrf.mxu0
    %3119 = vdwg.mxu0
    %3122 = vrot.lane.b32.xlu0 %v3114, 32
    %v3123 = vpop.permute.xlu0 %3122
    %3124 = vrot.lane.b32.xlu0 %v3117, 32
    %v3125 = vpop.permute.xlu0 %3124
    %3128 = vst.msk [vmem:[#allocation2] sm:$0xff] %vm711, %v3123
    %3129 = vst.msk [vmem:[#allocation2 + $0x8] sm:$0xff] %vm711, %v3125
    %3130 = vrot.lane.b32.xlu0 %v2874, 64
    %v3131 = vpop.permute.xlu0 %3130
    %3132 = vrot.lane.b32.xlu0 %v2876, 64
    %v3133 = vpop.permute.xlu0 %3132
    %v3135 = vsel %vm461, %v3131, 0
    %v3138 = vsel %vm461, %v3133, 0
    %3140 = vmatprep.subr.bf16.mxu0 0
    %3141 = vmatpush1.bf16.xpose.msra.mxu0 0
    %3142 = vmatprep.subr.bf16.mxu0 0
    %3143 = vmatpush1.bf16.xpose.msra.mxu0 0
    %3144 = vmatprep.subr.bf16.mxu0 0
    %3145 = vmatpush1.bf16.xpose.msra.mxu0 0
    %3146 = vmatprep.subr.bf16.mxu0 0
    %3147 = vmatpush1.bf16.xpose.msra.mxu0 0
    %3148 = vmatprep.subr.bf16.mxu0 0
    %3149 = vmatpush1.bf16.xpose.msra.mxu0 0
    %3150 = vmatprep.subr.bf16.mxu0 0
    %3151 = vmatpush1.bf16.xpose.msra.mxu0 0
    %3152 = vmatprep.subr.bf16.mxu0 0
    %3153 = vmatpush1.bf16.xpose.msra.mxu0 0
    %3154 = vmatprep.subr.bf16.mxu0 0
    %3155 = vmatpush1.bf16.xpose.msra.mxu0 %v3138
    %3156 = vmatprep.subr.bf16.mxu0 0
    %3157 = vmatpush2.bf16.xpose.msra.mxu0 0
    %3158 = vmatprep.subr.bf16.mxu0 0
    %3159 = vmatpush2.bf16.xpose.msra.mxu0 0
    %3160 = vmatprep.subr.bf16.mxu0 0
    %3161 = vmatpush2.bf16.xpose.msra.mxu0 0
    %3162 = vmatprep.subr.bf16.mxu0 0
    %3163 = vmatpush2.bf16.xpose.msra.mxu0 0
    %3164 = vmatprep.subr.bf16.mxu0 0
    %3165 = vmatpush2.bf16.xpose.msra.mxu0 0
    %3166 = vmatprep.subr.bf16.mxu0 0
    %3167 = vmatpush2.bf16.xpose.msra.mxu0 0
    %3168 = vmatprep.subr.bf16.mxu0 0
    %3169 = vmatpush2.bf16.xpose.msra.mxu0 0
    %3170 = vmatprep.subr.bf16.mxu0 0
    %3171 = vmatpush2.bf16.xpose.msra.mxu0 0
    %3172 = vmatprep.mubr.bf16.mxu0 0
    %3173 = vmatmul.mubr.bf16.gmra.mxu0 %v3135
    %v3174 = vpop.f32.mrf.mxu0
    %v3175 = vadd.f32 %v164, %v3174
    %v3176 = vpop.f32.mrf.mxu0
    %v3177 = vpop.f32.mrf.mxu0
    %v3178 = vadd.f32 %v164, %v3177
    %v3179 = vpop.f32.mrf.mxu0
    %3180 = vdwg.mxu0
    %v3181 = vsel %vm509, %v3175, -inf
    %3182 = vmax.xlane.f32.xlu0 %v3181
    %v3183 = vpop.xlane.xlu0 %3182
    %v3184 = vsel %vm509, %v3178, -inf
    %3185 = vmax.xlane.f32.xlu0 %v3184
    %v3186 = vpop.xlane.xlu0 %3185
    %v3187 = vsub.f32 %v3175, %v3183
    %v3188 = vsub.f32 %v3178, %v3186
    %v3189 = vmul.f32 %v3187, 1.442695
    %v3190 = vpow.pop %v3189
    %v3191 = vmul.f32 %v3188, 1.442695
    %v3192 = vpow.pop %v3191
    %v3193 = vsel %vm509, %v3190, 0.0
    %3194 = vadd.xlane.f32.xlu0 %v3193
    %v3195 = vpop.xlane.xlu0 %3194
    %v3196 = vsel %vm509, %v3192, 0.0
    %3197 = vadd.xlane.f32.xlu0 %v3196
    %v3198 = vpop.xlane.xlu0 %3197
    %v3199 = vrcp.pop %v3195
    %v3200 = vrcp.pop %v3198
    %v3201 = vmul.f32 %v3190, %v3199
    %v3202 = vmul.f32 %v3192, %v3200
    %v3203 = vpack.c.bf16 %v3202, %v3201
    %3204 = vrot.lane.b32.xlu0 %v2878, 64
    %v3205 = vpop.permute.xlu0 %3204
    %v3208 = vsel %vm509, %v3203, 0
    %3210 = vmatprep.subr.bf16.mxu0 0
    %3211 = vmatpush1.bf16.msra.mxu0 0
    %3212 = vmatprep.subr.bf16.mxu0 0
    %3213 = vmatpush1.bf16.msra.mxu0 0
    %3214 = vmatprep.subr.bf16.mxu0 0
    %3215 = vmatpush1.bf16.msra.mxu0 0
    %3216 = vmatprep.subr.bf16.mxu0 0
    %3217 = vmatpush1.bf16.msra.mxu0 0
    %3218 = vmatprep.subr.bf16.mxu0 0
    %3219 = vmatpush1.bf16.msra.mxu0 0
    %3220 = vmatprep.subr.bf16.mxu0 0
    %3221 = vmatpush1.bf16.msra.mxu0 0
    %3222 = vmatprep.subr.bf16.mxu0 0
    %3223 = vmatpush1.bf16.msra.mxu0 0
    %3224 = vmatprep.subr.bf16.mxu0 0
    %3225 = vmatpush1.bf16.msra.mxu0 %v3205
    %3226 = vmatprep.subr.bf16.mxu0 0
    %3227 = vmatpush2.bf16.msra.mxu0 0
    %3228 = vmatprep.subr.bf16.mxu0 0
    %3229 = vmatpush2.bf16.msra.mxu0 0
    %3230 = vmatprep.subr.bf16.mxu0 0
    %3231 = vmatpush2.bf16.msra.mxu0 0
    %3232 = vmatprep.subr.bf16.mxu0 0
    %3233 = vmatpush2.bf16.msra.mxu0 0
    %3234 = vmatprep.subr.bf16.mxu0 0
    %3235 = vmatpush2.bf16.msra.mxu0 0
    %3236 = vmatprep.subr.bf16.mxu0 0
    %3237 = vmatpush2.bf16.msra.mxu0 0
    %3238 = vmatprep.subr.bf16.mxu0 0
    %3239 = vmatpush2.bf16.msra.mxu0 0
    %3240 = vmatprep.subr.bf16.mxu0 0
    %3241 = vmatpush2.bf16.msra.mxu0 0
    %3242 = vmatprep.mubr.bf16.mxu0 0
    %3243 = vmatmul.mubr.bf16.gmra.mxu0 %v3208
    %v3244 = vpop.f32.mrf.mxu0
    %v3245 = vadd.f32 0.0, %v3244
    %v3246 = vpop.f32.mrf.mxu0
    %v3247 = vpop.f32.mrf.mxu0
    %v3248 = vadd.f32 0.0, %v3247
    %v3249 = vpop.f32.mrf.mxu0
    %3250 = vdwg.mxu0
    %3253 = vrot.lane.b32.xlu0 %v3245, 64
    %v3254 = vpop.permute.xlu0 %3253
    %3255 = vrot.lane.b32.xlu0 %v3248, 64
    %v3256 = vpop.permute.xlu0 %3255
    %3259 = vst.msk [vmem:[#allocation2] sm:$0xff] %vm843, %v3254
    %3260 = vst.msk [vmem:[#allocation2 + $0x8] sm:$0xff] %vm843, %v3256
    %3261 = vrot.lane.b32.xlu0 %v2874, 32
    %v3262 = vpop.permute.xlu0 %3261
    %3263 = vrot.lane.b32.xlu0 %v2876, 32
    %v3264 = vpop.permute.xlu0 %3263
    %v3266 = vsel %vm461, %v3262, 0
    %v3269 = vsel %vm461, %v3264, 0
    %3271 = vmatprep.subr.bf16.mxu0 0
    %3272 = vmatpush1.bf16.xpose.msra.mxu0 0
    %3273 = vmatprep.subr.bf16.mxu0 0
    %3274 = vmatpush1.bf16.xpose.msra.mxu0 0
    %3275 = vmatprep.subr.bf16.mxu0 0
    %3276 = vmatpush1.bf16.xpose.msra.mxu0 0
    %3277 = vmatprep.subr.bf16.mxu0 0
    %3278 = vmatpush1.bf16.xpose.msra.mxu0 0
    %3279 = vmatprep.subr.bf16.mxu0 0
    %3280 = vmatpush1.bf16.xpose.msra.mxu0 0
    %3281 = vmatprep.subr.bf16.mxu0 0
    %3282 = vmatpush1.bf16.xpose.msra.mxu0 0
    %3283 = vmatprep.subr.bf16.mxu0 0
    %3284 = vmatpush1.bf16.xpose.msra.mxu0 0
    %3285 = vmatprep.subr.bf16.mxu0 0
    %3286 = vmatpush1.bf16.xpose.msra.mxu0 %v3269
    %3287 = vmatprep.subr.bf16.mxu0 0
    %3288 = vmatpush2.bf16.xpose.msra.mxu0 0
    %3289 = vmatprep.subr.bf16.mxu0 0
    %3290 = vmatpush2.bf16.xpose.msra.mxu0 0
    %3291 = vmatprep.subr.bf16.mxu0 0
    %3292 = vmatpush2.bf16.xpose.msra.mxu0 0
    %3293 = vmatprep.subr.bf16.mxu0 0
    %3294 = vmatpush2.bf16.xpose.msra.mxu0 0
    %3295 = vmatprep.subr.bf16.mxu0 0
    %3296 = vmatpush2.bf16.xpose.msra.mxu0 0
    %3297 = vmatprep.subr.bf16.mxu0 0
    %3298 = vmatpush2.bf16.xpose.msra.mxu0 0
    %3299 = vmatprep.subr.bf16.mxu0 0
    %3300 = vmatpush2.bf16.xpose.msra.mxu0 0
    %3301 = vmatprep.subr.bf16.mxu0 0
    %3302 = vmatpush2.bf16.xpose.msra.mxu0 0
    %3303 = vmatprep.mubr.bf16.mxu0 0
    %3304 = vmatmul.mubr.bf16.gmra.mxu0 %v3266
    %v3305 = vpop.f32.mrf.mxu0
    %v3306 = vadd.f32 %v164, %v3305
    %v3307 = vpop.f32.mrf.mxu0
    %v3308 = vpop.f32.mrf.mxu0
    %v3309 = vadd.f32 %v164, %v3308
    %v3310 = vpop.f32.mrf.mxu0
    %3311 = vdwg.mxu0
    %v3312 = vsel %vm509, %v3306, -inf
    %3313 = vmax.xlane.f32.xlu0 %v3312
    %v3314 = vpop.xlane.xlu0 %3313
    %v3315 = vsel %vm509, %v3309, -inf
    %3316 = vmax.xlane.f32.xlu0 %v3315
    %v3317 = vpop.xlane.xlu0 %3316
    %v3318 = vsub.f32 %v3306, %v3314
    %v3319 = vsub.f32 %v3309, %v3317
    %v3320 = vmul.f32 %v3318, 1.442695
    %v3321 = vpow.pop %v3320
    %v3322 = vmul.f32 %v3319, 1.442695
    %v3323 = vpow.pop %v3322
    %v3324 = vsel %vm509, %v3321, 0.0
    %3325 = vadd.xlane.f32.xlu0 %v3324
    %v3326 = vpop.xlane.xlu0 %3325
    %v3327 = vsel %vm509, %v3323, 0.0
    %3328 = vadd.xlane.f32.xlu0 %v3327
    %v3329 = vpop.xlane.xlu0 %3328
    %v3330 = vrcp.pop %v3326
    %v3331 = vrcp.pop %v3329
    %v3332 = vmul.f32 %v3321, %v3330
    %v3333 = vmul.f32 %v3323, %v3331
    %v3334 = vpack.c.bf16 %v3333, %v3332
    %3335 = vrot.lane.b32.xlu0 %v2878, 32
    %v3336 = vpop.permute.xlu0 %3335
    %v3339 = vsel %vm509, %v3334, 0
    %3341 = vmatprep.subr.bf16.mxu0 0
    %3342 = vmatpush1.bf16.msra.mxu0 0
    %3343 = vmatprep.subr.bf16.mxu0 0
    %3344 = vmatpush1.bf16.msra.mxu0 0
    %3345 = vmatprep.subr.bf16.mxu0 0
    %3346 = vmatpush1.bf16.msra.mxu0 0
    %3347 = vmatprep.subr.bf16.mxu0 0
    %3348 = vmatpush1.bf16.msra.mxu0 0
    %3349 = vmatprep.subr.bf16.mxu0 0
    %3350 = vmatpush1.bf16.msra.mxu0 0
    %3351 = vmatprep.subr.bf16.mxu0 0
    %3352 = vmatpush1.bf16.msra.mxu0 0
    %3353 = vmatprep.subr.bf16.mxu0 0
    %3354 = vmatpush1.bf16.msra.mxu0 0
    %3355 = vmatprep.subr.bf16.mxu0 0
    %3356 = vmatpush1.bf16.msra.mxu0 %v3336
    %3357 = vmatprep.subr.bf16.mxu0 0
    %3358 = vmatpush2.bf16.msra.mxu0 0
    %3359 = vmatprep.subr.bf16.mxu0 0
    %3360 = vmatpush2.bf16.msra.mxu0 0
    %3361 = vmatprep.subr.bf16.mxu0 0
    %3362 = vmatpush2.bf16.msra.mxu0 0
    %3363 = vmatprep.subr.bf16.mxu0 0
    %3364 = vmatpush2.bf16.msra.mxu0 0
    %3365 = vmatprep.subr.bf16.mxu0 0
    %3366 = vmatpush2.bf16.msra.mxu0 0
    %3367 = vmatprep.subr.bf16.mxu0 0
    %3368 = vmatpush2.bf16.msra.mxu0 0
    %3369 = vmatprep.subr.bf16.mxu0 0
    %3370 = vmatpush2.bf16.msra.mxu0 0
    %3371 = vmatprep.subr.bf16.mxu0 0
    %3372 = vmatpush2.bf16.msra.mxu0 0
    %3373 = vmatprep.mubr.bf16.mxu0 0
    %3374 = vmatmul.mubr.bf16.gmra.mxu0 %v3339
    %v3375 = vpop.f32.mrf.mxu0
    %v3376 = vadd.f32 0.0, %v3375
    %v3377 = vpop.f32.mrf.mxu0
    %v3378 = vpop.f32.mrf.mxu0
    %v3379 = vadd.f32 0.0, %v3378
    %v3380 = vpop.f32.mrf.mxu0
    %3381 = vdwg.mxu0
    %3384 = vrot.lane.b32.xlu0 %v3376, 96
    %v3385 = vpop.permute.xlu0 %3384
    %3386 = vrot.lane.b32.xlu0 %v3379, 96
    %v3387 = vpop.permute.xlu0 %3386
    %3390 = vst.msk [vmem:[#allocation2] sm:$0xff] %vm975, %v3385
    %3391 = vst.msk [vmem:[#allocation2 + $0x8] sm:$0xff] %vm975, %v3387
    %v3393 = vsel %vm461, %v2875, 0
    %v3396 = vsel %vm461, %v2877, 0
    %3398 = vmatprep.subr.bf16.mxu0 0
    %3399 = vmatpush1.bf16.xpose.msra.mxu0 0
    %3400 = vmatprep.subr.bf16.mxu0 0
    %3401 = vmatpush1.bf16.xpose.msra.mxu0 0
    %3402 = vmatprep.subr.bf16.mxu0 0
    %3403 = vmatpush1.bf16.xpose.msra.mxu0 0
    %3404 = vmatprep.subr.bf16.mxu0 0
    %3405 = vmatpush1.bf16.xpose.msra.mxu0 0
    %3406 = vmatprep.subr.bf16.mxu0 0
    %3407 = vmatpush1.bf16.xpose.msra.mxu0 0
    %3408 = vmatprep.subr.bf16.mxu0 0
    %3409 = vmatpush1.bf16.xpose.msra.mxu0 0
    %3410 = vmatprep.subr.bf16.mxu0 0
    %3411 = vmatpush1.bf16.xpose.msra.mxu0 0
    %3412 = vmatprep.subr.bf16.mxu0 0
    %3413 = vmatpush1.bf16.xpose.msra.mxu0 %v3396
    %3414 = vmatprep.subr.bf16.mxu0 0
    %3415 = vmatpush2.bf16.xpose.msra.mxu0 0
    %3416 = vmatprep.subr.bf16.mxu0 0
    %3417 = vmatpush2.bf16.xpose.msra.mxu0 0
    %3418 = vmatprep.subr.bf16.mxu0 0
    %3419 = vmatpush2.bf16.xpose.msra.mxu0 0
    %3420 = vmatprep.subr.bf16.mxu0 0
    %3421 = vmatpush2.bf16.xpose.msra.mxu0 0
    %3422 = vmatprep.subr.bf16.mxu0 0
    %3423 = vmatpush2.bf16.xpose.msra.mxu0 0
    %3424 = vmatprep.subr.bf16.mxu0 0
    %3425 = vmatpush2.bf16.xpose.msra.mxu0 0
    %3426 = vmatprep.subr.bf16.mxu0 0
    %3427 = vmatpush2.bf16.xpose.msra.mxu0 0
    %3428 = vmatprep.subr.bf16.mxu0 0
    %3429 = vmatpush2.bf16.xpose.msra.mxu0 0
    %3430 = vmatprep.mubr.bf16.mxu0 0
    %3431 = vmatmul.mubr.bf16.gmra.mxu0 %v3393
    %v3432 = vpop.f32.mrf.mxu0
    %v3433 = vadd.f32 %v172, %v3432
    %v3434 = vpop.f32.mrf.mxu0
    %v3435 = vpop.f32.mrf.mxu0
    %v3436 = vadd.f32 %v172, %v3435
    %v3437 = vpop.f32.mrf.mxu0
    %3438 = vdwg.mxu0
    %v3439 = vsel %vm509, %v3433, -inf
    %3440 = vmax.xlane.f32.xlu0 %v3439
    %v3441 = vpop.xlane.xlu0 %3440
    %v3442 = vsel %vm509, %v3436, -inf
    %3443 = vmax.xlane.f32.xlu0 %v3442
    %v3444 = vpop.xlane.xlu0 %3443
    %v3445 = vsub.f32 %v3433, %v3441
    %v3446 = vsub.f32 %v3436, %v3444
    %v3447 = vmul.f32 %v3445, 1.442695
    %v3448 = vpow.pop %v3447
    %v3449 = vmul.f32 %v3446, 1.442695
    %v3450 = vpow.pop %v3449
    %v3451 = vsel %vm509, %v3448, 0.0
    %3452 = vadd.xlane.f32.xlu0 %v3451
    %v3453 = vpop.xlane.xlu0 %3452
    %v3454 = vsel %vm509, %v3450, 0.0
    %3455 = vadd.xlane.f32.xlu0 %v3454
    %v3456 = vpop.xlane.xlu0 %3455
    %v3457 = vrcp.pop %v3453
    %v3458 = vrcp.pop %v3456
    %v3459 = vmul.f32 %v3448, %v3457
    %v3460 = vmul.f32 %v3450, %v3458
    %v3461 = vpack.c.bf16 %v3460, %v3459
    %v3463 = vsel %vm509, %v3461, 0
    %3465 = vmatprep.subr.bf16.mxu0 0
    %3466 = vmatpush1.bf16.msra.mxu0 0
    %3467 = vmatprep.subr.bf16.mxu0 0
    %3468 = vmatpush1.bf16.msra.mxu0 0
    %3469 = vmatprep.subr.bf16.mxu0 0
    %3470 = vmatpush1.bf16.msra.mxu0 0
    %3471 = vmatprep.subr.bf16.mxu0 0
    %3472 = vmatpush1.bf16.msra.mxu0 0
    %3473 = vmatprep.subr.bf16.mxu0 0
    %3474 = vmatpush1.bf16.msra.mxu0 0
    %3475 = vmatprep.subr.bf16.mxu0 0
    %3476 = vmatpush1.bf16.msra.mxu0 0
    %3477 = vmatprep.subr.bf16.mxu0 0
    %3478 = vmatpush1.bf16.msra.mxu0 0
    %3479 = vmatprep.subr.bf16.mxu0 0
    %3480 = vmatpush1.bf16.msra.mxu0 %v2879
    %3481 = vmatprep.subr.bf16.mxu0 0
    %3482 = vmatpush2.bf16.msra.mxu0 0
    %3483 = vmatprep.subr.bf16.mxu0 0
    %3484 = vmatpush2.bf16.msra.mxu0 0
    %3485 = vmatprep.subr.bf16.mxu0 0
    %3486 = vmatpush2.bf16.msra.mxu0 0
    %3487 = vmatprep.subr.bf16.mxu0 0
    %3488 = vmatpush2.bf16.msra.mxu0 0
    %3489 = vmatprep.subr.bf16.mxu0 0
    %3490 = vmatpush2.bf16.msra.mxu0 0
    %3491 = vmatprep.subr.bf16.mxu0 0
    %3492 = vmatpush2.bf16.msra.mxu0 0
    %3493 = vmatprep.subr.bf16.mxu0 0
    %3494 = vmatpush2.bf16.msra.mxu0 0
    %3495 = vmatprep.subr.bf16.mxu0 0
    %3496 = vmatpush2.bf16.msra.mxu0 0
    %3497 = vmatprep.mubr.bf16.mxu0 0
    %3498 = vmatmul.mubr.bf16.gmra.mxu0 %v3463
    %v3499 = vpop.f32.mrf.mxu0
    %v3500 = vadd.f32 0.0, %v3499
    %v3501 = vpop.f32.mrf.mxu0
    %v3502 = vpop.f32.mrf.mxu0
    %v3503 = vadd.f32 0.0, %v3502
    %v3504 = vpop.f32.mrf.mxu0
    %3505 = vdwg.mxu0
    %3506 = vst.msk [vmem:[#allocation2 + $0x10] sm:$0xff] %vm461, %v3500
    %3507 = vst.msk [vmem:[#allocation2 + $0x18] sm:$0xff] %vm461, %v3503
    %3509 = vrot.lane.b32.xlu0 %v2875, 96
    %v3510 = vpop.permute.xlu0 %3509
    %3512 = vrot.lane.b32.xlu0 %v2877, 96
    %v3513 = vpop.permute.xlu0 %3512
    %v3515 = vsel %vm461, %v3510, 0
    %v3518 = vsel %vm461, %v3513, 0
    %3520 = vmatprep.subr.bf16.mxu0 0
    %3521 = vmatpush1.bf16.xpose.msra.mxu0 0
    %3522 = vmatprep.subr.bf16.mxu0 0
    %3523 = vmatpush1.bf16.xpose.msra.mxu0 0
    %3524 = vmatprep.subr.bf16.mxu0 0
    %3525 = vmatpush1.bf16.xpose.msra.mxu0 0
    %3526 = vmatprep.subr.bf16.mxu0 0
    %3527 = vmatpush1.bf16.xpose.msra.mxu0 0
    %3528 = vmatprep.subr.bf16.mxu0 0
    %3529 = vmatpush1.bf16.xpose.msra.mxu0 0
    %3530 = vmatprep.subr.bf16.mxu0 0
    %3531 = vmatpush1.bf16.xpose.msra.mxu0 0
    %3532 = vmatprep.subr.bf16.mxu0 0
    %3533 = vmatpush1.bf16.xpose.msra.mxu0 0
    %3534 = vmatprep.subr.bf16.mxu0 0
    %3535 = vmatpush1.bf16.xpose.msra.mxu0 %v3518
    %3536 = vmatprep.subr.bf16.mxu0 0
    %3537 = vmatpush2.bf16.xpose.msra.mxu0 0
    %3538 = vmatprep.subr.bf16.mxu0 0
    %3539 = vmatpush2.bf16.xpose.msra.mxu0 0
    %3540 = vmatprep.subr.bf16.mxu0 0
    %3541 = vmatpush2.bf16.xpose.msra.mxu0 0
    %3542 = vmatprep.subr.bf16.mxu0 0
    %3543 = vmatpush2.bf16.xpose.msra.mxu0 0
    %3544 = vmatprep.subr.bf16.mxu0 0
    %3545 = vmatpush2.bf16.xpose.msra.mxu0 0
    %3546 = vmatprep.subr.bf16.mxu0 0
    %3547 = vmatpush2.bf16.xpose.msra.mxu0 0
    %3548 = vmatprep.subr.bf16.mxu0 0
    %3549 = vmatpush2.bf16.xpose.msra.mxu0 0
    %3550 = vmatprep.subr.bf16.mxu0 0
    %3551 = vmatpush2.bf16.xpose.msra.mxu0 0
    %3552 = vmatprep.mubr.bf16.mxu0 0
    %3553 = vmatmul.mubr.bf16.gmra.mxu0 %v3515
    %v3554 = vpop.f32.mrf.mxu0
    %v3555 = vadd.f32 %v172, %v3554
    %v3556 = vpop.f32.mrf.mxu0
    %v3557 = vpop.f32.mrf.mxu0
    %v3558 = vadd.f32 %v172, %v3557
    %v3559 = vpop.f32.mrf.mxu0
    %3560 = vdwg.mxu0
    %v3561 = vsel %vm509, %v3555, -inf
    %3562 = vmax.xlane.f32.xlu0 %v3561
    %v3563 = vpop.xlane.xlu0 %3562
    %v3564 = vsel %vm509, %v3558, -inf
    %3565 = vmax.xlane.f32.xlu0 %v3564
    %v3566 = vpop.xlane.xlu0 %3565
    %v3567 = vsub.f32 %v3555, %v3563
    %v3568 = vsub.f32 %v3558, %v3566
    %v3569 = vmul.f32 %v3567, 1.442695
    %v3570 = vpow.pop %v3569
    %v3571 = vmul.f32 %v3568, 1.442695
    %v3572 = vpow.pop %v3571
    %v3573 = vsel %vm509, %v3570, 0.0
    %3574 = vadd.xlane.f32.xlu0 %v3573
    %v3575 = vpop.xlane.xlu0 %3574
    %v3576 = vsel %vm509, %v3572, 0.0
    %3577 = vadd.xlane.f32.xlu0 %v3576
    %v3578 = vpop.xlane.xlu0 %3577
    %v3579 = vrcp.pop %v3575
    %v3580 = vrcp.pop %v3578
    %v3581 = vmul.f32 %v3570, %v3579
    %v3582 = vmul.f32 %v3572, %v3580
    %v3583 = vpack.c.bf16 %v3582, %v3581
    %3585 = vrot.lane.b32.xlu0 %v2879, 96
    %v3586 = vpop.permute.xlu0 %3585
    %v3589 = vsel %vm509, %v3583, 0
    %3591 = vmatprep.subr.bf16.mxu0 0
    %3592 = vmatpush1.bf16.msra.mxu0 0
    %3593 = vmatprep.subr.bf16.mxu0 0
    %3594 = vmatpush1.bf16.msra.mxu0 0
    %3595 = vmatprep.subr.bf16.mxu0 0
    %3596 = vmatpush1.bf16.msra.mxu0 0
    %3597 = vmatprep.subr.bf16.mxu0 0
    %3598 = vmatpush1.bf16.msra.mxu0 0
    %3599 = vmatprep.subr.bf16.mxu0 0
    %3600 = vmatpush1.bf16.msra.mxu0 0
    %3601 = vmatprep.subr.bf16.mxu0 0
    %3602 = vmatpush1.bf16.msra.mxu0 0
    %3603 = vmatprep.subr.bf16.mxu0 0
    %3604 = vmatpush1.bf16.msra.mxu0 0
    %3605 = vmatprep.subr.bf16.mxu0 0
    %3606 = vmatpush1.bf16.msra.mxu0 %v3586
    %3607 = vmatprep.subr.bf16.mxu0 0
    %3608 = vmatpush2.bf16.msra.mxu0 0
    %3609 = vmatprep.subr.bf16.mxu0 0
    %3610 = vmatpush2.bf16.msra.mxu0 0
    %3611 = vmatprep.subr.bf16.mxu0 0
    %3612 = vmatpush2.bf16.msra.mxu0 0
    %3613 = vmatprep.subr.bf16.mxu0 0
    %3614 = vmatpush2.bf16.msra.mxu0 0
    %3615 = vmatprep.subr.bf16.mxu0 0
    %3616 = vmatpush2.bf16.msra.mxu0 0
    %3617 = vmatprep.subr.bf16.mxu0 0
    %3618 = vmatpush2.bf16.msra.mxu0 0
    %3619 = vmatprep.subr.bf16.mxu0 0
    %3620 = vmatpush2.bf16.msra.mxu0 0
    %3621 = vmatprep.subr.bf16.mxu0 0
    %3622 = vmatpush2.bf16.msra.mxu0 0
    %3623 = vmatprep.mubr.bf16.mxu0 0
    %3624 = vmatmul.mubr.bf16.gmra.mxu0 %v3589
    %v3625 = vpop.f32.mrf.mxu0
    %v3626 = vadd.f32 0.0, %v3625
    %v3627 = vpop.f32.mrf.mxu0
    %v3628 = vpop.f32.mrf.mxu0
    %v3629 = vadd.f32 0.0, %v3628
    %v3630 = vpop.f32.mrf.mxu0
    %3631 = vdwg.mxu0
    %3634 = vrot.lane.b32.xlu0 %v3626, 32
    %v3635 = vpop.permute.xlu0 %3634
    %3636 = vrot.lane.b32.xlu0 %v3629, 32
    %v3637 = vpop.permute.xlu0 %3636
    %3640 = vst.msk [vmem:[#allocation2 + $0x10] sm:$0xff] %vm711, %v3635
    %3641 = vst.msk [vmem:[#allocation2 + $0x18] sm:$0xff] %vm711, %v3637
    %3642 = vrot.lane.b32.xlu0 %v2875, 64
    %v3643 = vpop.permute.xlu0 %3642
    %3644 = vrot.lane.b32.xlu0 %v2877, 64
    %v3645 = vpop.permute.xlu0 %3644
    %v3647 = vsel %vm461, %v3643, 0
    %v3650 = vsel %vm461, %v3645, 0
    %3652 = vmatprep.subr.bf16.mxu0 0
    %3653 = vmatpush1.bf16.xpose.msra.mxu0 0
    %3654 = vmatprep.subr.bf16.mxu0 0
    %3655 = vmatpush1.bf16.xpose.msra.mxu0 0
    %3656 = vmatprep.subr.bf16.mxu0 0
    %3657 = vmatpush1.bf16.xpose.msra.mxu0 0
    %3658 = vmatprep.subr.bf16.mxu0 0
    %3659 = vmatpush1.bf16.xpose.msra.mxu0 0
    %3660 = vmatprep.subr.bf16.mxu0 0
    %3661 = vmatpush1.bf16.xpose.msra.mxu0 0
    %3662 = vmatprep.subr.bf16.mxu0 0
    %3663 = vmatpush1.bf16.xpose.msra.mxu0 0
    %3664 = vmatprep.subr.bf16.mxu0 0
    %3665 = vmatpush1.bf16.xpose.msra.mxu0 0
    %3666 = vmatprep.subr.bf16.mxu0 0
    %3667 = vmatpush1.bf16.xpose.msra.mxu0 %v3650
    %3668 = vmatprep.subr.bf16.mxu0 0
    %3669 = vmatpush2.bf16.xpose.msra.mxu0 0
    %3670 = vmatprep.subr.bf16.mxu0 0
    %3671 = vmatpush2.bf16.xpose.msra.mxu0 0
    %3672 = vmatprep.subr.bf16.mxu0 0
    %3673 = vmatpush2.bf16.xpose.msra.mxu0 0
    %3674 = vmatprep.subr.bf16.mxu0 0
    %3675 = vmatpush2.bf16.xpose.msra.mxu0 0
    %3676 = vmatprep.subr.bf16.mxu0 0
    %3677 = vmatpush2.bf16.xpose.msra.mxu0 0
    %3678 = vmatprep.subr.bf16.mxu0 0
    %3679 = vmatpush2.bf16.xpose.msra.mxu0 0
    %3680 = vmatprep.subr.bf16.mxu0 0
    %3681 = vmatpush2.bf16.xpose.msra.mxu0 0
    %3682 = vmatprep.subr.bf16.mxu0 0
    %3683 = vmatpush2.bf16.xpose.msra.mxu0 0
    %3684 = vmatprep.mubr.bf16.mxu0 0
    %3685 = vmatmul.mubr.bf16.gmra.mxu0 %v3647
    %v3686 = vpop.f32.mrf.mxu0
    %v3687 = vadd.f32 %v172, %v3686
    %v3688 = vpop.f32.mrf.mxu0
    %v3689 = vpop.f32.mrf.mxu0
    %v3690 = vadd.f32 %v172, %v3689
    %v3691 = vpop.f32.mrf.mxu0
    %3692 = vdwg.mxu0
    %v3693 = vsel %vm509, %v3687, -inf
    %3694 = vmax.xlane.f32.xlu0 %v3693
    %v3695 = vpop.xlane.xlu0 %3694
    %v3696 = vsel %vm509, %v3690, -inf
    %3697 = vmax.xlane.f32.xlu0 %v3696
    %v3698 = vpop.xlane.xlu0 %3697
    %v3699 = vsub.f32 %v3687, %v3695
    %v3700 = vsub.f32 %v3690, %v3698
    %v3701 = vmul.f32 %v3699, 1.442695
    %v3702 = vpow.pop %v3701
    %v3703 = vmul.f32 %v3700, 1.442695
    %v3704 = vpow.pop %v3703
    %v3705 = vsel %vm509, %v3702, 0.0
    %3706 = vadd.xlane.f32.xlu0 %v3705
    %v3707 = vpop.xlane.xlu0 %3706
    %v3708 = vsel %vm509, %v3704, 0.0
    %3709 = vadd.xlane.f32.xlu0 %v3708
    %v3710 = vpop.xlane.xlu0 %3709
    %v3711 = vrcp.pop %v3707
    %v3712 = vrcp.pop %v3710
    %v3713 = vmul.f32 %v3702, %v3711
    %v3714 = vmul.f32 %v3704, %v3712
    %v3715 = vpack.c.bf16 %v3714, %v3713
    %3716 = vrot.lane.b32.xlu0 %v2879, 64
    %v3717 = vpop.permute.xlu0 %3716
    %v3720 = vsel %vm509, %v3715, 0
    %3722 = vmatprep.subr.bf16.mxu0 0
    %3723 = vmatpush1.bf16.msra.mxu0 0
    %3724 = vmatprep.subr.bf16.mxu0 0
    %3725 = vmatpush1.bf16.msra.mxu0 0
    %3726 = vmatprep.subr.bf16.mxu0 0
    %3727 = vmatpush1.bf16.msra.mxu0 0
    %3728 = vmatprep.subr.bf16.mxu0 0
    %3729 = vmatpush1.bf16.msra.mxu0 0
    %3730 = vmatprep.subr.bf16.mxu0 0
    %3731 = vmatpush1.bf16.msra.mxu0 0
    %3732 = vmatprep.subr.bf16.mxu0 0
    %3733 = vmatpush1.bf16.msra.mxu0 0
    %3734 = vmatprep.subr.bf16.mxu0 0
    %3735 = vmatpush1.bf16.msra.mxu0 0
    %3736 = vmatprep.subr.bf16.mxu0 0
    %3737 = vmatpush1.bf16.msra.mxu0 %v3717
    %3738 = vmatprep.subr.bf16.mxu0 0
    %3739 = vmatpush2.bf16.msra.mxu0 0
    %3740 = vmatprep.subr.bf16.mxu0 0
    %3741 = vmatpush2.bf16.msra.mxu0 0
    %3742 = vmatprep.subr.bf16.mxu0 0
    %3743 = vmatpush2.bf16.msra.mxu0 0
    %3744 = vmatprep.subr.bf16.mxu0 0
    %3745 = vmatpush2.bf16.msra.mxu0 0
    %3746 = vmatprep.subr.bf16.mxu0 0
    %3747 = vmatpush2.bf16.msra.mxu0 0
    %3748 = vmatprep.subr.bf16.mxu0 0
    %3749 = vmatpush2.bf16.msra.mxu0 0
    %3750 = vmatprep.subr.bf16.mxu0 0
    %3751 = vmatpush2.bf16.msra.mxu0 0
    %3752 = vmatprep.subr.bf16.mxu0 0
    %3753 = vmatpush2.bf16.msra.mxu0 0
    %3754 = vmatprep.mubr.bf16.mxu0 0
    %3755 = vmatmul.mubr.bf16.gmra.mxu0 %v3720
    %v3756 = vpop.f32.mrf.mxu0
    %v3757 = vadd.f32 0.0, %v3756
    %v3758 = vpop.f32.mrf.mxu0
    %v3759 = vpop.f32.mrf.mxu0
    %v3760 = vadd.f32 0.0, %v3759
    %v3761 = vpop.f32.mrf.mxu0
    %3762 = vdwg.mxu0
    %3765 = vrot.lane.b32.xlu0 %v3757, 64
    %v3766 = vpop.permute.xlu0 %3765
    %3767 = vrot.lane.b32.xlu0 %v3760, 64
    %v3768 = vpop.permute.xlu0 %3767
    %3771 = vst.msk [vmem:[#allocation2 + $0x10] sm:$0xff] %vm843, %v3766
    %3772 = vst.msk [vmem:[#allocation2 + $0x18] sm:$0xff] %vm843, %v3768
    %3773 = vrot.lane.b32.xlu0 %v2875, 32
    %v3774 = vpop.permute.xlu0 %3773
    %3775 = vrot.lane.b32.xlu0 %v2877, 32
    %v3776 = vpop.permute.xlu0 %3775
    %v3778 = vsel %vm461, %v3774, 0
    %v3781 = vsel %vm461, %v3776, 0
    %3783 = vmatprep.subr.bf16.mxu0 0
    %3784 = vmatpush1.bf16.xpose.msra.mxu0 0
    %3785 = vmatprep.subr.bf16.mxu0 0
    %3786 = vmatpush1.bf16.xpose.msra.mxu0 0
    %3787 = vmatprep.subr.bf16.mxu0 0
    %3788 = vmatpush1.bf16.xpose.msra.mxu0 0
    %3789 = vmatprep.subr.bf16.mxu0 0
    %3790 = vmatpush1.bf16.xpose.msra.mxu0 0
    %3791 = vmatprep.subr.bf16.mxu0 0
    %3792 = vmatpush1.bf16.xpose.msra.mxu0 0
    %3793 = vmatprep.subr.bf16.mxu0 0
    %3794 = vmatpush1.bf16.xpose.msra.mxu0 0
    %3795 = vmatprep.subr.bf16.mxu0 0
    %3796 = vmatpush1.bf16.xpose.msra.mxu0 0
    %3797 = vmatprep.subr.bf16.mxu0 0
    %3798 = vmatpush1.bf16.xpose.msra.mxu0 %v3781
    %3799 = vmatprep.subr.bf16.mxu0 0
    %3800 = vmatpush2.bf16.xpose.msra.mxu0 0
    %3801 = vmatprep.subr.bf16.mxu0 0
    %3802 = vmatpush2.bf16.xpose.msra.mxu0 0
    %3803 = vmatprep.subr.bf16.mxu0 0
    %3804 = vmatpush2.bf16.xpose.msra.mxu0 0
    %3805 = vmatprep.subr.bf16.mxu0 0
    %3806 = vmatpush2.bf16.xpose.msra.mxu0 0
    %3807 = vmatprep.subr.bf16.mxu0 0
    %3808 = vmatpush2.bf16.xpose.msra.mxu0 0
    %3809 = vmatprep.subr.bf16.mxu0 0
    %3810 = vmatpush2.bf16.xpose.msra.mxu0 0
    %3811 = vmatprep.subr.bf16.mxu0 0
    %3812 = vmatpush2.bf16.xpose.msra.mxu0 0
    %3813 = vmatprep.subr.bf16.mxu0 0
    %3814 = vmatpush2.bf16.xpose.msra.mxu0 0
    %3815 = vmatprep.mubr.bf16.mxu0 0
    %3816 = vmatmul.mubr.bf16.gmra.mxu0 %v3778
    %v3817 = vpop.f32.mrf.mxu0
    %v3818 = vadd.f32 %v172, %v3817
    %v3819 = vpop.f32.mrf.mxu0
    %v3820 = vpop.f32.mrf.mxu0
    %v3821 = vadd.f32 %v172, %v3820
    %v3822 = vpop.f32.mrf.mxu0
    %3823 = vdwg.mxu0
    %v3824 = vsel %vm509, %v3818, -inf
    %3825 = vmax.xlane.f32.xlu0 %v3824
    %v3826 = vpop.xlane.xlu0 %3825
    %v3827 = vsel %vm509, %v3821, -inf
    %3828 = vmax.xlane.f32.xlu0 %v3827
    %v3829 = vpop.xlane.xlu0 %3828
    %v3830 = vsub.f32 %v3818, %v3826
    %v3831 = vsub.f32 %v3821, %v3829
    %v3832 = vmul.f32 %v3830, 1.442695
    %v3833 = vpow.pop %v3832
    %v3834 = vmul.f32 %v3831, 1.442695
    %v3835 = vpow.pop %v3834
    %v3836 = vsel %vm509, %v3833, 0.0
    %3837 = vadd.xlane.f32.xlu0 %v3836
    %v3838 = vpop.xlane.xlu0 %3837
    %v3839 = vsel %vm509, %v3835, 0.0
    %3840 = vadd.xlane.f32.xlu0 %v3839
    %v3841 = vpop.xlane.xlu0 %3840
    %v3842 = vrcp.pop %v3838
    %v3843 = vrcp.pop %v3841
    %v3844 = vmul.f32 %v3833, %v3842
    %v3845 = vmul.f32 %v3835, %v3843
    %v3846 = vpack.c.bf16 %v3845, %v3844
    %3847 = vrot.lane.b32.xlu0 %v2879, 32
    %v3848 = vpop.permute.xlu0 %3847
    %v3851 = vsel %vm509, %v3846, 0
    %3853 = vmatprep.subr.bf16.mxu0 0
    %3854 = vmatpush1.bf16.msra.mxu0 0
    %3855 = vmatprep.subr.bf16.mxu0 0
    %3856 = vmatpush1.bf16.msra.mxu0 0
    %3857 = vmatprep.subr.bf16.mxu0 0
    %3858 = vmatpush1.bf16.msra.mxu0 0
    %3859 = vmatprep.subr.bf16.mxu0 0
    %3860 = vmatpush1.bf16.msra.mxu0 0
    %3861 = vmatprep.subr.bf16.mxu0 0
    %3862 = vmatpush1.bf16.msra.mxu0 0
    %3863 = vmatprep.subr.bf16.mxu0 0
    %3864 = vmatpush1.bf16.msra.mxu0 0
    %3865 = vmatprep.subr.bf16.mxu0 0
    %3866 = vmatpush1.bf16.msra.mxu0 0
    %3867 = vmatprep.subr.bf16.mxu0 0
    %3868 = vmatpush1.bf16.msra.mxu0 %v3848
    %3869 = vmatprep.subr.bf16.mxu0 0
    %3870 = vmatpush2.bf16.msra.mxu0 0
    %3871 = vmatprep.subr.bf16.mxu0 0
    %3872 = vmatpush2.bf16.msra.mxu0 0
    %3873 = vmatprep.subr.bf16.mxu0 0
    %3874 = vmatpush2.bf16.msra.mxu0 0
    %3875 = vmatprep.subr.bf16.mxu0 0
    %3876 = vmatpush2.bf16.msra.mxu0 0
    %3877 = vmatprep.subr.bf16.mxu0 0
    %3878 = vmatpush2.bf16.msra.mxu0 0
    %3879 = vmatprep.subr.bf16.mxu0 0
    %3880 = vmatpush2.bf16.msra.mxu0 0
    %3881 = vmatprep.subr.bf16.mxu0 0
    %3882 = vmatpush2.bf16.msra.mxu0 0
    %3883 = vmatprep.subr.bf16.mxu0 0
    %3884 = vmatpush2.bf16.msra.mxu0 0
    %3885 = vmatprep.mubr.bf16.mxu0 0
    %3886 = vmatmul.mubr.bf16.gmra.mxu0 %v3851
    %v3887 = vpop.f32.mrf.mxu0
    %v3888 = vadd.f32 0.0, %v3887
    %v3889 = vpop.f32.mrf.mxu0
    %v3890 = vpop.f32.mrf.mxu0
    %v3891 = vadd.f32 0.0, %v3890
    %v3892 = vpop.f32.mrf.mxu0
    %3893 = vdwg.mxu0
    %3896 = vrot.lane.b32.xlu0 %v3888, 96
    %v3897 = vpop.permute.xlu0 %3896
    %3898 = vrot.lane.b32.xlu0 %v3891, 96
    %v3899 = vpop.permute.xlu0 %3898
    %3902 = vst.msk [vmem:[#allocation2 + $0x10] sm:$0xff] %vm975, %v3897
    %3903 = vst.msk [vmem:[#allocation2 + $0x18] sm:$0xff] %vm975, %v3899
    %v3904 = vld [vmem:[#allocation2] sm:$0xff]
    %v3905 = vld [vmem:[#allocation2 + $0x8] sm:$0xff]
    %v3906 = vld [vmem:[#allocation2 + $0x10] sm:$0xff]
    %v3907 = vld [vmem:[#allocation2 + $0x18] sm:$0xff]
    %s3908 = scalar_lea.vmem %s6, 64
    %v3909 = vld [vmem:[%s3908] sm:$0xf]
    %v3910 = vld [vmem:[%s3908 + $0x4] sm:$0xf]
    %v3911 = vld [vmem:[%s3908 + $0x8] sm:$0xf]
    %v3912 = vld [vmem:[%s3908 + $0xc] sm:$0xf]
    %v3913 = vld [vmem:[%s3908 + $0x10] sm:$0xf]
    %v3914 = vld [vmem:[%s3908 + $0x14] sm:$0xf]
    %v3915 = vld [vmem:[%s3908 + $0x18] sm:$0xf]
    %v3916 = vld [vmem:[%s3908 + $0x1c] sm:$0xf]
    %v3917 = vld [vmem:[%s3908 + $0x20] sm:$0xf]
    %v3918 = vld [vmem:[%s3908 + $0x24] sm:$0xf]
    %v3919 = vld [vmem:[%s3908 + $0x28] sm:$0xf]
    %v3920 = vld [vmem:[%s3908 + $0x2c] sm:$0xf]
    %v3921 = vld [vmem:[%s3908 + $0x30] sm:$0xf]
    %v3922 = vld [vmem:[%s3908 + $0x34] sm:$0xf]
    %v3923 = vld [vmem:[%s3908 + $0x38] sm:$0xf]
    %v3924 = vld [vmem:[%s3908 + $0x3c] sm:$0xf]
    %s3925 = scalar_lea.vmem %s7, 1
    %v3926 = vld [vmem:[%s3925] sm:$0x1]
    %v3927 = vpack.c.bf16 %v3905, %v3904
    %v3928 = vpack.c.bf16 %v3907, %v3906
    %v3930 = vlaneseq
    %v3931 = vshrl.u32 %v3930, 7
    %v3932 = vsub.s32 0, %v3931
    %v3933 = vrot.slane %v3926, %v3932
    %v3951 = vunpack.c.l.b16 %v3909
    %v3952 = vunpack.c.l.b16 %v3910
    %v3953 = vunpack.c.l.b16 %v3911
    %v3954 = vunpack.c.l.b16 %v3912
    %v3955 = vunpack.c.l.b16 %v3913
    %v3956 = vunpack.c.l.b16 %v3914
    %v3957 = vunpack.c.l.b16 %v3915
    %v3958 = vunpack.c.l.b16 %v3916
    %v3959 = vunpack.c.l.b16 %v3917
    %v3960 = vunpack.c.l.b16 %v3918
    %v3961 = vunpack.c.l.b16 %v3919
    %v3962 = vunpack.c.l.b16 %v3920
    %v3963 = vunpack.c.l.b16 %v3921
    %v3964 = vunpack.c.l.b16 %v3922
    %v3965 = vunpack.c.l.b16 %v3923
    %v3966 = vunpack.c.l.b16 %v3924
    %v3967 = vpack.c.b16 %v3952, %v3951
    %v3968 = vpack.c.b16 %v3954, %v3953
    %v3969 = vpack.c.b16 %v3956, %v3955
    %v3970 = vpack.c.b16 %v3958, %v3957
    %v3971 = vpack.c.b16 %v3960, %v3959
    %v3972 = vpack.c.b16 %v3962, %v3961
    %v3973 = vpack.c.b16 %v3964, %v3963
    %v3974 = vpack.c.b16 %v3966, %v3965
    %3983 = vmatprep.subr.bf16.mxu0 0
    %3984 = vmatpush1.bf16.msra.mxu0 %v3974
    %3985 = vmatprep.subr.bf16.mxu0 0
    %3986 = vmatpush1.bf16.msra.mxu0 %v3973
    %3987 = vmatprep.subr.bf16.mxu0 0
    %3988 = vmatpush1.bf16.msra.mxu0 %v3972
    %3989 = vmatprep.subr.bf16.mxu0 0
    %3990 = vmatpush1.bf16.msra.mxu0 %v3971
    %3991 = vmatprep.subr.bf16.mxu0 0
    %3992 = vmatpush1.bf16.msra.mxu0 %v3970
    %3993 = vmatprep.subr.bf16.mxu0 0
    %3994 = vmatpush1.bf16.msra.mxu0 %v3969
    %3995 = vmatprep.subr.bf16.mxu0 0
    %3996 = vmatpush1.bf16.msra.mxu0 %v3968
    %3997 = vmatprep.subr.bf16.mxu0 0
    %3998 = vmatpush1.bf16.msra.mxu0 %v3967
    %3999 = vmatprep.subr.bf16.mxu0 0
    %4000 = vmatpush2.bf16.msra.mxu0 0
    %4001 = vmatprep.subr.bf16.mxu0 0
    %4002 = vmatpush2.bf16.msra.mxu0 0
    %4003 = vmatprep.subr.bf16.mxu0 0
    %4004 = vmatpush2.bf16.msra.mxu0 0
    %4005 = vmatprep.subr.bf16.mxu0 0
    %4006 = vmatpush2.bf16.msra.mxu0 0
    %4007 = vmatprep.subr.bf16.mxu0 0
    %4008 = vmatpush2.bf16.msra.mxu0 0
    %4009 = vmatprep.subr.bf16.mxu0 0
    %4010 = vmatpush2.bf16.msra.mxu0 0
    %4011 = vmatprep.subr.bf16.mxu0 0
    %4012 = vmatpush2.bf16.msra.mxu0 0
    %4013 = vmatprep.subr.bf16.mxu0 0
    %4014 = vmatpush2.bf16.msra.mxu0 0
    %4015 = vmatprep.mubr.bf16.mxu0 0
    %4016 = vmatmul.mubr.bf16.gmra.mxu0 %v3927
    %v4017 = vpop.f32.mrf.mxu0
    %v4018 = vadd.f32 %v3933, %v4017
    %v4019 = vpop.f32.mrf.mxu0
    %v4020 = vpop.f32.mrf.mxu0
    %v4021 = vadd.f32 %v3933, %v4020
    %v4022 = vpop.f32.mrf.mxu0
    %4023 = vmatprep.mubr.bf16.mxu0 0
    %4024 = vmatmul.mubr.bf16.gmra.mxu0 %v3928
    %v4025 = vpop.f32.mrf.mxu0
    %v4026 = vadd.f32 %v3933, %v4025
    %v4027 = vpop.f32.mrf.mxu0
    %v4028 = vpop.f32.mrf.mxu0
    %v4029 = vadd.f32 %v3933, %v4028
    %v4030 = vpop.f32.mrf.mxu0
    %4031 = vdwg.mxu0
    %v4032 = vadd.f32 %v4018, %v2587
    %v4033 = vadd.f32 %v4021, %v2588
    %v4034 = vadd.f32 %v4026, %v2589
    %v4035 = vadd.f32 %v4029, %v2590
    %s4036 = scalar_lea.vmem %s8, 1
    %v4037 = vld [vmem:[%s4036] sm:$0x1]
    %s4038 = scalar_lea.vmem %s9, 1
    %v4039 = vld [vmem:[%s4038] sm:$0x1]
    %4040 = vadd.xlane.f32.xlu0 %v4032
    %v4041 = vpop.xlane.xlu0 %4040
    %4042 = vadd.xlane.f32.xlu0 %v4033
    %v4043 = vpop.xlane.xlu0 %4042
    %4044 = vadd.xlane.f32.xlu0 %v4034
    %v4045 = vpop.xlane.xlu0 %4044
    %4046 = vadd.xlane.f32.xlu0 %v4035
    %v4047 = vpop.xlane.xlu0 %4046
    %v4048 = vmul.f32 %v4041, %v102
    %v4049 = vmul.f32 %v4043, %v102
    %v4050 = vmul.f32 %v4045, %v102
    %v4051 = vmul.f32 %v4047, %v102
    %v4052 = vsub.f32 %v4032, %v4048
    %v4053 = vsub.f32 %v4033, %v4049
    %v4054 = vsub.f32 %v4034, %v4050
    %v4055 = vsub.f32 %v4035, %v4051
    %v4056 = vmul.f32 %v4052, %v4052
    %v4057 = vmul.f32 %v4053, %v4053
    %v4058 = vmul.f32 %v4054, %v4054
    %v4059 = vmul.f32 %v4055, %v4055
    %4060 = vadd.xlane.f32.xlu0 %v4056
    %v4061 = vpop.xlane.xlu0 %4060
    %4062 = vadd.xlane.f32.xlu0 %v4057
    %v4063 = vpop.xlane.xlu0 %4062
    %4064 = vadd.xlane.f32.xlu0 %v4058
    %v4065 = vpop.xlane.xlu0 %4064
    %4066 = vadd.xlane.f32.xlu0 %v4059
    %v4067 = vpop.xlane.xlu0 %4066
    %v4068 = vmul.f32 %v4061, %v102
    %v4069 = vmul.f32 %v4063, %v102
    %v4070 = vmul.f32 %v4065, %v102
    %v4071 = vmul.f32 %v4067, %v102
    %v4072 = vadd.f32 %v4068, 1e-12
    %v4073 = vadd.f32 %v4069, 1e-12
    %v4074 = vadd.f32 %v4070, 1e-12
    %v4075 = vadd.f32 %v4071, 1e-12
    %v4076 = vrsqrt.pop %v4072
    %v4077 = vrsqrt.pop %v4073
    %v4078 = vrsqrt.pop %v4074
    %v4079 = vrsqrt.pop %v4075
    %v4080 = vmul.f32 %v4052, %v4076
    %v4081 = vmul.f32 %v4053, %v4077
    %v4082 = vmul.f32 %v4054, %v4078
    %v4083 = vmul.f32 %v4055, %v4079
    %v4085 = vlaneseq
    %v4086 = vshrl.u32 %v4085, 7
    %v4087 = vsub.s32 0, %v4086
    %v4088 = vrot.slane %v4037, %v4087
    %v4090 = vmul.f32 %v4080, %v4088
    %v4091 = vmul.f32 %v4081, %v4088
    %v4092 = vmul.f32 %v4082, %v4088
    %v4093 = vmul.f32 %v4083, %v4088
    %v4095 = vlaneseq
    %v4096 = vshrl.u32 %v4095, 7
    %v4097 = vsub.s32 0, %v4096
    %v4098 = vrot.slane %v4039, %v4097
    %v4100 = vadd.f32 %v4090, %v4098
    %v4101 = vadd.f32 %v4091, %v4098
    %v4102 = vadd.f32 %v4092, %v4098
    %v4103 = vadd.f32 %v4093, %v4098
    %s4104 = scalar_lea.vmem [#allocation3], 256
    %v4105 = vld [vmem:[%s4104] sm:$0xff]
    %v4106 = vld [vmem:[%s4104 + $0x8] sm:$0xff]
    %v4107 = vld [vmem:[%s4104 + $0x10] sm:$0xff]
    %v4108 = vld [vmem:[%s4104 + $0x18] sm:$0xff]
    %v4109 = vld [vmem:[%s4104 + $0x20] sm:$0xff]
    %v4110 = vld [vmem:[%s4104 + $0x28] sm:$0xff]
    %v4111 = vld [vmem:[%s4104 + $0x30] sm:$0xff]
    %v4112 = vld [vmem:[%s4104 + $0x38] sm:$0xff]
    %v4113 = vld [vmem:[%s4104 + $0x40] sm:$0xff]
    %v4114 = vld [vmem:[%s4104 + $0x48] sm:$0xff]
    %v4115 = vld [vmem:[%s4104 + $0x50] sm:$0xff]
    %v4116 = vld [vmem:[%s4104 + $0x58] sm:$0xff]
    %v4117 = vld [vmem:[%s4104 + $0x60] sm:$0xff]
    %v4118 = vld [vmem:[%s4104 + $0x68] sm:$0xff]
    %v4119 = vld [vmem:[%s4104 + $0x70] sm:$0xff]
    %v4120 = vld [vmem:[%s4104 + $0x78] sm:$0xff]
    %v4121 = vld [vmem:[%s4104 + $0x80] sm:$0xff]
    %v4122 = vld [vmem:[%s4104 + $0x88] sm:$0xff]
    %v4123 = vld [vmem:[%s4104 + $0x90] sm:$0xff]
    %v4124 = vld [vmem:[%s4104 + $0x98] sm:$0xff]
    %v4125 = vld [vmem:[%s4104 + $0xa0] sm:$0xff]
    %v4126 = vld [vmem:[%s4104 + $0xa8] sm:$0xff]
    %v4127 = vld [vmem:[%s4104 + $0xb0] sm:$0xff]
    %v4128 = vld [vmem:[%s4104 + $0xb8] sm:$0xff]
    %v4129 = vld [vmem:[%s4104 + $0xc0] sm:$0xff]
    %v4130 = vld [vmem:[%s4104 + $0xc8] sm:$0xff]
    %v4131 = vld [vmem:[%s4104 + $0xd0] sm:$0xff]
    %v4132 = vld [vmem:[%s4104 + $0xd8] sm:$0xff]
    %v4133 = vld [vmem:[%s4104 + $0xe0] sm:$0xff]
    %v4134 = vld [vmem:[%s4104 + $0xe8] sm:$0xff]
    %v4135 = vld [vmem:[%s4104 + $0xf0] sm:$0xff]
    %v4136 = vld [vmem:[%s4104 + $0xf8] sm:$0xff]
    %s4137 = scalar_lea.vmem %s11, 4
    %v4138 = vld [vmem:[%s4137] sm:$0xf]
    %v4139 = vpack.c.bf16 %v4101, %v4100
    %v4140 = vpack.c.bf16 %v4103, %v4102
    %v4142 = vlaneseq
    %v4143 = vshrl.u32 %v4142, 7
    %v4144 = vsub.s32 0, %v4143
    %v4145 = vrot.slane %v4138, %v4144
    %v4146 = vlaneseq
    %v4147 = vshrl.u32 %v4146, 7
    %v4148 = vsub.s32 1, %v4147
    %v4149 = vrot.slane %v4138, %v4148
    %v4150 = vlaneseq
    %v4151 = vshrl.u32 %v4150, 7
    %v4152 = vsub.s32 2, %v4151
    %v4153 = vrot.slane %v4138, %v4152
    %v4154 = vlaneseq
    %v4155 = vshrl.u32 %v4154, 7
    %v4156 = vsub.s32 3, %v4155
    %v4157 = vrot.slane %v4138, %v4156
    %v4194 = vunpack.c.l.b16 %v4105
    %v4195 = vunpack.c.h.b16 %v4105
    %v4196 = vunpack.c.l.b16 %v4106
    %v4197 = vunpack.c.h.b16 %v4106
    %v4198 = vunpack.c.l.b16 %v4107
    %v4199 = vunpack.c.h.b16 %v4107
    %v4200 = vunpack.c.l.b16 %v4108
    %v4201 = vunpack.c.h.b16 %v4108
    %v4202 = vunpack.c.l.b16 %v4109
    %v4203 = vunpack.c.h.b16 %v4109
    %v4204 = vunpack.c.l.b16 %v4110
    %v4205 = vunpack.c.h.b16 %v4110
    %v4206 = vunpack.c.l.b16 %v4111
    %v4207 = vunpack.c.h.b16 %v4111
    %v4208 = vunpack.c.l.b16 %v4112
    %v4209 = vunpack.c.h.b16 %v4112
    %v4210 = vunpack.c.l.b16 %v4113
    %v4211 = vunpack.c.h.b16 %v4113
    %v4212 = vunpack.c.l.b16 %v4114
    %v4213 = vunpack.c.h.b16 %v4114
    %v4214 = vunpack.c.l.b16 %v4115
    %v4215 = vunpack.c.h.b16 %v4115
    %v4216 = vunpack.c.l.b16 %v4116
    %v4217 = vunpack.c.h.b16 %v4116
    %v4218 = vunpack.c.l.b16 %v4117
    %v4219 = vunpack.c.h.b16 %v4117
    %v4220 = vunpack.c.l.b16 %v4118
    %v4221 = vunpack.c.h.b16 %v4118
    %v4222 = vunpack.c.l.b16 %v4119
    %v4223 = vunpack.c.h.b16 %v4119
    %v4224 = vunpack.c.l.b16 %v4120
    %v4225 = vunpack.c.h.b16 %v4120
    %v4226 = vunpack.c.l.b16 %v4121
    %v4227 = vunpack.c.h.b16 %v4121
    %v4228 = vunpack.c.l.b16 %v4122
    %v4229 = vunpack.c.h.b16 %v4122
    %v4230 = vunpack.c.l.b16 %v4123
    %v4231 = vunpack.c.h.b16 %v4123
    %v4232 = vunpack.c.l.b16 %v4124
    %v4233 = vunpack.c.h.b16 %v4124
    %v4234 = vunpack.c.l.b16 %v4125
    %v4235 = vunpack.c.h.b16 %v4125
    %v4236 = vunpack.c.l.b16 %v4126
    %v4237 = vunpack.c.h.b16 %v4126
    %v4238 = vunpack.c.l.b16 %v4127
    %v4239 = vunpack.c.h.b16 %v4127
    %v4240 = vunpack.c.l.b16 %v4128
    %v4241 = vunpack.c.h.b16 %v4128
    %v4242 = vunpack.c.l.b16 %v4129
    %v4243 = vunpack.c.h.b16 %v4129
    %v4244 = vunpack.c.l.b16 %v4130
    %v4245 = vunpack.c.h.b16 %v4130
    %v4246 = vunpack.c.l.b16 %v4131
    %v4247 = vunpack.c.h.b16 %v4131
    %v4248 = vunpack.c.l.b16 %v4132
    %v4249 = vunpack.c.h.b16 %v4132
    %v4250 = vunpack.c.l.b16 %v4133
    %v4251 = vunpack.c.h.b16 %v4133
    %v4252 = vunpack.c.l.b16 %v4134
    %v4253 = vunpack.c.h.b16 %v4134
    %v4254 = vunpack.c.l.b16 %v4135
    %v4255 = vunpack.c.h.b16 %v4135
    %v4256 = vunpack.c.l.b16 %v4136
    %v4257 = vunpack.c.h.b16 %v4136
    %v4258 = vpack.c.b16 %v4198, %v4194
    %v4259 = vpack.c.b16 %v4199, %v4195
    %v4260 = vpack.c.b16 %v4200, %v4196
    %v4261 = vpack.c.b16 %v4201, %v4197
    %v4262 = vpack.c.b16 %v4206, %v4202
    %v4263 = vpack.c.b16 %v4207, %v4203
    %v4264 = vpack.c.b16 %v4208, %v4204
    %v4265 = vpack.c.b16 %v4209, %v4205
    %v4266 = vpack.c.b16 %v4214, %v4210
    %v4267 = vpack.c.b16 %v4215, %v4211
    %v4268 = vpack.c.b16 %v4216, %v4212
    %v4269 = vpack.c.b16 %v4217, %v4213
    %v4270 = vpack.c.b16 %v4222, %v4218
    %v4271 = vpack.c.b16 %v4223, %v4219
    %v4272 = vpack.c.b16 %v4224, %v4220
    %v4273 = vpack.c.b16 %v4225, %v4221
    %v4274 = vpack.c.b16 %v4230, %v4226
    %v4275 = vpack.c.b16 %v4231, %v4227
    %v4276 = vpack.c.b16 %v4232, %v4228
    %v4277 = vpack.c.b16 %v4233, %v4229
    %v4278 = vpack.c.b16 %v4238, %v4234
    %v4279 = vpack.c.b16 %v4239, %v4235
    %v4280 = vpack.c.b16 %v4240, %v4236
    %v4281 = vpack.c.b16 %v4241, %v4237
    %v4282 = vpack.c.b16 %v4246, %v4242
    %v4283 = vpack.c.b16 %v4247, %v4243
    %v4284 = vpack.c.b16 %v4248, %v4244
    %v4285 = vpack.c.b16 %v4249, %v4245
    %v4286 = vpack.c.b16 %v4254, %v4250
    %v4287 = vpack.c.b16 %v4255, %v4251
    %v4288 = vpack.c.b16 %v4256, %v4252
    %v4289 = vpack.c.b16 %v4257, %v4253
    %4322 = vmatprep.subr.bf16.mxu0 %v4287
    %4323 = vmatpush1.bf16.msra.mxu0 %v4286
    %4324 = vmatprep.subr.bf16.mxu0 %v4283
    %4325 = vmatpush1.bf16.msra.mxu0 %v4282
    %4326 = vmatprep.subr.bf16.mxu0 %v4279
    %4327 = vmatpush1.bf16.msra.mxu0 %v4278
    %4328 = vmatprep.subr.bf16.mxu0 %v4275
    %4329 = vmatpush1.bf16.msra.mxu0 %v4274
    %4330 = vmatprep.subr.bf16.mxu0 %v4271
    %4331 = vmatpush1.bf16.msra.mxu0 %v4270
    %4332 = vmatprep.subr.bf16.mxu0 %v4267
    %4333 = vmatpush1.bf16.msra.mxu0 %v4266
    %4334 = vmatprep.subr.bf16.mxu0 %v4263
    %4335 = vmatpush1.bf16.msra.mxu0 %v4262
    %4336 = vmatprep.subr.bf16.mxu0 %v4259
    %4337 = vmatpush1.bf16.msra.mxu0 %v4258
    %4338 = vmatprep.subr.bf16.mxu0 0
    %4339 = vmatpush2.bf16.msra.mxu0 0
    %4340 = vmatprep.subr.bf16.mxu0 0
    %4341 = vmatpush2.bf16.msra.mxu0 0
    %4342 = vmatprep.subr.bf16.mxu0 0
    %4343 = vmatpush2.bf16.msra.mxu0 0
    %4344 = vmatprep.subr.bf16.mxu0 0
    %4345 = vmatpush2.bf16.msra.mxu0 0
    %4346 = vmatprep.subr.bf16.mxu0 0
    %4347 = vmatpush2.bf16.msra.mxu0 0
    %4348 = vmatprep.subr.bf16.mxu0 0
    %4349 = vmatpush2.bf16.msra.mxu0 0
    %4350 = vmatprep.subr.bf16.mxu0 0
    %4351 = vmatpush2.bf16.msra.mxu0 0
    %4352 = vmatprep.subr.bf16.mxu0 0
    %4353 = vmatpush2.bf16.msra.mxu0 0
    %4354 = vmatprep.mubr.bf16.mxu0 0
    %4355 = vmatmul.mubr.bf16.gmra.mxu0 %v4139
    %v4356 = vpop.f32.mrf.mxu0
    %v4357 = vadd.f32 %v4145, %v4356
    %v4358 = vpop.f32.mrf.mxu0
    %v4359 = vadd.f32 %v4149, %v4358
    %v4360 = vpop.f32.mrf.mxu0
    %v4361 = vadd.f32 %v4145, %v4360
    %v4362 = vpop.f32.mrf.mxu0
    %v4363 = vadd.f32 %v4149, %v4362
    %4364 = vmatprep.mubr.bf16.mxu0 0
    %4365 = vmatmul.mubr.bf16.gmra.mxu0 %v4140
    %v4366 = vpop.f32.mrf.mxu0
    %v4367 = vadd.f32 %v4145, %v4366
    %v4368 = vpop.f32.mrf.mxu0
    %v4369 = vadd.f32 %v4149, %v4368
    %v4370 = vpop.f32.mrf.mxu0
    %v4371 = vadd.f32 %v4145, %v4370
    %v4372 = vpop.f32.mrf.mxu0
    %v4373 = vadd.f32 %v4149, %v4372
    %4374 = vdwg.mxu0
    %4375 = vmatprep.subr.bf16.mxu0 %v4289
    %4376 = vmatpush1.bf16.msra.mxu0 %v4288
    %4377 = vmatprep.subr.bf16.mxu0 %v4285
    %4378 = vmatpush1.bf16.msra.mxu0 %v4284
    %4379 = vmatprep.subr.bf16.mxu0 %v4281
    %4380 = vmatpush1.bf16.msra.mxu0 %v4280
    %4381 = vmatprep.subr.bf16.mxu0 %v4277
    %4382 = vmatpush1.bf16.msra.mxu0 %v4276
    %4383 = vmatprep.subr.bf16.mxu0 %v4273
    %4384 = vmatpush1.bf16.msra.mxu0 %v4272
    %4385 = vmatprep.subr.bf16.mxu0 %v4269
    %4386 = vmatpush1.bf16.msra.mxu0 %v4268
    %4387 = vmatprep.subr.bf16.mxu0 %v4265
    %4388 = vmatpush1.bf16.msra.mxu0 %v4264
    %4389 = vmatprep.subr.bf16.mxu0 %v4261
    %4390 = vmatpush1.bf16.msra.mxu0 %v4260
    %4391 = vmatprep.subr.bf16.mxu0 0
    %4392 = vmatpush2.bf16.msra.mxu0 0
    %4393 = vmatprep.subr.bf16.mxu0 0
    %4394 = vmatpush2.bf16.msra.mxu0 0
    %4395 = vmatprep.subr.bf16.mxu0 0
    %4396 = vmatpush2.bf16.msra.mxu0 0
    %4397 = vmatprep.subr.bf16.mxu0 0
    %4398 = vmatpush2.bf16.msra.mxu0 0
    %4399 = vmatprep.subr.bf16.mxu0 0
    %4400 = vmatpush2.bf16.msra.mxu0 0
    %4401 = vmatprep.subr.bf16.mxu0 0
    %4402 = vmatpush2.bf16.msra.mxu0 0
    %4403 = vmatprep.subr.bf16.mxu0 0
    %4404 = vmatpush2.bf16.msra.mxu0 0
    %4405 = vmatprep.subr.bf16.mxu0 0
    %4406 = vmatpush2.bf16.msra.mxu0 0
    %4407 = vmatprep.mubr.bf16.mxu0 0
    %4408 = vmatmul.mubr.bf16.gmra.mxu0 %v4139
    %v4409 = vpop.f32.mrf.mxu0
    %v4410 = vadd.f32 %v4153, %v4409
    %v4411 = vpop.f32.mrf.mxu0
    %v4412 = vadd.f32 %v4157, %v4411
    %v4413 = vpop.f32.mrf.mxu0
    %v4414 = vadd.f32 %v4153, %v4413
    %v4415 = vpop.f32.mrf.mxu0
    %v4416 = vadd.f32 %v4157, %v4415
    %4417 = vmatprep.mubr.bf16.mxu0 0
    %4418 = vmatmul.mubr.bf16.gmra.mxu0 %v4140
    %v4419 = vpop.f32.mrf.mxu0
    %v4420 = vadd.f32 %v4153, %v4419
    %v4421 = vpop.f32.mrf.mxu0
    %v4422 = vadd.f32 %v4157, %v4421
    %v4423 = vpop.f32.mrf.mxu0
    %v4424 = vadd.f32 %v4153, %v4423
    %v4425 = vpop.f32.mrf.mxu0
    %v4426 = vadd.f32 %v4157, %v4425
    %4427 = vdwg.mxu0
    %v4428 = vmul.f32 %v4357, %v4357
    %v4429 = vmul.f32 %v4359, %v4359
    %v4430 = vmul.f32 %v4410, %v4410
    %v4431 = vmul.f32 %v4412, %v4412
    %v4432 = vmul.f32 %v4361, %v4361
    %v4433 = vmul.f32 %v4363, %v4363
    %v4434 = vmul.f32 %v4414, %v4414
    %v4435 = vmul.f32 %v4416, %v4416
    %v4436 = vmul.f32 %v4367, %v4367
    %v4437 = vmul.f32 %v4369, %v4369
    %v4438 = vmul.f32 %v4420, %v4420
    %v4439 = vmul.f32 %v4422, %v4422
    %v4440 = vmul.f32 %v4371, %v4371
    %v4441 = vmul.f32 %v4373, %v4373
    %v4442 = vmul.f32 %v4424, %v4424
    %v4443 = vmul.f32 %v4426, %v4426
    %v4444 = vmul.f32 %v4357, %v4428
    %v4445 = vmul.f32 %v4359, %v4429
    %v4446 = vmul.f32 %v4410, %v4430
    %v4447 = vmul.f32 %v4412, %v4431
    %v4448 = vmul.f32 %v4361, %v4432
    %v4449 = vmul.f32 %v4363, %v4433
    %v4450 = vmul.f32 %v4414, %v4434
    %v4451 = vmul.f32 %v4416, %v4435
    %v4452 = vmul.f32 %v4367, %v4436
    %v4453 = vmul.f32 %v4369, %v4437
    %v4454 = vmul.f32 %v4420, %v4438
    %v4455 = vmul.f32 %v4422, %v4439
    %v4456 = vmul.f32 %v4371, %v4440
    %v4457 = vmul.f32 %v4373, %v4441
    %v4458 = vmul.f32 %v4424, %v4442
    %v4459 = vmul.f32 %v4426, %v4443
    %v4460 = vmul.f32 %v4444, 0.044715
    %v4461 = vmul.f32 %v4445, 0.044715
    %v4462 = vmul.f32 %v4446, 0.044715
    %v4463 = vmul.f32 %v4447, 0.044715
    %v4464 = vmul.f32 %v4448, 0.044715
    %v4465 = vmul.f32 %v4449, 0.044715
    %v4466 = vmul.f32 %v4450, 0.044715
    %v4467 = vmul.f32 %v4451, 0.044715
    %v4468 = vmul.f32 %v4452, 0.044715
    %v4469 = vmul.f32 %v4453, 0.044715
    %v4470 = vmul.f32 %v4454, 0.044715
    %v4471 = vmul.f32 %v4455, 0.044715
    %v4472 = vmul.f32 %v4456, 0.044715
    %v4473 = vmul.f32 %v4457, 0.044715
    %v4474 = vmul.f32 %v4458, 0.044715
    %v4475 = vmul.f32 %v4459, 0.044715
    %v4476 = vadd.f32 %v4357, %v4460
    %v4477 = vadd.f32 %v4359, %v4461
    %v4478 = vadd.f32 %v4410, %v4462
    %v4479 = vadd.f32 %v4412, %v4463
    %v4480 = vadd.f32 %v4361, %v4464
    %v4481 = vadd.f32 %v4363, %v4465
    %v4482 = vadd.f32 %v4414, %v4466
    %v4483 = vadd.f32 %v4416, %v4467
    %v4484 = vadd.f32 %v4367, %v4468
    %v4485 = vadd.f32 %v4369, %v4469
    %v4486 = vadd.f32 %v4420, %v4470
    %v4487 = vadd.f32 %v4422, %v4471
    %v4488 = vadd.f32 %v4371, %v4472
    %v4489 = vadd.f32 %v4373, %v4473
    %v4490 = vadd.f32 %v4424, %v4474
    %v4491 = vadd.f32 %v4426, %v4475
    %v4492 = vmul.f32 %v4476, 0.7978846
    %v4493 = vmul.f32 %v4477, 0.7978846
    %v4494 = vmul.f32 %v4478, 0.7978846
    %v4495 = vmul.f32 %v4479, 0.7978846
    %v4496 = vmul.f32 %v4480, 0.7978846
    %v4497 = vmul.f32 %v4481, 0.7978846
    %v4498 = vmul.f32 %v4482, 0.7978846
    %v4499 = vmul.f32 %v4483, 0.7978846
    %v4500 = vmul.f32 %v4484, 0.7978846
    %v4501 = vmul.f32 %v4485, 0.7978846
    %v4502 = vmul.f32 %v4486, 0.7978846
    %v4503 = vmul.f32 %v4487, 0.7978846
    %v4504 = vmul.f32 %v4488, 0.7978846
    %v4505 = vmul.f32 %v4489, 0.7978846
    %v4506 = vmul.f32 %v4490, 0.7978846
    %v4507 = vmul.f32 %v4491, 0.7978846
    %v4508 = vtanh.pop %v4492
    %v4509 = vtanh.pop %v4493
    %v4510 = vtanh.pop %v4494
    %v4511 = vtanh.pop %v4495
    %v4512 = vtanh.pop %v4496
    %v4513 = vtanh.pop %v4497
    %v4514 = vtanh.pop %v4498
    %v4515 = vtanh.pop %v4499
    %v4516 = vtanh.pop %v4500
    %v4517 = vtanh.pop %v4501
    %v4518 = vtanh.pop %v4502
    %v4519 = vtanh.pop %v4503
    %v4520 = vtanh.pop %v4504
    %v4521 = vtanh.pop %v4505
    %v4522 = vtanh.pop %v4506
    %v4523 = vtanh.pop %v4507
    %v4524 = vadd.f32 %v4508, 1.0
    %v4525 = vadd.f32 %v4509, 1.0
    %v4526 = vadd.f32 %v4510, 1.0
    %v4527 = vadd.f32 %v4511, 1.0
    %v4528 = vadd.f32 %v4512, 1.0
    %v4529 = vadd.f32 %v4513, 1.0
    %v4530 = vadd.f32 %v4514, 1.0
    %v4531 = vadd.f32 %v4515, 1.0
    %v4532 = vadd.f32 %v4516, 1.0
    %v4533 = vadd.f32 %v4517, 1.0
    %v4534 = vadd.f32 %v4518, 1.0
    %v4535 = vadd.f32 %v4519, 1.0
    %v4536 = vadd.f32 %v4520, 1.0
    %v4537 = vadd.f32 %v4521, 1.0
    %v4538 = vadd.f32 %v4522, 1.0
    %v4539 = vadd.f32 %v4523, 1.0
    %v4540 = vmul.f32 %v4524, 0.5
    %v4541 = vmul.f32 %v4525, 0.5
    %v4542 = vmul.f32 %v4526, 0.5
    %v4543 = vmul.f32 %v4527, 0.5
    %v4544 = vmul.f32 %v4528, 0.5
    %v4545 = vmul.f32 %v4529, 0.5
    %v4546 = vmul.f32 %v4530, 0.5
    %v4547 = vmul.f32 %v4531, 0.5
    %v4548 = vmul.f32 %v4532, 0.5
    %v4549 = vmul.f32 %v4533, 0.5
    %v4550 = vmul.f32 %v4534, 0.5
    %v4551 = vmul.f32 %v4535, 0.5
    %v4552 = vmul.f32 %v4536, 0.5
    %v4553 = vmul.f32 %v4537, 0.5
    %v4554 = vmul.f32 %v4538, 0.5
    %v4555 = vmul.f32 %v4539, 0.5
    %v4556 = vmul.f32 %v4357, %v4540
    %v4557 = vmul.f32 %v4359, %v4541
    %v4558 = vmul.f32 %v4410, %v4542
    %v4559 = vmul.f32 %v4412, %v4543
    %v4560 = vmul.f32 %v4361, %v4544
    %v4561 = vmul.f32 %v4363, %v4545
    %v4562 = vmul.f32 %v4414, %v4546
    %v4563 = vmul.f32 %v4416, %v4547
    %v4564 = vmul.f32 %v4367, %v4548
    %v4565 = vmul.f32 %v4369, %v4549
    %v4566 = vmul.f32 %v4420, %v4550
    %v4567 = vmul.f32 %v4422, %v4551
    %v4568 = vmul.f32 %v4371, %v4552
    %v4569 = vmul.f32 %v4373, %v4553
    %v4570 = vmul.f32 %v4424, %v4554
    %v4571 = vmul.f32 %v4426, %v4555
    %s4572 = scalar_lea.vmem [#allocation5], 256
    %v4573 = vld [vmem:[%s4572] sm:$0xf]
    %v4574 = vld [vmem:[%s4572 + $0x4] sm:$0xf]
    %v4575 = vld [vmem:[%s4572 + $0x8] sm:$0xf]
    %v4576 = vld [vmem:[%s4572 + $0xc] sm:$0xf]
    %v4577 = vld [vmem:[%s4572 + $0x10] sm:$0xf]
    %v4578 = vld [vmem:[%s4572 + $0x14] sm:$0xf]
    %v4579 = vld [vmem:[%s4572 + $0x18] sm:$0xf]
    %v4580 = vld [vmem:[%s4572 + $0x1c] sm:$0xf]
    %v4581 = vld [vmem:[%s4572 + $0x20] sm:$0xf]
    %v4582 = vld [vmem:[%s4572 + $0x24] sm:$0xf]
    %v4583 = vld [vmem:[%s4572 + $0x28] sm:$0xf]
    %v4584 = vld [vmem:[%s4572 + $0x2c] sm:$0xf]
    %v4585 = vld [vmem:[%s4572 + $0x30] sm:$0xf]
    %v4586 = vld [vmem:[%s4572 + $0x34] sm:$0xf]
    %v4587 = vld [vmem:[%s4572 + $0x38] sm:$0xf]
    %v4588 = vld [vmem:[%s4572 + $0x3c] sm:$0xf]
    %v4589 = vld [vmem:[%s4572 + $0x40] sm:$0xf]
    %v4590 = vld [vmem:[%s4572 + $0x44] sm:$0xf]
    %v4591 = vld [vmem:[%s4572 + $0x48] sm:$0xf]
    %v4592 = vld [vmem:[%s4572 + $0x4c] sm:$0xf]
    %v4593 = vld [vmem:[%s4572 + $0x50] sm:$0xf]
    %v4594 = vld [vmem:[%s4572 + $0x54] sm:$0xf]
    %v4595 = vld [vmem:[%s4572 + $0x58] sm:$0xf]
    %v4596 = vld [vmem:[%s4572 + $0x5c] sm:$0xf]
    %v4597 = vld [vmem:[%s4572 + $0x60] sm:$0xf]
    %v4598 = vld [vmem:[%s4572 + $0x64] sm:$0xf]
    %v4599 = vld [vmem:[%s4572 + $0x68] sm:$0xf]
    %v4600 = vld [vmem:[%s4572 + $0x6c] sm:$0xf]
    %v4601 = vld [vmem:[%s4572 + $0x70] sm:$0xf]
    %v4602 = vld [vmem:[%s4572 + $0x74] sm:$0xf]
    %v4603 = vld [vmem:[%s4572 + $0x78] sm:$0xf]
    %v4604 = vld [vmem:[%s4572 + $0x7c] sm:$0xf]
    %v4605 = vld [vmem:[%s4572 + $0x80] sm:$0xf]
    %v4606 = vld [vmem:[%s4572 + $0x84] sm:$0xf]
    %v4607 = vld [vmem:[%s4572 + $0x88] sm:$0xf]
    %v4608 = vld [vmem:[%s4572 + $0x8c] sm:$0xf]
    %v4609 = vld [vmem:[%s4572 + $0x90] sm:$0xf]
    %v4610 = vld [vmem:[%s4572 + $0x94] sm:$0xf]
    %v4611 = vld [vmem:[%s4572 + $0x98] sm:$0xf]
    %v4612 = vld [vmem:[%s4572 + $0x9c] sm:$0xf]
    %v4613 = vld [vmem:[%s4572 + $0xa0] sm:$0xf]
    %v4614 = vld [vmem:[%s4572 + $0xa4] sm:$0xf]
    %v4615 = vld [vmem:[%s4572 + $0xa8] sm:$0xf]
    %v4616 = vld [vmem:[%s4572 + $0xac] sm:$0xf]
    %v4617 = vld [vmem:[%s4572 + $0xb0] sm:$0xf]
    %v4618 = vld [vmem:[%s4572 + $0xb4] sm:$0xf]
    %v4619 = vld [vmem:[%s4572 + $0xb8] sm:$0xf]
    %v4620 = vld [vmem:[%s4572 + $0xbc] sm:$0xf]
    %v4621 = vld [vmem:[%s4572 + $0xc0] sm:$0xf]
    %v4622 = vld [vmem:[%s4572 + $0xc4] sm:$0xf]
    %v4623 = vld [vmem:[%s4572 + $0xc8] sm:$0xf]
    %v4624 = vld [vmem:[%s4572 + $0xcc] sm:$0xf]
    %v4625 = vld [vmem:[%s4572 + $0xd0] sm:$0xf]
    %v4626 = vld [vmem:[%s4572 + $0xd4] sm:$0xf]
    %v4627 = vld [vmem:[%s4572 + $0xd8] sm:$0xf]
    %v4628 = vld [vmem:[%s4572 + $0xdc] sm:$0xf]
    %v4629 = vld [vmem:[%s4572 + $0xe0] sm:$0xf]
    %v4630 = vld [vmem:[%s4572 + $0xe4] sm:$0xf]
    %v4631 = vld [vmem:[%s4572 + $0xe8] sm:$0xf]
    %v4632 = vld [vmem:[%s4572 + $0xec] sm:$0xf]
    %v4633 = vld [vmem:[%s4572 + $0xf0] sm:$0xf]
    %v4634 = vld [vmem:[%s4572 + $0xf4] sm:$0xf]
    %v4635 = vld [vmem:[%s4572 + $0xf8] sm:$0xf]
    %v4636 = vld [vmem:[%s4572 + $0xfc] sm:$0xf]
    %s4637 = scalar_lea.vmem %s13, 1
    %v4638 = vld [vmem:[%s4637] sm:$0x1]
    %v4639 = vpack.c.bf16 %v4560, %v4556
    %v4640 = vpack.c.bf16 %v4561, %v4557
    %v4641 = vpack.c.bf16 %v4562, %v4558
    %v4642 = vpack.c.bf16 %v4563, %v4559
    %v4643 = vpack.c.bf16 %v4568, %v4564
    %v4644 = vpack.c.bf16 %v4569, %v4565
    %v4645 = vpack.c.bf16 %v4570, %v4566
    %v4646 = vpack.c.bf16 %v4571, %v4567
    %v4648 = vlaneseq
    %v4649 = vshrl.u32 %v4648, 7
    %v4650 = vsub.s32 0, %v4649
    %v4651 = vrot.slane %v4638, %v4650
    %v4717 = vunpack.c.l.b16 %v4573
    %v4718 = vunpack.c.l.b16 %v4574
    %v4719 = vunpack.c.l.b16 %v4575
    %v4720 = vunpack.c.l.b16 %v4576
    %v4721 = vunpack.c.l.b16 %v4577
    %v4722 = vunpack.c.l.b16 %v4578
    %v4723 = vunpack.c.l.b16 %v4579
    %v4724 = vunpack.c.l.b16 %v4580
    %v4725 = vunpack.c.l.b16 %v4581
    %v4726 = vunpack.c.l.b16 %v4582
    %v4727 = vunpack.c.l.b16 %v4583
    %v4728 = vunpack.c.l.b16 %v4584
    %v4729 = vunpack.c.l.b16 %v4585
    %v4730 = vunpack.c.l.b16 %v4586
    %v4731 = vunpack.c.l.b16 %v4587
    %v4732 = vunpack.c.l.b16 %v4588
    %v4733 = vunpack.c.l.b16 %v4589
    %v4734 = vunpack.c.l.b16 %v4590
    %v4735 = vunpack.c.l.b16 %v4591
    %v4736 = vunpack.c.l.b16 %v4592
    %v4737 = vunpack.c.l.b16 %v4593
    %v4738 = vunpack.c.l.b16 %v4594
    %v4739 = vunpack.c.l.b16 %v4595
    %v4740 = vunpack.c.l.b16 %v4596
    %v4741 = vunpack.c.l.b16 %v4597
    %v4742 = vunpack.c.l.b16 %v4598
    %v4743 = vunpack.c.l.b16 %v4599
    %v4744 = vunpack.c.l.b16 %v4600
    %v4745 = vunpack.c.l.b16 %v4601
    %v4746 = vunpack.c.l.b16 %v4602
    %v4747 = vunpack.c.l.b16 %v4603
    %v4748 = vunpack.c.l.b16 %v4604
    %v4749 = vunpack.c.l.b16 %v4605
    %v4750 = vunpack.c.l.b16 %v4606
    %v4751 = vunpack.c.l.b16 %v4607
    %v4752 = vunpack.c.l.b16 %v4608
    %v4753 = vunpack.c.l.b16 %v4609
    %v4754 = vunpack.c.l.b16 %v4610
    %v4755 = vunpack.c.l.b16 %v4611
    %v4756 = vunpack.c.l.b16 %v4612
    %v4757 = vunpack.c.l.b16 %v4613
    %v4758 = vunpack.c.l.b16 %v4614
    %v4759 = vunpack.c.l.b16 %v4615
    %v4760 = vunpack.c.l.b16 %v4616
    %v4761 = vunpack.c.l.b16 %v4617
    %v4762 = vunpack.c.l.b16 %v4618
    %v4763 = vunpack.c.l.b16 %v4619
    %v4764 = vunpack.c.l.b16 %v4620
    %v4765 = vunpack.c.l.b16 %v4621
    %v4766 = vunpack.c.l.b16 %v4622
    %v4767 = vunpack.c.l.b16 %v4623
    %v4768 = vunpack.c.l.b16 %v4624
    %v4769 = vunpack.c.l.b16 %v4625
    %v4770 = vunpack.c.l.b16 %v4626
    %v4771 = vunpack.c.l.b16 %v4627
    %v4772 = vunpack.c.l.b16 %v4628
    %v4773 = vunpack.c.l.b16 %v4629
    %v4774 = vunpack.c.l.b16 %v4630
    %v4775 = vunpack.c.l.b16 %v4631
    %v4776 = vunpack.c.l.b16 %v4632
    %v4777 = vunpack.c.l.b16 %v4633
    %v4778 = vunpack.c.l.b16 %v4634
    %v4779 = vunpack.c.l.b16 %v4635
    %v4780 = vunpack.c.l.b16 %v4636
    %v4781 = vpack.c.b16 %v4718, %v4717
    %v4782 = vpack.c.b16 %v4720, %v4719
    %v4783 = vpack.c.b16 %v4722, %v4721
    %v4784 = vpack.c.b16 %v4724, %v4723
    %v4785 = vpack.c.b16 %v4726, %v4725
    %v4786 = vpack.c.b16 %v4728, %v4727
    %v4787 = vpack.c.b16 %v4730, %v4729
    %v4788 = vpack.c.b16 %v4732, %v4731
    %v4789 = vpack.c.b16 %v4734, %v4733
    %v4790 = vpack.c.b16 %v4736, %v4735
    %v4791 = vpack.c.b16 %v4738, %v4737
    %v4792 = vpack.c.b16 %v4740, %v4739
    %v4793 = vpack.c.b16 %v4742, %v4741
    %v4794 = vpack.c.b16 %v4744, %v4743
    %v4795 = vpack.c.b16 %v4746, %v4745
    %v4796 = vpack.c.b16 %v4748, %v4747
    %v4797 = vpack.c.b16 %v4750, %v4749
    %v4798 = vpack.c.b16 %v4752, %v4751
    %v4799 = vpack.c.b16 %v4754, %v4753
    %v4800 = vpack.c.b16 %v4756, %v4755
    %v4801 = vpack.c.b16 %v4758, %v4757
    %v4802 = vpack.c.b16 %v4760, %v4759
    %v4803 = vpack.c.b16 %v4762, %v4761
    %v4804 = vpack.c.b16 %v4764, %v4763
    %v4805 = vpack.c.b16 %v4766, %v4765
    %v4806 = vpack.c.b16 %v4768, %v4767
    %v4807 = vpack.c.b16 %v4770, %v4769
    %v4808 = vpack.c.b16 %v4772, %v4771
    %v4809 = vpack.c.b16 %v4774, %v4773
    %v4810 = vpack.c.b16 %v4776, %v4775
    %v4811 = vpack.c.b16 %v4778, %v4777
    %v4812 = vpack.c.b16 %v4780, %v4779
    %4845 = vmatprep.subr.bf16.mxu0 0
    %4846 = vmatpush1.bf16.msra.mxu0 %v4788
    %4847 = vmatprep.subr.bf16.mxu0 0
    %4848 = vmatpush1.bf16.msra.mxu0 %v4787
    %4849 = vmatprep.subr.bf16.mxu0 0
    %4850 = vmatpush1.bf16.msra.mxu0 %v4786
    %4851 = vmatprep.subr.bf16.mxu0 0
    %4852 = vmatpush1.bf16.msra.mxu0 %v4785
    %4853 = vmatprep.subr.bf16.mxu0 0
    %4854 = vmatpush1.bf16.msra.mxu0 %v4784
    %4855 = vmatprep.subr.bf16.mxu0 0
    %4856 = vmatpush1.bf16.msra.mxu0 %v4783
    %4857 = vmatprep.subr.bf16.mxu0 0
    %4858 = vmatpush1.bf16.msra.mxu0 %v4782
    %4859 = vmatprep.subr.bf16.mxu0 0
    %4860 = vmatpush1.bf16.msra.mxu0 %v4781
    %4861 = vmatprep.subr.bf16.mxu0 0
    %4862 = vmatpush2.bf16.msra.mxu0 %v4796
    %4863 = vmatprep.subr.bf16.mxu0 0
    %4864 = vmatpush2.bf16.msra.mxu0 %v4795
    %4865 = vmatprep.subr.bf16.mxu0 0
    %4866 = vmatpush2.bf16.msra.mxu0 %v4794
    %4867 = vmatprep.subr.bf16.mxu0 0
    %4868 = vmatpush2.bf16.msra.mxu0 %v4793
    %4869 = vmatprep.subr.bf16.mxu0 0
    %4870 = vmatpush2.bf16.msra.mxu0 %v4792
    %4871 = vmatprep.subr.bf16.mxu0 0
    %4872 = vmatpush2.bf16.msra.mxu0 %v4791
    %4873 = vmatprep.subr.bf16.mxu0 0
    %4874 = vmatpush2.bf16.msra.mxu0 %v4790
    %4875 = vmatprep.subr.bf16.mxu0 0
    %4876 = vmatpush2.bf16.msra.mxu0 %v4789
    %4877 = vmatprep.mubr.bf16.mxu0 %v4640
    %4878 = vmatmul.mubr.bf16.gmra.mxu0 %v4639
    %v4879 = vpop.f32.mrf.mxu0
    %v4880 = vadd.f32 %v4651, %v4879
    %v4881 = vpop.f32.mrf.mxu0
    %v4882 = vpop.f32.mrf.mxu0
    %v4883 = vadd.f32 %v4651, %v4882
    %v4884 = vpop.f32.mrf.mxu0
    %4885 = vmatprep.mubr.bf16.mxu0 %v4644
    %4886 = vmatmul.mubr.bf16.gmra.mxu0 %v4643
    %v4887 = vpop.f32.mrf.mxu0
    %v4888 = vadd.f32 %v4651, %v4887
    %v4889 = vpop.f32.mrf.mxu0
    %v4890 = vpop.f32.mrf.mxu0
    %v4891 = vadd.f32 %v4651, %v4890
    %v4892 = vpop.f32.mrf.mxu0
    %4893 = vdwg.mxu0
    %4894 = vmatprep.subr.bf16.mxu0 0
    %4895 = vmatpush1.bf16.msra.mxu0 %v4804
    %4896 = vmatprep.subr.bf16.mxu0 0
    %4897 = vmatpush1.bf16.msra.mxu0 %v4803
    %4898 = vmatprep.subr.bf16.mxu0 0
    %4899 = vmatpush1.bf16.msra.mxu0 %v4802
    %4900 = vmatprep.subr.bf16.mxu0 0
    %4901 = vmatpush1.bf16.msra.mxu0 %v4801
    %4902 = vmatprep.subr.bf16.mxu0 0
    %4903 = vmatpush1.bf16.msra.mxu0 %v4800
    %4904 = vmatprep.subr.bf16.mxu0 0
    %4905 = vmatpush1.bf16.msra.mxu0 %v4799
    %4906 = vmatprep.subr.bf16.mxu0 0
    %4907 = vmatpush1.bf16.msra.mxu0 %v4798
    %4908 = vmatprep.subr.bf16.mxu0 0
    %4909 = vmatpush1.bf16.msra.mxu0 %v4797
    %4910 = vmatprep.subr.bf16.mxu0 0
    %4911 = vmatpush2.bf16.msra.mxu0 %v4812
    %4912 = vmatprep.subr.bf16.mxu0 0
    %4913 = vmatpush2.bf16.msra.mxu0 %v4811
    %4914 = vmatprep.subr.bf16.mxu0 0
    %4915 = vmatpush2.bf16.msra.mxu0 %v4810
    %4916 = vmatprep.subr.bf16.mxu0 0
    %4917 = vmatpush2.bf16.msra.mxu0 %v4809
    %4918 = vmatprep.subr.bf16.mxu0 0
    %4919 = vmatpush2.bf16.msra.mxu0 %v4808
    %4920 = vmatprep.subr.bf16.mxu0 0
    %4921 = vmatpush2.bf16.msra.mxu0 %v4807
    %4922 = vmatprep.subr.bf16.mxu0 0
    %4923 = vmatpush2.bf16.msra.mxu0 %v4806
    %4924 = vmatprep.subr.bf16.mxu0 0
    %4925 = vmatpush2.bf16.msra.mxu0 %v4805
    %4926 = vmatprep.mubr.bf16.mxu0 %v4642
    %4927 = vmatmul.mubr.bf16.gmra.mxu0 %v4641
    %v4928 = vpop.f32.mrf.mxu0
    %v4929 = vadd.f32 %v4880, %v4928
    %v4930 = vpop.f32.mrf.mxu0
    %v4931 = vpop.f32.mrf.mxu0
    %v4932 = vadd.f32 %v4883, %v4931
    %v4933 = vpop.f32.mrf.mxu0
    %4934 = vmatprep.mubr.bf16.mxu0 %v4646
    %4935 = vmatmul.mubr.bf16.gmra.mxu0 %v4645
    %v4936 = vpop.f32.mrf.mxu0
    %v4937 = vadd.f32 %v4888, %v4936
    %v4938 = vpop.f32.mrf.mxu0
    %v4939 = vpop.f32.mrf.mxu0
    %v4940 = vadd.f32 %v4891, %v4939
    %v4941 = vpop.f32.mrf.mxu0
    %4942 = vdwg.mxu0
    %v4943 = vadd.f32 %v4929, %v4100
    %v4944 = vadd.f32 %v4932, %v4101
    %v4945 = vadd.f32 %v4937, %v4102
    %v4946 = vadd.f32 %v4940, %v4103
    %s4947 = scalar_lea.vmem %s14, 1
    %v4948 = vld [vmem:[%s4947] sm:$0x1]
    %s4949 = scalar_lea.vmem %s15, 1
    %v4950 = vld [vmem:[%s4949] sm:$0x1]
    %4951 = vadd.xlane.f32.xlu0 %v4943
    %v4952 = vpop.xlane.xlu0 %4951
    %4953 = vadd.xlane.f32.xlu0 %v4944
    %v4954 = vpop.xlane.xlu0 %4953
    %4955 = vadd.xlane.f32.xlu0 %v4945
    %v4956 = vpop.xlane.xlu0 %4955
    %4957 = vadd.xlane.f32.xlu0 %v4946
    %v4958 = vpop.xlane.xlu0 %4957
    %v4959 = vmul.f32 %v4952, %v102
    %v4960 = vmul.f32 %v4954, %v102
    %v4961 = vmul.f32 %v4956, %v102
    %v4962 = vmul.f32 %v4958, %v102
    %v4963 = vsub.f32 %v4943, %v4959
    %v4964 = vsub.f32 %v4944, %v4960
    %v4965 = vsub.f32 %v4945, %v4961
    %v4966 = vsub.f32 %v4946, %v4962
    %v4967 = vmul.f32 %v4963, %v4963
    %v4968 = vmul.f32 %v4964, %v4964
    %v4969 = vmul.f32 %v4965, %v4965
    %v4970 = vmul.f32 %v4966, %v4966
    %4971 = vadd.xlane.f32.xlu0 %v4967
    %v4972 = vpop.xlane.xlu0 %4971
    %4973 = vadd.xlane.f32.xlu0 %v4968
    %v4974 = vpop.xlane.xlu0 %4973
    %4975 = vadd.xlane.f32.xlu0 %v4969
    %v4976 = vpop.xlane.xlu0 %4975
    %4977 = vadd.xlane.f32.xlu0 %v4970
    %v4978 = vpop.xlane.xlu0 %4977
    %v4979 = vmul.f32 %v4972, %v102
    %v4980 = vmul.f32 %v4974, %v102
    %v4981 = vmul.f32 %v4976, %v102
    %v4982 = vmul.f32 %v4978, %v102
    %v4983 = vadd.f32 %v4979, 1e-12
    %v4984 = vadd.f32 %v4980, 1e-12
    %v4985 = vadd.f32 %v4981, 1e-12
    %v4986 = vadd.f32 %v4982, 1e-12
    %v4987 = vrsqrt.pop %v4983
    %v4988 = vrsqrt.pop %v4984
    %v4989 = vrsqrt.pop %v4985
    %v4990 = vrsqrt.pop %v4986
    %v4991 = vmul.f32 %v4963, %v4987
    %v4992 = vmul.f32 %v4964, %v4988
    %v4993 = vmul.f32 %v4965, %v4989
    %v4994 = vmul.f32 %v4966, %v4990
    %v4996 = vlaneseq
    %v4997 = vshrl.u32 %v4996, 7
    %v4998 = vsub.s32 0, %v4997
    %v4999 = vrot.slane %v4948, %v4998
    %v5001 = vmul.f32 %v4991, %v4999
    %v5002 = vmul.f32 %v4992, %v4999
    %v5003 = vmul.f32 %v4993, %v4999
    %v5004 = vmul.f32 %v4994, %v4999
    %v5006 = vlaneseq
    %v5007 = vshrl.u32 %v5006, 7
    %v5008 = vsub.s32 0, %v5007
    %v5009 = vrot.slane %v4950, %v5008
    %v5011 = vadd.f32 %v5001, %v5009
    %v5012 = vadd.f32 %v5002, %v5009
    %v5013 = vadd.f32 %v5003, %v5009
    %v5014 = vadd.f32 %v5004, %v5009
    %v5015 = vld [vmem:[%s16] sm:$0xf]
    %v5016 = vld [vmem:[%s16 + $0x4] sm:$0xf]
    %v5017 = vld [vmem:[%s16 + $0x8] sm:$0xf]
    %v5018 = vld [vmem:[%s16 + $0xc] sm:$0xf]
    %v5019 = vld [vmem:[%s16 + $0x10] sm:$0xf]
    %v5020 = vld [vmem:[%s16 + $0x14] sm:$0xf]
    %v5021 = vld [vmem:[%s16 + $0x18] sm:$0xf]
    %v5022 = vld [vmem:[%s16 + $0x1c] sm:$0xf]
    %v5023 = vld [vmem:[%s16 + $0x20] sm:$0xf]
    %v5024 = vld [vmem:[%s16 + $0x24] sm:$0xf]
    %v5025 = vld [vmem:[%s16 + $0x28] sm:$0xf]
    %v5026 = vld [vmem:[%s16 + $0x2c] sm:$0xf]
    %v5027 = vld [vmem:[%s16 + $0x30] sm:$0xf]
    %v5028 = vld [vmem:[%s16 + $0x34] sm:$0xf]
    %v5029 = vld [vmem:[%s16 + $0x38] sm:$0xf]
    %v5030 = vld [vmem:[%s16 + $0x3c] sm:$0xf]
    %v5031 = vld [vmem:[%s17] sm:$0x1]
    %v5032 = vpack.c.bf16 %v5012, %v5011
    %v5033 = vpack.c.bf16 %v5014, %v5013
    %v5035 = vlaneseq
    %v5036 = vshrl.u32 %v5035, 7
    %v5037 = vsub.s32 0, %v5036
    %v5038 = vrot.slane %v5031, %v5037
    %v5056 = vunpack.c.l.b16 %v5015
    %v5057 = vunpack.c.l.b16 %v5016
    %v5058 = vunpack.c.l.b16 %v5017
    %v5059 = vunpack.c.l.b16 %v5018
    %v5060 = vunpack.c.l.b16 %v5019
    %v5061 = vunpack.c.l.b16 %v5020
    %v5062 = vunpack.c.l.b16 %v5021
    %v5063 = vunpack.c.l.b16 %v5022
    %v5064 = vunpack.c.l.b16 %v5023
    %v5065 = vunpack.c.l.b16 %v5024
    %v5066 = vunpack.c.l.b16 %v5025
    %v5067 = vunpack.c.l.b16 %v5026
    %v5068 = vunpack.c.l.b16 %v5027
    %v5069 = vunpack.c.l.b16 %v5028
    %v5070 = vunpack.c.l.b16 %v5029
    %v5071 = vunpack.c.l.b16 %v5030
    %v5072 = vpack.c.b16 %v5057, %v5056
    %v5073 = vpack.c.b16 %v5059, %v5058
    %v5074 = vpack.c.b16 %v5061, %v5060
    %v5075 = vpack.c.b16 %v5063, %v5062
    %v5076 = vpack.c.b16 %v5065, %v5064
    %v5077 = vpack.c.b16 %v5067, %v5066
    %v5078 = vpack.c.b16 %v5069, %v5068
    %v5079 = vpack.c.b16 %v5071, %v5070
    %5088 = vmatprep.subr.bf16.mxu0 0
    %5089 = vmatpush1.bf16.msra.mxu0 %v5079
    %5090 = vmatprep.subr.bf16.mxu0 0
    %5091 = vmatpush1.bf16.msra.mxu0 %v5078
    %5092 = vmatprep.subr.bf16.mxu0 0
    %5093 = vmatpush1.bf16.msra.mxu0 %v5077
    %5094 = vmatprep.subr.bf16.mxu0 0
    %5095 = vmatpush1.bf16.msra.mxu0 %v5076
    %5096 = vmatprep.subr.bf16.mxu0 0
    %5097 = vmatpush1.bf16.msra.mxu0 %v5075
    %5098 = vmatprep.subr.bf16.mxu0 0
    %5099 = vmatpush1.bf16.msra.mxu0 %v5074
    %5100 = vmatprep.subr.bf16.mxu0 0
    %5101 = vmatpush1.bf16.msra.mxu0 %v5073
    %5102 = vmatprep.subr.bf16.mxu0 0
    %5103 = vmatpush1.bf16.msra.mxu0 %v5072
    %5104 = vmatprep.subr.bf16.mxu0 0
    %5105 = vmatpush2.bf16.msra.mxu0 0
    %5106 = vmatprep.subr.bf16.mxu0 0
    %5107 = vmatpush2.bf16.msra.mxu0 0
    %5108 = vmatprep.subr.bf16.mxu0 0
    %5109 = vmatpush2.bf16.msra.mxu0 0
    %5110 = vmatprep.subr.bf16.mxu0 0
    %5111 = vmatpush2.bf16.msra.mxu0 0
    %5112 = vmatprep.subr.bf16.mxu0 0
    %5113 = vmatpush2.bf16.msra.mxu0 0
    %5114 = vmatprep.subr.bf16.mxu0 0
    %5115 = vmatpush2.bf16.msra.mxu0 0
    %5116 = vmatprep.subr.bf16.mxu0 0
    %5117 = vmatpush2.bf16.msra.mxu0 0
    %5118 = vmatprep.subr.bf16.mxu0 0
    %5119 = vmatpush2.bf16.msra.mxu0 0
    %5120 = vmatprep.mubr.bf16.mxu0 0
    %5121 = vmatmul.mubr.bf16.gmra.mxu0 %v5032
    %v5122 = vpop.f32.mrf.mxu0
    %v5123 = vadd.f32 %v5038, %v5122
    %v5124 = vpop.f32.mrf.mxu0
    %v5125 = vpop.f32.mrf.mxu0
    %v5126 = vadd.f32 %v5038, %v5125
    %v5127 = vpop.f32.mrf.mxu0
    %5128 = vmatprep.mubr.bf16.mxu0 0
    %5129 = vmatmul.mubr.bf16.gmra.mxu0 %v5033
    %v5130 = vpop.f32.mrf.mxu0
    %v5131 = vadd.f32 %v5038, %v5130
    %v5132 = vpop.f32.mrf.mxu0
    %v5133 = vpop.f32.mrf.mxu0
    %v5134 = vadd.f32 %v5038, %v5133
    %v5135 = vpop.f32.mrf.mxu0
    %5136 = vdwg.mxu0
    %5137 = vst [vmem:[%s18] sm:$0xff] %v5123
    %5138 = vst [vmem:[%s18 + $0x8] sm:$0xff] %v5126
    %5139 = vst [vmem:[%s18 + $0x10] sm:$0xff] %v5131
    %5140 = vst [vmem:[%s18 + $0x18] sm:$0xff] %v5134
    // Predicated region
    $region82: #{forward_logits.1} parent=1 // pred_check
      _
    $region83: #{forward_logits.1} parent=1 // pred_check_branch
      %5142 = sbr.rel (0) target = $region85
    $region84: #{forward_logits.1} parent=1 // pred_region
      _
    $region85: #{forward_logits.1} parent=1 // pred_fallthru
      _
    // Predicated region
    $region86: #{forward_logits.1} parent=1 // pred_check
      _
    $region87: #{forward_logits.1} parent=1 // pred_check_branch
      %5144 = sbr.rel (0) target = $region89
    $region88: #{forward_logits.1} parent=1 // pred_region
      _
    $region89: #{forward_logits.1} parent=1 // pred_fallthru
      _
    %5145 = vsyncpa [#allocation4], 1
    %5146 = vsyncpa [#allocation6], 1

</llo_original>
